<compile_context>
chip_gen: v6e
topology: v6e:2x2x1
jax: 0.10.0
libtpu: 0.0.40
codegen_flags: <defaults>
</compile_context>

<pallas_src>
import numpy as np
import jax
import jax.numpy as jnp
from jax.experimental import pallas as pl
from jax.experimental.pallas import tpu as pltpu


# Tile sizes (clamped to the problem size in the wrappers).
PROJ_TILE_M = 512   # node rows per projection grid step
GNN_TILE_M = 256    # node rows per GNN output tile (>=4 tiles keeps both v7x TCs busy)
GNN_TILE_K = 512    # neighbor columns per A tile (reduction axis)


def _clamp_tile(tile, n):
    t = min(tile, n)
    # TODO(synk): pad ragged node counts instead of asserting alignment.
    assert n % t == 0, f"dimension {n} must be divisible by tile {t} (pad inputs)"
    return t


# ----------------------------------------------------------------------------
# Pass 1 (fully parallel): projection + reassociated GNN weights
#   Hp = X @ Wp + bp ;  M = Hp @ Wn (bf16, streamed by the aggregation) ;
#   S  = Hp @ Ws     (f32, added in the aggregation epilogue)
# ----------------------------------------------------------------------------
def _proj_kernel(x_ref, wp_ref, bp_ref, ws_ref, wn_ref, m_ref, s_ref):
    hp = jnp.dot(x_ref[...].astype(jnp.bfloat16), wp_ref[...],
                 preferred_element_type=jnp.float32) + bp_ref[...]
    hp_b = hp.astype(jnp.bfloat16)
    m_ref[...] = jnp.dot(hp_b, wn_ref[...],
                         preferred_element_type=jnp.float32).astype(m_ref.dtype)
    s_ref[...] = jnp.dot(hp_b, ws_ref[...], preferred_element_type=jnp.float32)


def projection(x, wp_bf16, bp, ws_bf16, wn_bf16):
    n, f = x.shape
    h = wp_bf16.shape[1]
    tm = _clamp_tile(PROJ_TILE_M, n)
    return pl.pallas_call(
        _proj_kernel,
        out_shape=(jax.ShapeDtypeStruct((n, h), jnp.bfloat16),   # M = Hp @ Wn
                   jax.ShapeDtypeStruct((n, h), jnp.float32)),   # S = Hp @ Ws
        grid=(n // tm,),
        in_specs=[
            pl.BlockSpec((tm, f), lambda i: (i, 0)),   # X node tile
            pl.BlockSpec((f, h), lambda i: (0, 0)),    # Wp (resident)
            pl.BlockSpec((1, h), lambda i: (0, 0)),    # bp
            pl.BlockSpec((h, h), lambda i: (0, 0)),    # Ws (resident)
            pl.BlockSpec((h, h), lambda i: (0, 0)),    # Wn (resident)
        ],
        out_specs=(pl.BlockSpec((tm, h), lambda i: (i, 0)),
                   pl.BlockSpec((tm, h), lambda i: (i, 0))),
        compiler_params=pltpu.CompilerParams(dimension_semantics=("parallel",)),
    )(x, wp_bf16, bp, ws_bf16, wn_bf16)


# ----------------------------------------------------------------------------
# Pass 2: sparsity-aware mean aggregation + epilogue
#   acc = sum over nonzero column blocks of A_tile @ M_tile   (f32 scratch)
#   H   = relu(S + acc + bg)
# The second grid axis only visits nonzero A blocks (data-dependent index_map from a
# scalar-prefetched block table); padded slots are skipped via pl.when on the count.
# ----------------------------------------------------------------------------
def _gnn_kernel(tbl_ref, cnt_ref, a_ref, m_ref, s_ref, bg_ref, out_ref, acc_ref):
    i = pl.program_id(0)
    k = pl.program_id(1)

    @pl.when(k == 0)
    def _():
        acc_ref[...] = jnp.zeros_like(acc_ref)

    @pl.when(k < cnt_ref[i])          # skip padded (duplicate) table slots
    def _():
        acc_ref[...] += jnp.dot(a_ref[...], m_ref[...],
                                preferred_element_type=jnp.float32)

    @pl.when(k == pl.num_programs(1) - 1)
    def _():
        out_ref[...] = jnp.maximum(s_ref[...] + acc_ref[...] + bg_ref[...], 0.0)


def gnn_combine(a_bf16, m_bf16, s_f32, bg, blk_table, blk_counts):
    n, h = s_f32.shape
    tm = _clamp_tile(GNN_TILE_M, n)
    tk = _clamp_tile(GNN_TILE_K, n)
    n_i = n // tm
    max_blk = blk_table.shape[1]
    assert blk_table.shape[0] == n_i

    cost = pl.CostEstimate(
        flops=2 * n_i * max_blk * tm * tk * h,
        transcendentals=0,
        bytes_accessed=int(2 * n_i * max_blk * tm * tk    # A tiles actually visited (bf16)
                           + 2 * n_i * max_blk * tk * h   # M tiles re-read per row tile (bf16)
                           + 4 * n * h                    # S (f32)
                           + 4 * n * h),                  # output (f32)
    )
    return pl.pallas_call(
        _gnn_kernel,
        out_shape=jax.ShapeDtypeStruct((n, h), jnp.float32),
        grid_spec=pltpu.PrefetchScalarGridSpec(
            num_scalar_prefetch=2,
            grid=(n_i, max_blk),
            in_specs=[
                # A tile: column-block index comes from the prefetched table.
                pl.BlockSpec((tm, tk), lambda i, k, tbl, cnt: (i, tbl[i, k])),
                # M rows matching that column block.
                pl.BlockSpec((tk, h), lambda i, k, tbl, cnt: (tbl[i, k], 0)),
                # S rows for this output tile (resident across k).
                pl.BlockSpec((tm, h), lambda i, k, tbl, cnt: (i, 0)),
                pl.BlockSpec((1, h), lambda i, k, tbl, cnt: (0, 0)),
            ],
            out_specs=pl.BlockSpec((tm, h), lambda i, k, tbl, cnt: (i, 0)),
            scratch_shapes=[pltpu.VMEM((tm, h), jnp.float32)],
        ),
        compiler_params=pltpu.CompilerParams(
            dimension_semantics=("parallel", "arbitrary"),
            vmem_limit_bytes=48 * 1024 * 1024,   # fits v7x's 64 MiB/TC with headroom
        ),
        cost_estimate=cost,
    )(blk_table, blk_counts, a_bf16, m_bf16, s_f32, bg)


# ----------------------------------------------------------------------------
# Prediction: edge scores, pos+neg fused, lane-dense output [1, E_pad]
#   inputs are [H, E_pad] (edges on the lane axis), reduce over feature sublanes
# ----------------------------------------------------------------------------
def _score_kernel(hs_ref, hd_ref, out_ref):
    out_ref[...] = jnp.sum(hs_ref[...] * hd_ref[...], axis=0, keepdims=True)


def edge_scores(h_nodes, pos_edges, neg_edges):
    e_pos = pos_edges[0].shape[0]
    e_neg = neg_edges[0].shape[0]
    n_e = e_pos + e_neg
    e_pad = max(128, ((n_e + 127) // 128) * 128)

    src = jnp.pad(jnp.concatenate([pos_edges[0], neg_edges[0]]), (0, e_pad - n_e))
    dst = jnp.pad(jnp.concatenate([pos_edges[1], neg_edges[1]]), (0, e_pad - n_e))

    # TODO(synk): for large E, move this gather in-kernel (scalar-prefetched src/dst +
    # manual row DMA) so each H row is read from HBM once and no host transposes remain.
    hs_t = jnp.take(h_nodes, src, axis=0).T      # [H, E_pad]
    hd_t = jnp.take(h_nodes, dst, axis=0).T      # [H, E_pad]

    scores = pl.pallas_call(
        _score_kernel,
        out_shape=jax.ShapeDtypeStruct((1, e_pad), jnp.float32),
    )(hs_t, hd_t)

    pos = scores[0, :e_pos].reshape(e_pos, 1)
    neg = scores[0, e_pos:n_e].reshape(e_neg, 1)
    return pos, neg


# ----------------------------------------------------------------------------
# Full model forward: (pos_graph, neg_graph, block) -> (pos_score, neg_score)
# ----------------------------------------------------------------------------
def model_forward(params, feat, a_norm, blk_table, blk_counts, pos_edges, neg_edges):
    bf = jnp.bfloat16
    # bf16 matmul operands (f32 MXU accumulation); biases / ReLU epilogue stay f32.
    wp = params["wp"].astype(bf)
    ws = params["ws"].astype(bf)
    wn = params["wn"].astype(bf)
    a_bf = a_norm.astype(bf)

    m_bf, s_f32 = projection(feat, wp, params["bp"], ws, wn)            # [N,H] bf16 / f32
    h = gnn_combine(a_bf, m_bf, s_f32, params["bg"], blk_table, blk_counts)  # [N,H] f32
    return edge_scores(h, pos_edges, neg_edges)


# ----------------------------------------------------------------------------
# Host-side graph preprocessing (dense row-normalized adjacency + block-nnz table).
# TODO(synk): for very large graphs switch to CSR / segment aggregation instead of a
# dense adjacency (the block table already skips the zero blocks during compute).
# ----------------------------------------------------------------------------
def make_norm_adj_np(src, dst, num_nodes):
    a = np.zeros((num_nodes, num_nodes), np.float32)
    np.add.at(a, (np.asarray(dst), np.asarray(src)), 1.0)
    deg = np.maximum(a.sum(axis=1, keepdims=True), 1.0)
    return a / deg


def build_block_index(a_np):
    """Per-row-tile list of nonzero column-block indices (padded, guarded by counts)."""
    n = a_np.shape[0]
    tm = _clamp_tile(GNN_TILE_M, n)
    tk = _clamp_tile(GNN_TILE_K, n)
    n_i, n_j = n // tm, n // tk
    nz = np.abs(a_np).reshape(n_i, tm, n_j, tk).sum(axis=(1, 3)) > 0   # [n_i, n_j]
    counts = nz.sum(axis=1).astype(np.int32)
    max_blk = max(int(counts.max()), 1)
    table = np.zeros((n_i, max_blk), np.int32)
    for i in range(n_i):
        idx = np.nonzero(nz[i])[0]
        table[i, :len(idx)] = idx
        if 0 < len(idx) < max_blk:
            table[i, len(idx):] = idx[-1]   # padded slots: valid block, skipped in-kernel
    return jnp.asarray(table), jnp.asarray(counts)


if __name__ == "__main__":
    key = jax.random.PRNGKey(0)
    # nodes / in-features / hidden are (8,128)-aligned; 4 node tiles x 2 neighbor tiles.
    N, F, H = 1024, 128, 128
    E_POS, E_NEG = 16, 16
    GROUP = 256   # message-passing edges are mostly intra-group -> block-sparse adjacency

    k = jax.random.split(key, 12)
    feat = jax.random.normal(k[0], (N, F), jnp.float32)

    # Message-passing block edges (mostly within groups, plus a few into the first tile).
    deg = 4
    dst_local = jax.random.randint(k[1], (deg * N,), 0, N)
    src_local = (dst_local // GROUP) * GROUP + jax.random.randint(k[2], (deg * N,), 0, GROUP)
    dst_extra = jax.random.randint(k[3], (64,), 0, GROUP)
    src_extra = jax.random.randint(k[4], (64,), 0, N)
    blk_src = jnp.concatenate([src_local, src_extra])
    blk_dst = jnp.concatenate([dst_local, dst_extra])

    a_norm_np = make_norm_adj_np(blk_src, blk_dst, N)
    a_norm = jnp.asarray(a_norm_np)
    blk_table, blk_counts = build_block_index(a_norm_np)

    # Positive / negative edge graphs for prediction.
    pos_edges = (jax.random.randint(k[5], (E_POS,), 0, N),
                 jax.random.randint(k[6], (E_POS,), 0, N))
    neg_edges = (jax.random.randint(k[7], (E_NEG,), 0, N),
                 jax.random.randint(k[8], (E_NEG,), 0, N))

    # Deterministic synthetic parameters (no checkpoint load).
    params = {
        "wp": jax.random.normal(k[9], (F, H), jnp.float32) * 0.1,
        "bp": jnp.zeros((1, H), jnp.float32),
        "ws": jax.random.normal(k[10], (H, H), jnp.float32) * 0.1,
        "wn": jax.random.normal(k[11], (H, H), jnp.float32) * 0.1,
        "bg": jnp.zeros((1, H), jnp.float32),
    }

    fwd = jax.jit(model_forward)
    pos_score, neg_score = fwd(params, feat, a_norm, blk_table, blk_counts,
                               pos_edges, neg_edges)
    jax.block_until_ready((pos_score, neg_score))

    # Reference in plain JAX with the same bf16-operand / f32-accumulate, reassociated math.
    bf = jnp.bfloat16
    wp_b, ws_b, wn_b = (params["wp"].astype(bf), params["ws"].astype(bf),
                        params["wn"].astype(bf))
    hp = jnp.dot(feat.astype(bf), wp_b, preferred_element_type=jnp.float32) + params["bp"]
    hp_b = hp.astype(bf)
    m_r = jnp.dot(hp_b, wn_b, preferred_element_type=jnp.float32).astype(bf)
    s_r = jnp.dot(hp_b, ws_b, preferred_element_type=jnp.float32)
    agg = jnp.dot(a_norm.astype(bf), m_r, preferred_element_type=jnp.float32)
    h_ref = jnp.maximum(s_r + agg + params["bg"], 0.0)
    ps_ref = jnp.sum(h_ref[pos_edges[0]] * h_ref[pos_edges[1]], axis=-1, keepdims=True)
    ns_ref = jnp.sum(h_ref[neg_edges[0]] * h_ref[neg_edges[1]], axis=-1, keepdims=True)

    assert jnp.allclose(pos_score, ps_ref, rtol=1e-2, atol=1e-2), "pos score mismatch"
    assert jnp.allclose(neg_score, ns_ref, rtol=1e-2, atol=1e-2), "neg score mismatch"

    print("KERNEL_OK")
</pallas_src>

<mosaic_0001>
module attributes {stable_mosaic.version = 11 : i64} {
  func.func @_proj_kernel(%arg0: i32, %arg1: memref<512x128xf32, #tpu.memory_space<vmem>>, %arg2: memref<128x128xbf16, #tpu.memory_space<vmem>>, %arg3: memref<1x128xf32, #tpu.memory_space<vmem>>, %arg4: memref<128x128xbf16, #tpu.memory_space<vmem>>, %arg5: memref<128x128xbf16, #tpu.memory_space<vmem>>, %arg6: memref<512x128xbf16, #tpu.memory_space<vmem>>, %arg7: memref<512x128xf32, #tpu.memory_space<vmem>>) attributes {dimension_semantics = [#tpu.dimension_semantics<parallel>], iteration_bounds = array<i64: 2>, scalar_prefetch = 0 : i64, scratch_operands = 0 : i64, tpu.core_type = #tpu.core_type<tc>, window_params = [{transform_indices = @transform_0, window_bounds = array<i64: 512, 128>}, {pipeline_mode = #tpu.pipeline_mode<synchronous>, transform_indices = @transform_1, window_bounds = array<i64: 128, 128>}, {pipeline_mode = #tpu.pipeline_mode<synchronous>, transform_indices = @transform_2, window_bounds = array<i64: 1, 128>}, {pipeline_mode = #tpu.pipeline_mode<synchronous>, transform_indices = @transform_3, window_bounds = array<i64: 128, 128>}, {pipeline_mode = #tpu.pipeline_mode<synchronous>, transform_indices = @transform_4, window_bounds = array<i64: 128, 128>}, {transform_indices = @transform_5, window_bounds = array<i64: 512, 128>}, {transform_indices = @transform_6, window_bounds = array<i64: 512, 128>}]} {
    %c0 = arith.constant 0 : index
    %c0_0 = arith.constant 0 : index
    %0 = vector.load %arg1[%c0, %c0_0] : memref<512x128xf32, #tpu.memory_space<vmem>>, vector<512x128xf32>
    %1 = arith.truncf %0 : vector<512x128xf32> to vector<512x128xbf16>
    %c0_1 = arith.constant 0 : index
    %c0_2 = arith.constant 0 : index
    %2 = vector.load %arg2[%c0_1, %c0_2] : memref<128x128xbf16, #tpu.memory_space<vmem>>, vector<128x128xbf16>
    %cst = arith.constant dense<0.000000e+00> : vector<512x128xf32>
    %3 = tpu.matmul %1, %2, %cst {dimension_numbers = #tpu.dot_dimension_numbers<[1], [0], [0], [1], [0, 0, 1, 1], [], []>} : vector<512x128xbf16>, vector<128x128xbf16>, vector<512x128xf32> -> vector<512x128xf32>
    %c0_3 = arith.constant 0 : index
    %c0_4 = arith.constant 0 : index
    %4 = vector.load %arg3[%c0_3, %c0_4] : memref<1x128xf32, #tpu.memory_space<vmem>>, vector<1x128xf32>
    %5 = vector.broadcast %4 : vector<1x128xf32> to vector<512x128xf32>
    %6 = arith.addf %3, %5 : vector<512x128xf32>
    %7 = arith.truncf %6 : vector<512x128xf32> to vector<512x128xbf16>
    %c0_5 = arith.constant 0 : index
    %c0_6 = arith.constant 0 : index
    %8 = vector.load %arg5[%c0_5, %c0_6] : memref<128x128xbf16, #tpu.memory_space<vmem>>, vector<128x128xbf16>
    %cst_7 = arith.constant dense<0.000000e+00> : vector<512x128xf32>
    %9 = tpu.matmul %7, %8, %cst_7 {dimension_numbers = #tpu.dot_dimension_numbers<[1], [0], [0], [1], [0, 0, 1, 1], [], []>} : vector<512x128xbf16>, vector<128x128xbf16>, vector<512x128xf32> -> vector<512x128xf32>
    %10 = arith.truncf %9 : vector<512x128xf32> to vector<512x128xbf16>
    %c0_8 = arith.constant 0 : index
    %c0_9 = arith.constant 0 : index
    %11 = vector.load %arg6[%c0_8, %c0_9] : memref<512x128xbf16, #tpu.memory_space<vmem>>, vector<512x128xbf16>
    tpu.vector_store %arg6[%c0_8, %c0_9], %10 {strides = array<i32>} : memref<512x128xbf16, #tpu.memory_space<vmem>>, vector<512x128xbf16>,
    %c0_10 = arith.constant 0 : index
    %c0_11 = arith.constant 0 : index
    %12 = vector.load %arg4[%c0_10, %c0_11] : memref<128x128xbf16, #tpu.memory_space<vmem>>, vector<128x128xbf16>
    %cst_12 = arith.constant dense<0.000000e+00> : vector<512x128xf32>
    %13 = tpu.matmul %7, %12, %cst_12 {dimension_numbers = #tpu.dot_dimension_numbers<[1], [0], [0], [1], [0, 0, 1, 1], [], []>} : vector<512x128xbf16>, vector<128x128xbf16>, vector<512x128xf32> -> vector<512x128xf32>
    %c0_13 = arith.constant 0 : index
    %c0_14 = arith.constant 0 : index
    %14 = vector.load %arg7[%c0_13, %c0_14] : memref<512x128xf32, #tpu.memory_space<vmem>>, vector<512x128xf32>
    tpu.vector_store %arg7[%c0_13, %c0_14], %13 {strides = array<i32>} : memref<512x128xf32, #tpu.memory_space<vmem>>, vector<512x128xf32>,
    return
  }
  func.func @transform_0(%arg0: i32) -> (i32, i32) {
    %c0_i32 = arith.constant 0 : i32
    %c0_i32_0 = arith.constant 0 : i32
    return %arg0, %c0_i32 : i32, i32
  }
  func.func @transform_1(%arg0: i32) -> (i32, i32) {
    %c0_i32 = arith.constant 0 : i32
    %c0_i32_0 = arith.constant 0 : i32
    %c0_i32_1 = arith.constant 0 : i32
    return %c0_i32, %c0_i32_0 : i32, i32
  }
  func.func @transform_2(%arg0: i32) -> (i32, i32) {
    %c0_i32 = arith.constant 0 : i32
    %c0_i32_0 = arith.constant 0 : i32
    %c0_i32_1 = arith.constant 0 : i32
    return %c0_i32, %c0_i32_0 : i32, i32
  }
  func.func @transform_3(%arg0: i32) -> (i32, i32) {
    %c0_i32 = arith.constant 0 : i32
    %c0_i32_0 = arith.constant 0 : i32
    %c0_i32_1 = arith.constant 0 : i32
    return %c0_i32, %c0_i32_0 : i32, i32
  }
  func.func @transform_4(%arg0: i32) -> (i32, i32) {
    %c0_i32 = arith.constant 0 : i32
    %c0_i32_0 = arith.constant 0 : i32
    %c0_i32_1 = arith.constant 0 : i32
    return %c0_i32, %c0_i32_0 : i32, i32
  }
  func.func @transform_5(%arg0: i32) -> (i32, i32) {
    %c0_i32 = arith.constant 0 : i32
    %c0_i32_0 = arith.constant 0 : i32
    return %arg0, %c0_i32 : i32, i32
  }
  func.func @transform_6(%arg0: i32) -> (i32, i32) {
    %c0_i32 = arith.constant 0 : i32
    %c0_i32_0 = arith.constant 0 : i32
    return %arg0, %c0_i32 : i32, i32
  }
}

module attributes {stable_mosaic.version = 11 : i64} {
  func.func @_gnn_kernel(%arg0: i32, %arg1: i32, %arg2: memref<4x2xi32, #tpu.memory_space<smem>>, %arg3: memref<4xi32, #tpu.memory_space<smem>>, %arg4: memref<256x512xbf16, #tpu.memory_space<vmem>>, %arg5: memref<512x128xbf16, #tpu.memory_space<vmem>>, %arg6: memref<256x128xf32, #tpu.memory_space<vmem>>, %arg7: memref<1x128xf32, #tpu.memory_space<vmem>>, %arg8: memref<256x128xf32, #tpu.memory_space<vmem>>, %arg9: memref<256x128xf32, #tpu.memory_space<vmem>>) attributes {dimension_semantics = [#tpu.dimension_semantics<parallel>, #tpu.dimension_semantics<arbitrary>], iteration_bounds = array<i64: 4, 2>, scalar_prefetch = 2 : i64, scratch_operands = 1 : i64, tpu.core_type = #tpu.core_type<tc>, window_params = [{transform_indices = @transform_0, window_bounds = array<i64: 256, 512>}, {transform_indices = @transform_1, window_bounds = array<i64: 512, 128>}, {transform_indices = @transform_2, window_bounds = array<i64: 256, 128>}, {pipeline_mode = #tpu.pipeline_mode<synchronous>, transform_indices = @transform_3, window_bounds = array<i64: 1, 128>}, {transform_indices = @transform_4, window_bounds = array<i64: 256, 128>}]} {
    %c0_i32 = arith.constant 0 : i32
    %0 = arith.cmpi eq, %arg1, %c0_i32 : i32
    %1 = arith.extui %0 : i1 to i32
    %c0_i32_0 = arith.constant 0 : i32
    %2 = arith.cmpi ne, %1, %c0_i32_0 : i32
    scf.if %2 {
      %cst = arith.constant 0.000000e+00 : f32
      %11 = vector.broadcast %cst : f32 to vector<256x128xf32>
      %c0 = arith.constant 0 : index
      %c0_3 = arith.constant 0 : index
      %12 = vector.load %arg9[%c0, %c0_3] : memref<256x128xf32, #tpu.memory_space<vmem>>, vector<256x128xf32>
      tpu.vector_store %arg9[%c0, %c0_3], %11 {strides = array<i32>} : memref<256x128xf32, #tpu.memory_space<vmem>>, vector<256x128xf32>,
    } else {
    }
    %3 = arith.index_cast %arg0 : i32 to index
    %4 = memref.load %arg3[%3] : memref<4xi32, #tpu.memory_space<smem>>
    %5 = arith.cmpi slt, %arg1, %4 : i32
    %6 = arith.extui %5 : i1 to i32
    %c0_i32_1 = arith.constant 0 : i32
    %7 = arith.cmpi ne, %6, %c0_i32_1 : i32
    scf.if %7 {
      %c0 = arith.constant 0 : index
      %c0_3 = arith.constant 0 : index
      %11 = vector.load %arg9[%c0, %c0_3] : memref<256x128xf32, #tpu.memory_space<vmem>>, vector<256x128xf32>
      %c0_4 = arith.constant 0 : index
      %c0_5 = arith.constant 0 : index
      %12 = vector.load %arg4[%c0_4, %c0_5] : memref<256x512xbf16, #tpu.memory_space<vmem>>, vector<256x512xbf16>
      %c0_6 = arith.constant 0 : index
      %c0_7 = arith.constant 0 : index
      %13 = vector.load %arg5[%c0_6, %c0_7] : memref<512x128xbf16, #tpu.memory_space<vmem>>, vector<512x128xbf16>
      %cst = arith.constant dense<0.000000e+00> : vector<256x128xf32>
      %14 = tpu.matmul %12, %13, %cst {dimension_numbers = #tpu.dot_dimension_numbers<[1], [0], [0], [1], [0, 0, 1, 1], [], []>} : vector<256x512xbf16>, vector<512x128xbf16>, vector<256x128xf32> -> vector<256x128xf32>
      %15 = arith.addf %11, %14 : vector<256x128xf32>
      %c0_8 = arith.constant 0 : index
      %c0_9 = arith.constant 0 : index
      %16 = vector.load %arg9[%c0_8, %c0_9] : memref<256x128xf32, #tpu.memory_space<vmem>>, vector<256x128xf32>
      tpu.vector_store %arg9[%c0_8, %c0_9], %15 {strides = array<i32>} : memref<256x128xf32, #tpu.memory_space<vmem>>, vector<256x128xf32>,
    } else {
    }
    %c1_i32 = arith.constant 1 : i32
    %8 = arith.cmpi eq, %arg1, %c1_i32 : i32
    %9 = arith.extui %8 : i1 to i32
    %c0_i32_2 = arith.constant 0 : i32
    %10 = arith.cmpi ne, %9, %c0_i32_2 : i32
    scf.if %10 {
      %c0 = arith.constant 0 : index
      %c0_3 = arith.constant 0 : index
      %11 = vector.load %arg6[%c0, %c0_3] : memref<256x128xf32, #tpu.memory_space<vmem>>, vector<256x128xf32>
      %c0_4 = arith.constant 0 : index
      %c0_5 = arith.constant 0 : index
      %12 = vector.load %arg9[%c0_4, %c0_5] : memref<256x128xf32, #tpu.memory_space<vmem>>, vector<256x128xf32>
      %13 = arith.addf %11, %12 : vector<256x128xf32>
      %c0_6 = arith.constant 0 : index
      %c0_7 = arith.constant 0 : index
      %14 = vector.load %arg7[%c0_6, %c0_7] : memref<1x128xf32, #tpu.memory_space<vmem>>, vector<1x128xf32>
      %15 = vector.broadcast %14 : vector<1x128xf32> to vector<256x128xf32>
      %16 = arith.addf %13, %15 : vector<256x128xf32>
      %cst = arith.constant 0.000000e+00 : f32
      %17 = vector.broadcast %cst : f32 to vector<256x128xf32>
      %18 = arith.maximumf %16, %17 : vector<256x128xf32>
      %c0_8 = arith.constant 0 : index
      %c0_9 = arith.constant 0 : index
      %19 = vector.load %arg8[%c0_8, %c0_9] : memref<256x128xf32, #tpu.memory_space<vmem>>, vector<256x128xf32>
      tpu.vector_store %arg8[%c0_8, %c0_9], %18 {strides = array<i32>} : memref<256x128xf32, #tpu.memory_space<vmem>>, vector<256x128xf32>,
    } else {
    }
    return
  }
  func.func @transform_0(%arg0: i32, %arg1: i32, %arg2: memref<4x2xi32, #tpu.memory_space<smem>>, %arg3: memref<4xi32, #tpu.memory_space<smem>>) -> (i32, i32) {
    %0 = arith.index_cast %arg0 : i32 to index
    %1 = arith.index_cast %arg1 : i32 to index
    %2 = memref.load %arg2[%0, %1] : memref<4x2xi32, #tpu.memory_space<smem>>
    %c0_i32 = arith.constant 0 : i32
    return %arg0, %2 : i32, i32
  }
  func.func @transform_1(%arg0: i32, %arg1: i32, %arg2: memref<4x2xi32, #tpu.memory_space<smem>>, %arg3: memref<4xi32, #tpu.memory_space<smem>>) -> (i32, i32) {
    %0 = arith.index_cast %arg0 : i32 to index
    %1 = arith.index_cast %arg1 : i32 to index
    %2 = memref.load %arg2[%0, %1] : memref<4x2xi32, #tpu.memory_space<smem>>
    %c0_i32 = arith.constant 0 : i32
    %c0_i32_0 = arith.constant 0 : i32
    return %2, %c0_i32 : i32, i32
  }
  func.func @transform_2(%arg0: i32, %arg1: i32, %arg2: memref<4x2xi32, #tpu.memory_space<smem>>, %arg3: memref<4xi32, #tpu.memory_space<smem>>) -> (i32, i32) {
    %c0_i32 = arith.constant 0 : i32
    %c0_i32_0 = arith.constant 0 : i32
    return %arg0, %c0_i32 : i32, i32
  }
  func.func @transform_3(%arg0: i32, %arg1: i32, %arg2: memref<4x2xi32, #tpu.memory_space<smem>>, %arg3: memref<4xi32, #tpu.memory_space<smem>>) -> (i32, i32) {
    %c0_i32 = arith.constant 0 : i32
    %c0_i32_0 = arith.constant 0 : i32
    %c0_i32_1 = arith.constant 0 : i32
    return %c0_i32, %c0_i32_0 : i32, i32
  }
  func.func @transform_4(%arg0: i32, %arg1: i32, %arg2: memref<4x2xi32, #tpu.memory_space<smem>>, %arg3: memref<4xi32, #tpu.memory_space<smem>>) -> (i32, i32) {
    %c0_i32 = arith.constant 0 : i32
    %c0_i32_0 = arith.constant 0 : i32
    return %arg0, %c0_i32 : i32, i32
  }
}

module attributes {stable_mosaic.version = 11 : i64} {
  func.func @_score_kernel(%arg0: memref<128x128xf32, #tpu.memory_space<vmem>>, %arg1: memref<128x128xf32, #tpu.memory_space<vmem>>, %arg2: memref<1x128xf32, #tpu.memory_space<vmem>>) attributes {dimension_semantics = [], scalar_prefetch = 0 : i64, scratch_operands = 0 : i64, tpu.core_type = #tpu.core_type<tc>} {
    %c0 = arith.constant 0 : index
    %c0_0 = arith.constant 0 : index
    %0 = vector.load %arg0[%c0, %c0_0] : memref<128x128xf32, #tpu.memory_space<vmem>>, vector<128x128xf32>
    %c0_1 = arith.constant 0 : index
    %c0_2 = arith.constant 0 : index
    %1 = vector.load %arg1[%c0_1, %c0_2] : memref<128x128xf32, #tpu.memory_space<vmem>>, vector<128x128xf32>
    %2 = arith.mulf %0, %1 : vector<128x128xf32>
    %cst = arith.constant dense<0.000000e+00> : vector<128xf32>
    %3 = vector.multi_reduction <add>, %2, %cst [0] : vector<128x128xf32> to vector<128xf32>
    %4 = vector.shape_cast %3 : vector<128xf32> to vector<1x128xf32>
    %c0_3 = arith.constant 0 : index
    %c0_4 = arith.constant 0 : index
    %5 = vector.load %arg2[%c0_3, %c0_4] : memref<1x128xf32, #tpu.memory_space<vmem>>, vector<1x128xf32>
    tpu.vector_store %arg2[%c0_3, %c0_4], %4 {strides = array<i32>} : memref<1x128xf32, #tpu.memory_space<vmem>>, vector<1x128xf32>,
    return
  }
}

</mosaic_0001>

<llo_original>
// kernel: model_forward.3
$region0: #{model_forward.3}
  #allocation0 [shape = 'u32[]', space=smem, size = 0x4, offset = 0x4, fixed_abs, tag = 'smem constant byte address 0x4 - core index']
  #allocation1 [shape = 'u32[144,128]{1,0:T(1,128)}', space=vmem, size = 0x12000, scoped, tag = 'internal scratch']
  %s0 = inlined_call_operand.hbm [shape: f32[1024,128], index: 0, kind: input, shape index: {}]
  %s1 = inlined_call_operand.vmem [shape: bf16[128,128], index: 1, kind: input, shape index: {}]
  %s2 = inlined_call_operand.hbm [shape: f32[1,128], index: 2, kind: input, shape index: {}]
  %s3 = inlined_call_operand.vmem [shape: bf16[128,128], index: 3, kind: input, shape index: {}]
  %s4 = inlined_call_operand.vmem [shape: bf16[128,128], index: 4, kind: input, shape index: {}]
  %s5 = inlined_call_operand.vmem [shape: bf16[1024,128], index: 5, kind: output, shape index: {0}]
  %s6 = inlined_call_operand.vmem [shape: f32[1024,128], index: 6, kind: output, shape index: {1}]
  %7 = xla_tuple %s5, %s6
  %s8 = sld [smem:[#allocation0]]
  $region69: #{model_forward.3} parent=0
    _
  %s10 = ssub.s32 1, %s8
  %s11 = scalar_select 0, %s10, %s8
  $region1: #{model_forward.3} parent=0
    #allocation2 [shape = 'u8[524288]{0}', space=vmem, size = 0x80000, scoped, tag = 'input window, operand 0']
    #allocation3 [shape = 's32[2]{0}', space=sflag, size = 0x8, scoped, tag = 'scoped memory for model_forward.3']
    #allocation4 [shape = 'u8[512]{0}', space=vmem, size = 0x400, scoped, tag = 'input window, operand 2, single buffered']
    #allocation5 [shape = 's32[1]{0}', space=sflag, size = 0x4, scoped, tag = 'scoped memory for model_forward.3']
    %12 = vsyncpa [#allocation3], 0
    %s13 = scalar_lea.sflag [#allocation3], 1
    %14 = vsyncpa %s13, 0
    %15 = vsyncpa [#allocation5], 0
    loop: start=0, step=1, limit=4
    $region2: #{model_forward.3} parent=1 // loop_pre_header
      _
    $region3: #{model_forward.3} parent=1 // loop_header
      %s17 = sphi 0, %s21
      %p18 = scmp.ge.s32.totalorder %s17, 4
      %s27 = sphi 0, %s29
      %s30 = sphi 0, %s27
      %s31 = sphi 0, %s30
      %s47 = sphi 0, %s31
      %s51 = sphi 0, %s51
      %s53 = sphi 0, %s51
      %s54 = sphi 0, %s53
      %s68 = sphi 0, %s54
      %s72 = sphi 0, %s72
      %s74 = sphi 0, %s72
      %s75 = sphi 0, %s74
      %s89 = sphi 0, %s75
      %s93 = sphi 0, %s93
      %s95 = sphi 0, %s93
      %s96 = sphi 0, %s95
      %s110 = sphi 0, %s96
      %s114 = sphi 0, %s114
      %s116 = sphi 0, %s114
      %s117 = sphi 0, %s116
      %s131 = sphi 0, %s117
      %s137 = sphi 0, %s139
      %s140 = sphi 0, %s137
      %s141 = sphi 0, %s140
      %s157 = sphi 0, %s141
      %s163 = sphi 0, %s165
      %s166 = sphi 0, %s163
      %s167 = sphi 0, %s166
      %s183 = sphi 0, %s167
    $region4: #{model_forward.3} parent=1 // loop_header_branch
      %20 = sbr.rel (%p18) target = $region8
    $region5: #{model_forward.3} parent=1 // loop_body
      %s22 = ssub.s32 %s17, 1
      %s23 = ssub.s32 %s17, 2
      %s24 = sadd.s32 %s17, 1
      %s25 = ssub.s32 %s17, %s24
      %p26 = scmp.eq.s32.totalorder %s25, 0
      %s28 = sadd.s32 %s27, 1
      %s29 = scalar_select %p26, %s27, %s28
      %p32 = pneg %p26
      %p33 = scmp.eq.s32.totalorder %s17, 1
      %p34 = por %p32, %p33
      %p35 = scmp.ne.s32.totalorder %s27, %s30
      %p36 = scmp.eq.s32.totalorder %s17, 0
      %p37 = por %p35, %p36
      %p38 = scmp.ne.s32.totalorder %s27, %s30
      %p39 = scmp.eq.s32.totalorder %s22, 1
      %p40 = por %p38, %p39
      %p41 = scmp.ne.s32.totalorder %s30, %s31
      %p42 = scmp.eq.s32.totalorder %s22, 0
      %p43 = por %p41, %p42
      %p44 = scmp.ne.s32.totalorder %s30, %s31
      %p45 = scmp.eq.s32.totalorder %s23, 1
      %p46 = por %p44, %p45
      %p48 = scmp.ne.s32.totalorder %s31, %s47
      %p49 = scmp.eq.s32.totalorder %s23, 0
      %p50 = por %p48, %p49
      %s52 = sadd.s32 %s51, 1
      %p55 = scmp.eq.s32.totalorder %s17, 1
      %p56 = scmp.ne.s32.totalorder %s51, %s53
      %p57 = scmp.eq.s32.totalorder %s17, 0
      %p58 = por %p56, %p57
      %p59 = scmp.ne.s32.totalorder %s51, %s53
      %p60 = scmp.eq.s32.totalorder %s22, 1
      %p61 = por %p59, %p60
      %p62 = scmp.ne.s32.totalorder %s53, %s54
      %p63 = scmp.eq.s32.totalorder %s22, 0
      %p64 = por %p62, %p63
      %p65 = scmp.ne.s32.totalorder %s53, %s54
      %p66 = scmp.eq.s32.totalorder %s23, 1
      %p67 = por %p65, %p66
      %p69 = scmp.ne.s32.totalorder %s54, %s68
      %p70 = scmp.eq.s32.totalorder %s23, 0
      %p71 = por %p69, %p70
      %s73 = sadd.s32 %s72, 1
      %p76 = scmp.eq.s32.totalorder %s17, 1
      %p77 = scmp.ne.s32.totalorder %s72, %s74
      %p78 = scmp.eq.s32.totalorder %s17, 0
      %p79 = por %p77, %p78
      %p80 = scmp.ne.s32.totalorder %s72, %s74
      %p81 = scmp.eq.s32.totalorder %s22, 1
      %p82 = por %p80, %p81
      %p83 = scmp.ne.s32.totalorder %s74, %s75
      %p84 = scmp.eq.s32.totalorder %s22, 0
      %p85 = por %p83, %p84
      %p86 = scmp.ne.s32.totalorder %s74, %s75
      %p87 = scmp.eq.s32.totalorder %s23, 1
      %p88 = por %p86, %p87
      %p90 = scmp.ne.s32.totalorder %s75, %s89
      %p91 = scmp.eq.s32.totalorder %s23, 0
      %p92 = por %p90, %p91
      %s94 = sadd.s32 %s93, 1
      %p97 = scmp.eq.s32.totalorder %s17, 1
      %p98 = scmp.ne.s32.totalorder %s93, %s95
      %p99 = scmp.eq.s32.totalorder %s17, 0
      %p100 = por %p98, %p99
      %p101 = scmp.ne.s32.totalorder %s93, %s95
      %p102 = scmp.eq.s32.totalorder %s22, 1
      %p103 = por %p101, %p102
      %p104 = scmp.ne.s32.totalorder %s95, %s96
      %p105 = scmp.eq.s32.totalorder %s22, 0
      %p106 = por %p104, %p105
      %p107 = scmp.ne.s32.totalorder %s95, %s96
      %p108 = scmp.eq.s32.totalorder %s23, 1
      %p109 = por %p107, %p108
      %p111 = scmp.ne.s32.totalorder %s96, %s110
      %p112 = scmp.eq.s32.totalorder %s23, 0
      %p113 = por %p111, %p112
      %s115 = sadd.s32 %s114, 1
      %p118 = scmp.eq.s32.totalorder %s17, 1
      %p119 = scmp.ne.s32.totalorder %s114, %s116
      %p120 = scmp.eq.s32.totalorder %s17, 0
      %p121 = por %p119, %p120
      %p122 = scmp.ne.s32.totalorder %s114, %s116
      %p123 = scmp.eq.s32.totalorder %s22, 1
      %p124 = por %p122, %p123
      %p125 = scmp.ne.s32.totalorder %s116, %s117
      %p126 = scmp.eq.s32.totalorder %s22, 0
      %p127 = por %p125, %p126
      %p128 = scmp.ne.s32.totalorder %s116, %s117
      %p129 = scmp.eq.s32.totalorder %s23, 1
      %p130 = por %p128, %p129
      %p132 = scmp.ne.s32.totalorder %s117, %s131
      %p133 = scmp.eq.s32.totalorder %s23, 0
      %p134 = por %p132, %p133
      %s135 = ssub.s32 %s17, %s24
      %p136 = scmp.eq.s32.totalorder %s135, 0
      %s138 = sadd.s32 %s137, 1
      %s139 = scalar_select %p136, %s137, %s138
      %p142 = pneg %p136
      %p143 = scmp.eq.s32.totalorder %s17, 1
      %p144 = por %p142, %p143
      %p145 = scmp.ne.s32.totalorder %s137, %s140
      %p146 = scmp.eq.s32.totalorder %s17, 0
      %p147 = por %p145, %p146
      %p148 = scmp.ne.s32.totalorder %s137, %s140
      %p149 = scmp.eq.s32.totalorder %s22, 1
      %p150 = por %p148, %p149
      %p151 = scmp.ne.s32.totalorder %s140, %s141
      %p152 = scmp.eq.s32.totalorder %s22, 0
      %p153 = por %p151, %p152
      %p154 = scmp.ne.s32.totalorder %s140, %s141
      %p155 = scmp.eq.s32.totalorder %s23, 1
      %p156 = por %p154, %p155
      %p158 = scmp.ne.s32.totalorder %s141, %s157
      %p159 = scmp.eq.s32.totalorder %s23, 0
      %p160 = por %p158, %p159
      %s161 = ssub.s32 %s17, %s24
      %p162 = scmp.eq.s32.totalorder %s161, 0
      %s164 = sadd.s32 %s163, 1
      %s165 = scalar_select %p162, %s163, %s164
      %p168 = pneg %p162
      %p169 = scmp.eq.s32.totalorder %s17, 1
      %p170 = por %p168, %p169
      %p171 = scmp.ne.s32.totalorder %s163, %s166
      %p172 = scmp.eq.s32.totalorder %s17, 0
      %p173 = por %p171, %p172
      %p174 = scmp.ne.s32.totalorder %s163, %s166
      %p175 = scmp.eq.s32.totalorder %s22, 1
      %p176 = por %p174, %p175
      %p177 = scmp.ne.s32.totalorder %s166, %s167
      %p178 = scmp.eq.s32.totalorder %s22, 0
      %p179 = por %p177, %p178
      %p180 = scmp.ne.s32.totalorder %s166, %s167
      %p181 = scmp.eq.s32.totalorder %s23, 1
      %p182 = por %p180, %p181
      %p184 = scmp.ne.s32.totalorder %s167, %s183
      %p185 = scmp.eq.s32.totalorder %s23, 0
      %p186 = por %p184, %p185
      %p187 = scmp.le.s32.totalorder 1, %s17
      %p188 = scmp.lt.s32.totalorder %s17, 3
      %p189 = pnand %p187, %p188
      %p190 = pneg %p189
      // Predicated region
      $region9: #{model_forward.3} parent=5 // pred_check
        _
      $region10: #{model_forward.3} parent=5 // pred_check_branch
        %192 = sbr.rel (%p189) target = $region12
      $region11: #{model_forward.3} parent=5 // pred_region
        %s193 = ssub.s32 %s17, 1
        // Predicated region
        $region13: #{model_forward.3} parent=11 // pred_check
          %p194 = pneg %p64
        $region14: #{model_forward.3} parent=11 // pred_check_branch
          %196 = sbr.rel (%p194) target = $region16
        $region15: #{model_forward.3} parent=11 // pred_region
          _
        $region16: #{model_forward.3} parent=11 // pred_fallthru
          _
        // Predicated region
        $region17: #{model_forward.3} parent=11 // pred_check
          %p197 = pneg %p85
        $region18: #{model_forward.3} parent=11 // pred_check_branch
          %199 = sbr.rel (%p197) target = $region20
        $region19: #{model_forward.3} parent=11 // pred_region
          %s201 = ssub.s32 16, 16
          %202 = vsyncadd [#allocation5], %s201
          %s204 = sshll.u32 [#allocation4], 4
          %s205 = int_to_ptr.vmem [resolvable:$true] %s204
          %207 = dma.hbm_to_vmem [thread:$0]  %s2, 16, %s205, [#allocation5]
        $region20: #{model_forward.3} parent=11 // pred_fallthru
          _
        // Predicated region
        $region21: #{model_forward.3} parent=11 // pred_check
          %p208 = pneg %p106
        $region22: #{model_forward.3} parent=11 // pred_check_branch
          %210 = sbr.rel (%p208) target = $region24
        $region23: #{model_forward.3} parent=11 // pred_region
          _
        $region24: #{model_forward.3} parent=11 // pred_fallthru
          _
        // Predicated region
        $region25: #{model_forward.3} parent=11 // pred_check
          %p211 = pneg %p127
        $region26: #{model_forward.3} parent=11 // pred_check_branch
          %213 = sbr.rel (%p211) target = $region28
        $region27: #{model_forward.3} parent=11 // pred_region
          _
        $region28: #{model_forward.3} parent=11 // pred_fallthru
          _
      $region12: #{model_forward.3} parent=5 // pred_fallthru
        _
      %p214 = scmp.lt.s32.totalorder %s17, 2
      // Predicated region
      $region29: #{model_forward.3} parent=5 // pred_check
        %p215 = pneg %p214
      $region30: #{model_forward.3} parent=5 // pred_check_branch
        %217 = sbr.rel (%p215) target = $region32
      $region31: #{model_forward.3} parent=5 // pred_region
        // Predicated region
        $region33: #{model_forward.3} parent=31 // pred_check
          %p218 = pneg %p37
        $region34: #{model_forward.3} parent=31 // pred_check_branch
          %220 = sbr.rel (%p218) target = $region36
        $region35: #{model_forward.3} parent=31 // pred_region
          %s221 = sand.u32 %s27, 1
          %s222 = scalar_lea.sflag [#allocation3], %s221
          %s223 = sand.u32 %s27, 1
          %s224 = smul.addr %s223, 512
          %s225 = scalar_lea.vmem [#allocation2], %s224
          %s226 = smul.u32 64, %s17
          %s228 = ssub.s32 8192, 8192
          %229 = vsyncadd %s222, %s228
          %s230 = smul.addr %s226, 128
          %s231 = scalar_lea.hbm %s0, %s230
          %s232 = sshll.u32 %s225, 4
          %s233 = int_to_ptr.vmem [resolvable:$true] %s232
          %238 = dma.hbm_to_vmem [thread:$0]  %s231, 8192, %s233, %s222, 128, 128, 8
        $region36: #{model_forward.3} parent=31 // pred_fallthru
          _
      $region32: #{model_forward.3} parent=5 // pred_fallthru
        _
      %p239 = scmp.le.s32.totalorder 1, %s17
      %p240 = scmp.lt.s32.totalorder %s17, 3
      %p241 = pnand %p239, %p240
      %p242 = pneg %p241
      // Predicated region
      $region37: #{model_forward.3} parent=5 // pred_check
        _
      $region38: #{model_forward.3} parent=5 // pred_check_branch
        %244 = sbr.rel (%p241) target = $region40
      $region39: #{model_forward.3} parent=5 // pred_region
        %s245 = ssub.s32 %s17, 1
        %s246 = sand.u32 %s30, 1
        %s247 = scalar_lea.sflag [#allocation3], %s246
        %s248 = sand.u32 %s30, 1
        %s249 = smul.addr %s248, 512
        %s250 = scalar_lea.vmem [#allocation2], %s249
        // Predicated region
        $region41: #{model_forward.3} parent=39 // pred_check
          %p251 = pneg %p43
        $region42: #{model_forward.3} parent=39 // pred_check_branch
          %253 = sbr.rel (%p251) target = $region44
        $region43: #{model_forward.3} parent=39 // pred_region
          %254 = dma.done %s247, 8192
        $region44: #{model_forward.3} parent=39 // pred_fallthru
          _
        // Predicated region
        $region45: #{model_forward.3} parent=39 // pred_check
          %p255 = pneg %p85
        $region46: #{model_forward.3} parent=39 // pred_check_branch
          %257 = sbr.rel (%p255) target = $region48
        $region47: #{model_forward.3} parent=39 // pred_region
          %258 = dma.done [#allocation5], 16
        $region48: #{model_forward.3} parent=39 // pred_fallthru
          _
        %s259 = sand.u32 %s30, 1
        %s260 = scalar_lea.sflag [#allocation3], %s259
        %s261 = sand.u32 %s30, 1
        %s262 = smul.addr %s261, 512
        %s263 = scalar_lea.vmem [#allocation2], %s262
        %p264 = pneg %p43
        %p265 = pneg %p40
        %p266 = pneg %p64
        %p267 = pneg %p61
        %p268 = pneg %p85
        %p269 = pneg %p82
        %p270 = pneg %p106
        %p271 = pneg %p103
        %p272 = pneg %p127
        %p273 = pneg %p124
        %p274 = pneg %p153
        %p275 = pneg %p150
        %s276 = smul.u32 64, %s22
        %p277 = scmp.lt.s32.totalorder %s276, 127
        %s278 = scalar_select %p277, %s276, 127
        %s279 = smul.addr %s278, 4
        %s280 = scalar_lea.vmem %s5, %s279
        %p281 = pneg %p179
        %p282 = pneg %p176
        %s283 = smul.u32 64, %s22
        %p284 = scmp.lt.s32.totalorder %s283, 127
        %s285 = scalar_select %p284, %s283, 127
        %s286 = smul.addr %s285, 8
        %s287 = scalar_lea.vmem %s6, %s286
        %s288 = smul.u32 64, %s22
        %s289 = smul.u32 64, %s22
        %p290 = scmp.lt.s32.totalorder %s289, 127
        %s291 = scalar_select %p290, %s289, 127
        %s292 = smul.addr %s291, 4
        %s293 = scalar_lea.vmem %s5, %s292
        %s294 = smul.u32 64, %s22
        %s295 = smul.u32 64, %s22
        %p296 = scmp.lt.s32.totalorder %s295, 127
        %s297 = scalar_select %p296, %s295, 127
        %s298 = smul.addr %s297, 8
        %s299 = scalar_lea.vmem %s6, %s298
        %s300 = smul.u32 64, %s22
        %v302 = vld [vmem:[%s250] sm:$0xff]
        %v303 = vld [vmem:[%s250 + $0x8] sm:$0xff]
        %v304 = vld [vmem:[%s250 + $0x10] sm:$0xff]
        %v305 = vld [vmem:[%s250 + $0x18] sm:$0xff]
        %v306 = vld [vmem:[%s250 + $0x20] sm:$0xff]
        %v307 = vld [vmem:[%s250 + $0x28] sm:$0xff]
        %v308 = vld [vmem:[%s250 + $0x30] sm:$0xff]
        %v309 = vld [vmem:[%s250 + $0x38] sm:$0xff]
        %v310 = vld [vmem:[%s250 + $0x40] sm:$0xff]
        %v311 = vld [vmem:[%s250 + $0x48] sm:$0xff]
        %v312 = vld [vmem:[%s250 + $0x50] sm:$0xff]
        %v313 = vld [vmem:[%s250 + $0x58] sm:$0xff]
        %v314 = vld [vmem:[%s250 + $0x60] sm:$0xff]
        %v315 = vld [vmem:[%s250 + $0x68] sm:$0xff]
        %v316 = vld [vmem:[%s250 + $0x70] sm:$0xff]
        %v317 = vld [vmem:[%s250 + $0x78] sm:$0xff]
        %v318 = vld [vmem:[%s250 + $0x80] sm:$0xff]
        %v319 = vld [vmem:[%s250 + $0x88] sm:$0xff]
        %v320 = vld [vmem:[%s250 + $0x90] sm:$0xff]
        %v321 = vld [vmem:[%s250 + $0x98] sm:$0xff]
        %v322 = vld [vmem:[%s250 + $0xa0] sm:$0xff]
        %v323 = vld [vmem:[%s250 + $0xa8] sm:$0xff]
        %v324 = vld [vmem:[%s250 + $0xb0] sm:$0xff]
        %v325 = vld [vmem:[%s250 + $0xb8] sm:$0xff]
        %v326 = vld [vmem:[%s250 + $0xc0] sm:$0xff]
        %v327 = vld [vmem:[%s250 + $0xc8] sm:$0xff]
        %v328 = vld [vmem:[%s250 + $0xd0] sm:$0xff]
        %v329 = vld [vmem:[%s250 + $0xd8] sm:$0xff]
        %v330 = vld [vmem:[%s250 + $0xe0] sm:$0xff]
        %v331 = vld [vmem:[%s250 + $0xe8] sm:$0xff]
        %v332 = vld [vmem:[%s250 + $0xf0] sm:$0xff]
        %v333 = vld [vmem:[%s250 + $0xf8] sm:$0xff]
        %v334 = vld [vmem:[%s250 + $0x100] sm:$0xff]
        %v335 = vld [vmem:[%s250 + $0x108] sm:$0xff]
        %v336 = vld [vmem:[%s250 + $0x110] sm:$0xff]
        %v337 = vld [vmem:[%s250 + $0x118] sm:$0xff]
        %v338 = vld [vmem:[%s250 + $0x120] sm:$0xff]
        %v339 = vld [vmem:[%s250 + $0x128] sm:$0xff]
        %v340 = vld [vmem:[%s250 + $0x130] sm:$0xff]
        %v341 = vld [vmem:[%s250 + $0x138] sm:$0xff]
        %v342 = vld [vmem:[%s250 + $0x140] sm:$0xff]
        %v343 = vld [vmem:[%s250 + $0x148] sm:$0xff]
        %v344 = vld [vmem:[%s250 + $0x150] sm:$0xff]
        %v345 = vld [vmem:[%s250 + $0x158] sm:$0xff]
        %v346 = vld [vmem:[%s250 + $0x160] sm:$0xff]
        %v347 = vld [vmem:[%s250 + $0x168] sm:$0xff]
        %v348 = vld [vmem:[%s250 + $0x170] sm:$0xff]
        %v349 = vld [vmem:[%s250 + $0x178] sm:$0xff]
        %v350 = vld [vmem:[%s250 + $0x180] sm:$0xff]
        %v351 = vld [vmem:[%s250 + $0x188] sm:$0xff]
        %v352 = vld [vmem:[%s250 + $0x190] sm:$0xff]
        %v353 = vld [vmem:[%s250 + $0x198] sm:$0xff]
        %v354 = vld [vmem:[%s250 + $0x1a0] sm:$0xff]
        %v355 = vld [vmem:[%s250 + $0x1a8] sm:$0xff]
        %v356 = vld [vmem:[%s250 + $0x1b0] sm:$0xff]
        %v357 = vld [vmem:[%s250 + $0x1b8] sm:$0xff]
        %v358 = vld [vmem:[%s250 + $0x1c0] sm:$0xff]
        %v359 = vld [vmem:[%s250 + $0x1c8] sm:$0xff]
        %v360 = vld [vmem:[%s250 + $0x1d0] sm:$0xff]
        %v361 = vld [vmem:[%s250 + $0x1d8] sm:$0xff]
        %v362 = vld [vmem:[%s250 + $0x1e0] sm:$0xff]
        %v363 = vld [vmem:[%s250 + $0x1e8] sm:$0xff]
        %v364 = vld [vmem:[%s250 + $0x1f0] sm:$0xff]
        %v365 = vld [vmem:[%s250 + $0x1f8] sm:$0xff]
        %v366 = vpack.c.bf16 %v303, %v302
        %v367 = vpack.c.bf16 %v305, %v304
        %v368 = vpack.c.bf16 %v307, %v306
        %v369 = vpack.c.bf16 %v309, %v308
        %v370 = vpack.c.bf16 %v311, %v310
        %v371 = vpack.c.bf16 %v313, %v312
        %v372 = vpack.c.bf16 %v315, %v314
        %v373 = vpack.c.bf16 %v317, %v316
        %v374 = vpack.c.bf16 %v319, %v318
        %v375 = vpack.c.bf16 %v321, %v320
        %v376 = vpack.c.bf16 %v323, %v322
        %v377 = vpack.c.bf16 %v325, %v324
        %v378 = vpack.c.bf16 %v327, %v326
        %v379 = vpack.c.bf16 %v329, %v328
        %v380 = vpack.c.bf16 %v331, %v330
        %v381 = vpack.c.bf16 %v333, %v332
        %v382 = vpack.c.bf16 %v335, %v334
        %v383 = vpack.c.bf16 %v337, %v336
        %v384 = vpack.c.bf16 %v339, %v338
        %v385 = vpack.c.bf16 %v341, %v340
        %v386 = vpack.c.bf16 %v343, %v342
        %v387 = vpack.c.bf16 %v345, %v344
        %v388 = vpack.c.bf16 %v347, %v346
        %v389 = vpack.c.bf16 %v349, %v348
        %v390 = vpack.c.bf16 %v351, %v350
        %v391 = vpack.c.bf16 %v353, %v352
        %v392 = vpack.c.bf16 %v355, %v354
        %v393 = vpack.c.bf16 %v357, %v356
        %v394 = vpack.c.bf16 %v359, %v358
        %v395 = vpack.c.bf16 %v361, %v360
        %v396 = vpack.c.bf16 %v363, %v362
        %v397 = vpack.c.bf16 %v365, %v364
        %v398 = vld [vmem:[%s1] sm:$0xf]
        %v399 = vld [vmem:[%s1 + $0x4] sm:$0xf]
        %v400 = vld [vmem:[%s1 + $0x8] sm:$0xf]
        %v401 = vld [vmem:[%s1 + $0xc] sm:$0xf]
        %v402 = vld [vmem:[%s1 + $0x10] sm:$0xf]
        %v403 = vld [vmem:[%s1 + $0x14] sm:$0xf]
        %v404 = vld [vmem:[%s1 + $0x18] sm:$0xf]
        %v405 = vld [vmem:[%s1 + $0x1c] sm:$0xf]
        %v406 = vld [vmem:[%s1 + $0x20] sm:$0xf]
        %v407 = vld [vmem:[%s1 + $0x24] sm:$0xf]
        %v408 = vld [vmem:[%s1 + $0x28] sm:$0xf]
        %v409 = vld [vmem:[%s1 + $0x2c] sm:$0xf]
        %v410 = vld [vmem:[%s1 + $0x30] sm:$0xf]
        %v411 = vld [vmem:[%s1 + $0x34] sm:$0xf]
        %v412 = vld [vmem:[%s1 + $0x38] sm:$0xf]
        %v413 = vld [vmem:[%s1 + $0x3c] sm:$0xf]
        %v414 = vld [vmem:[#allocation4] sm:$0x1]
        %v416 = vlaneseq
        %v417 = vshrl.u32 %v416, 7
        %v418 = vsub.s32 0, %v417
        %v419 = vrot.slane %v414, %v418
        %v437 = vunpack.c.l.b16 %v398
        %v438 = vunpack.c.l.b16 %v399
        %v439 = vunpack.c.l.b16 %v400
        %v440 = vunpack.c.l.b16 %v401
        %v441 = vunpack.c.l.b16 %v402
        %v442 = vunpack.c.l.b16 %v403
        %v443 = vunpack.c.l.b16 %v404
        %v444 = vunpack.c.l.b16 %v405
        %v445 = vunpack.c.l.b16 %v406
        %v446 = vunpack.c.l.b16 %v407
        %v447 = vunpack.c.l.b16 %v408
        %v448 = vunpack.c.l.b16 %v409
        %v449 = vunpack.c.l.b16 %v410
        %v450 = vunpack.c.l.b16 %v411
        %v451 = vunpack.c.l.b16 %v412
        %v452 = vunpack.c.l.b16 %v413
        %v453 = vpack.c.b16 %v438, %v437
        %v454 = vpack.c.b16 %v440, %v439
        %v455 = vpack.c.b16 %v442, %v441
        %v456 = vpack.c.b16 %v444, %v443
        %v457 = vpack.c.b16 %v446, %v445
        %v458 = vpack.c.b16 %v448, %v447
        %v459 = vpack.c.b16 %v450, %v449
        %v460 = vpack.c.b16 %v452, %v451
        %469 = vmatprep.subr.bf16.mxu0 0
        %470 = vmatpush1.bf16.msra.mxu0 %v460
        %471 = vmatprep.subr.bf16.mxu0 0
        %472 = vmatpush1.bf16.msra.mxu0 %v459
        %473 = vmatprep.subr.bf16.mxu0 0
        %474 = vmatpush1.bf16.msra.mxu0 %v458
        %475 = vmatprep.subr.bf16.mxu0 0
        %476 = vmatpush1.bf16.msra.mxu0 %v457
        %477 = vmatprep.subr.bf16.mxu0 0
        %478 = vmatpush1.bf16.msra.mxu0 %v456
        %479 = vmatprep.subr.bf16.mxu0 0
        %480 = vmatpush1.bf16.msra.mxu0 %v455
        %481 = vmatprep.subr.bf16.mxu0 0
        %482 = vmatpush1.bf16.msra.mxu0 %v454
        %483 = vmatprep.subr.bf16.mxu0 0
        %484 = vmatpush1.bf16.msra.mxu0 %v453
        %485 = vmatprep.subr.bf16.mxu0 0
        %486 = vmatpush2.bf16.msra.mxu0 0
        %487 = vmatprep.subr.bf16.mxu0 0
        %488 = vmatpush2.bf16.msra.mxu0 0
        %489 = vmatprep.subr.bf16.mxu0 0
        %490 = vmatpush2.bf16.msra.mxu0 0
        %491 = vmatprep.subr.bf16.mxu0 0
        %492 = vmatpush2.bf16.msra.mxu0 0
        %493 = vmatprep.subr.bf16.mxu0 0
        %494 = vmatpush2.bf16.msra.mxu0 0
        %495 = vmatprep.subr.bf16.mxu0 0
        %496 = vmatpush2.bf16.msra.mxu0 0
        %497 = vmatprep.subr.bf16.mxu0 0
        %498 = vmatpush2.bf16.msra.mxu0 0
        %499 = vmatprep.subr.bf16.mxu0 0
        %500 = vmatpush2.bf16.msra.mxu0 0
        %501 = vmatprep.mubr.bf16.mxu0 0
        %502 = vmatmul.mubr.bf16.gmra.mxu0 %v366
        %v503 = vpop.f32.mrf.mxu0
        %v504 = vadd.f32 %v419, %v503
        %v505 = vpop.f32.mrf.mxu0
        %v506 = vpop.f32.mrf.mxu0
        %v507 = vadd.f32 %v419, %v506
        %v508 = vpop.f32.mrf.mxu0
        %509 = vmatprep.mubr.bf16.mxu0 0
        %510 = vmatmul.mubr.bf16.gmra.mxu0 %v367
        %v511 = vpop.f32.mrf.mxu0
        %v512 = vadd.f32 %v419, %v511
        %v513 = vpop.f32.mrf.mxu0
        %v514 = vpop.f32.mrf.mxu0
        %v515 = vadd.f32 %v419, %v514
        %v516 = vpop.f32.mrf.mxu0
        %517 = vmatprep.mubr.bf16.mxu0 0
        %518 = vmatmul.mubr.bf16.gmra.mxu0 %v368
        %v519 = vpop.f32.mrf.mxu0
        %v520 = vadd.f32 %v419, %v519
        %v521 = vpop.f32.mrf.mxu0
        %v522 = vpop.f32.mrf.mxu0
        %v523 = vadd.f32 %v419, %v522
        %v524 = vpop.f32.mrf.mxu0
        %525 = vmatprep.mubr.bf16.mxu0 0
        %526 = vmatmul.mubr.bf16.gmra.mxu0 %v369
        %v527 = vpop.f32.mrf.mxu0
        %v528 = vadd.f32 %v419, %v527
        %v529 = vpop.f32.mrf.mxu0
        %v530 = vpop.f32.mrf.mxu0
        %v531 = vadd.f32 %v419, %v530
        %v532 = vpop.f32.mrf.mxu0
        %533 = vmatprep.mubr.bf16.mxu0 0
        %534 = vmatmul.mubr.bf16.gmra.mxu0 %v370
        %v535 = vpop.f32.mrf.mxu0
        %v536 = vadd.f32 %v419, %v535
        %v537 = vpop.f32.mrf.mxu0
        %v538 = vpop.f32.mrf.mxu0
        %v539 = vadd.f32 %v419, %v538
        %v540 = vpop.f32.mrf.mxu0
        %541 = vmatprep.mubr.bf16.mxu0 0
        %542 = vmatmul.mubr.bf16.gmra.mxu0 %v371
        %v543 = vpop.f32.mrf.mxu0
        %v544 = vadd.f32 %v419, %v543
        %v545 = vpop.f32.mrf.mxu0
        %v546 = vpop.f32.mrf.mxu0
        %v547 = vadd.f32 %v419, %v546
        %v548 = vpop.f32.mrf.mxu0
        %549 = vmatprep.mubr.bf16.mxu0 0
        %550 = vmatmul.mubr.bf16.gmra.mxu0 %v372
        %v551 = vpop.f32.mrf.mxu0
        %v552 = vadd.f32 %v419, %v551
        %v553 = vpop.f32.mrf.mxu0
        %v554 = vpop.f32.mrf.mxu0
        %v555 = vadd.f32 %v419, %v554
        %v556 = vpop.f32.mrf.mxu0
        %557 = vmatprep.mubr.bf16.mxu0 0
        %558 = vmatmul.mubr.bf16.gmra.mxu0 %v373
        %v559 = vpop.f32.mrf.mxu0
        %v560 = vadd.f32 %v419, %v559
        %v561 = vpop.f32.mrf.mxu0
        %v562 = vpop.f32.mrf.mxu0
        %v563 = vadd.f32 %v419, %v562
        %v564 = vpop.f32.mrf.mxu0
        %565 = vmatprep.mubr.bf16.mxu0 0
        %566 = vmatmul.mubr.bf16.gmra.mxu0 %v374
        %v567 = vpop.f32.mrf.mxu0
        %v568 = vadd.f32 %v419, %v567
        %v569 = vpop.f32.mrf.mxu0
        %v570 = vpop.f32.mrf.mxu0
        %v571 = vadd.f32 %v419, %v570
        %v572 = vpop.f32.mrf.mxu0
        %573 = vmatprep.mubr.bf16.mxu0 0
        %574 = vmatmul.mubr.bf16.gmra.mxu0 %v375
        %v575 = vpop.f32.mrf.mxu0
        %v576 = vadd.f32 %v419, %v575
        %v577 = vpop.f32.mrf.mxu0
        %v578 = vpop.f32.mrf.mxu0
        %v579 = vadd.f32 %v419, %v578
        %v580 = vpop.f32.mrf.mxu0
        %581 = vmatprep.mubr.bf16.mxu0 0
        %582 = vmatmul.mubr.bf16.gmra.mxu0 %v376
        %v583 = vpop.f32.mrf.mxu0
        %v584 = vadd.f32 %v419, %v583
        %v585 = vpop.f32.mrf.mxu0
        %v586 = vpop.f32.mrf.mxu0
        %v587 = vadd.f32 %v419, %v586
        %v588 = vpop.f32.mrf.mxu0
        %589 = vmatprep.mubr.bf16.mxu0 0
        %590 = vmatmul.mubr.bf16.gmra.mxu0 %v377
        %v591 = vpop.f32.mrf.mxu0
        %v592 = vadd.f32 %v419, %v591
        %v593 = vpop.f32.mrf.mxu0
        %v594 = vpop.f32.mrf.mxu0
        %v595 = vadd.f32 %v419, %v594
        %v596 = vpop.f32.mrf.mxu0
        %597 = vmatprep.mubr.bf16.mxu0 0
        %598 = vmatmul.mubr.bf16.gmra.mxu0 %v378
        %v599 = vpop.f32.mrf.mxu0
        %v600 = vadd.f32 %v419, %v599
        %v601 = vpop.f32.mrf.mxu0
        %v602 = vpop.f32.mrf.mxu0
        %v603 = vadd.f32 %v419, %v602
        %v604 = vpop.f32.mrf.mxu0
        %605 = vmatprep.mubr.bf16.mxu0 0
        %606 = vmatmul.mubr.bf16.gmra.mxu0 %v379
        %v607 = vpop.f32.mrf.mxu0
        %v608 = vadd.f32 %v419, %v607
        %v609 = vpop.f32.mrf.mxu0
        %v610 = vpop.f32.mrf.mxu0
        %v611 = vadd.f32 %v419, %v610
        %v612 = vpop.f32.mrf.mxu0
        %613 = vmatprep.mubr.bf16.mxu0 0
        %614 = vmatmul.mubr.bf16.gmra.mxu0 %v380
        %v615 = vpop.f32.mrf.mxu0
        %v616 = vadd.f32 %v419, %v615
        %v617 = vpop.f32.mrf.mxu0
        %v618 = vpop.f32.mrf.mxu0
        %v619 = vadd.f32 %v419, %v618
        %v620 = vpop.f32.mrf.mxu0
        %621 = vmatprep.mubr.bf16.mxu0 0
        %622 = vmatmul.mubr.bf16.gmra.mxu0 %v381
        %v623 = vpop.f32.mrf.mxu0
        %v624 = vadd.f32 %v419, %v623
        %v625 = vpop.f32.mrf.mxu0
        %v626 = vpop.f32.mrf.mxu0
        %v627 = vadd.f32 %v419, %v626
        %v628 = vpop.f32.mrf.mxu0
        %629 = vmatprep.mubr.bf16.mxu0 0
        %630 = vmatmul.mubr.bf16.gmra.mxu0 %v382
        %v631 = vpop.f32.mrf.mxu0
        %v632 = vadd.f32 %v419, %v631
        %v633 = vpop.f32.mrf.mxu0
        %v634 = vpop.f32.mrf.mxu0
        %v635 = vadd.f32 %v419, %v634
        %v636 = vpop.f32.mrf.mxu0
        %637 = vmatprep.mubr.bf16.mxu0 0
        %638 = vmatmul.mubr.bf16.gmra.mxu0 %v383
        %v639 = vpop.f32.mrf.mxu0
        %v640 = vadd.f32 %v419, %v639
        %v641 = vpop.f32.mrf.mxu0
        %v642 = vpop.f32.mrf.mxu0
        %v643 = vadd.f32 %v419, %v642
        %v644 = vpop.f32.mrf.mxu0
        %645 = vmatprep.mubr.bf16.mxu0 0
        %646 = vmatmul.mubr.bf16.gmra.mxu0 %v384
        %v647 = vpop.f32.mrf.mxu0
        %v648 = vadd.f32 %v419, %v647
        %v649 = vpop.f32.mrf.mxu0
        %v650 = vpop.f32.mrf.mxu0
        %v651 = vadd.f32 %v419, %v650
        %v652 = vpop.f32.mrf.mxu0
        %653 = vmatprep.mubr.bf16.mxu0 0
        %654 = vmatmul.mubr.bf16.gmra.mxu0 %v385
        %v655 = vpop.f32.mrf.mxu0
        %v656 = vadd.f32 %v419, %v655
        %v657 = vpop.f32.mrf.mxu0
        %v658 = vpop.f32.mrf.mxu0
        %v659 = vadd.f32 %v419, %v658
        %v660 = vpop.f32.mrf.mxu0
        %661 = vmatprep.mubr.bf16.mxu0 0
        %662 = vmatmul.mubr.bf16.gmra.mxu0 %v386
        %v663 = vpop.f32.mrf.mxu0
        %v664 = vadd.f32 %v419, %v663
        %v665 = vpop.f32.mrf.mxu0
        %v666 = vpop.f32.mrf.mxu0
        %v667 = vadd.f32 %v419, %v666
        %v668 = vpop.f32.mrf.mxu0
        %669 = vmatprep.mubr.bf16.mxu0 0
        %670 = vmatmul.mubr.bf16.gmra.mxu0 %v387
        %v671 = vpop.f32.mrf.mxu0
        %v672 = vadd.f32 %v419, %v671
        %v673 = vpop.f32.mrf.mxu0
        %v674 = vpop.f32.mrf.mxu0
        %v675 = vadd.f32 %v419, %v674
        %v676 = vpop.f32.mrf.mxu0
        %677 = vmatprep.mubr.bf16.mxu0 0
        %678 = vmatmul.mubr.bf16.gmra.mxu0 %v388
        %v679 = vpop.f32.mrf.mxu0
        %v680 = vadd.f32 %v419, %v679
        %v681 = vpop.f32.mrf.mxu0
        %v682 = vpop.f32.mrf.mxu0
        %v683 = vadd.f32 %v419, %v682
        %v684 = vpop.f32.mrf.mxu0
        %685 = vmatprep.mubr.bf16.mxu0 0
        %686 = vmatmul.mubr.bf16.gmra.mxu0 %v389
        %v687 = vpop.f32.mrf.mxu0
        %v688 = vadd.f32 %v419, %v687
        %v689 = vpop.f32.mrf.mxu0
        %v690 = vpop.f32.mrf.mxu0
        %v691 = vadd.f32 %v419, %v690
        %v692 = vpop.f32.mrf.mxu0
        %693 = vmatprep.mubr.bf16.mxu0 0
        %694 = vmatmul.mubr.bf16.gmra.mxu0 %v390
        %v695 = vpop.f32.mrf.mxu0
        %v696 = vadd.f32 %v419, %v695
        %v697 = vpop.f32.mrf.mxu0
        %v698 = vpop.f32.mrf.mxu0
        %v699 = vadd.f32 %v419, %v698
        %v700 = vpop.f32.mrf.mxu0
        %701 = vmatprep.mubr.bf16.mxu0 0
        %702 = vmatmul.mubr.bf16.gmra.mxu0 %v391
        %v703 = vpop.f32.mrf.mxu0
        %v704 = vadd.f32 %v419, %v703
        %v705 = vpop.f32.mrf.mxu0
        %v706 = vpop.f32.mrf.mxu0
        %v707 = vadd.f32 %v419, %v706
        %v708 = vpop.f32.mrf.mxu0
        %709 = vmatprep.mubr.bf16.mxu0 0
        %710 = vmatmul.mubr.bf16.gmra.mxu0 %v392
        %v711 = vpop.f32.mrf.mxu0
        %v712 = vadd.f32 %v419, %v711
        %v713 = vpop.f32.mrf.mxu0
        %v714 = vpop.f32.mrf.mxu0
        %v715 = vadd.f32 %v419, %v714
        %v716 = vpop.f32.mrf.mxu0
        %717 = vmatprep.mubr.bf16.mxu0 0
        %718 = vmatmul.mubr.bf16.gmra.mxu0 %v393
        %v719 = vpop.f32.mrf.mxu0
        %v720 = vadd.f32 %v419, %v719
        %v721 = vpop.f32.mrf.mxu0
        %v722 = vpop.f32.mrf.mxu0
        %v723 = vadd.f32 %v419, %v722
        %v724 = vpop.f32.mrf.mxu0
        %725 = vmatprep.mubr.bf16.mxu0 0
        %726 = vmatmul.mubr.bf16.gmra.mxu0 %v394
        %v727 = vpop.f32.mrf.mxu0
        %v728 = vadd.f32 %v419, %v727
        %v729 = vpop.f32.mrf.mxu0
        %v730 = vpop.f32.mrf.mxu0
        %v731 = vadd.f32 %v419, %v730
        %v732 = vpop.f32.mrf.mxu0
        %733 = vmatprep.mubr.bf16.mxu0 0
        %734 = vmatmul.mubr.bf16.gmra.mxu0 %v395
        %v735 = vpop.f32.mrf.mxu0
        %v736 = vadd.f32 %v419, %v735
        %v737 = vpop.f32.mrf.mxu0
        %v738 = vpop.f32.mrf.mxu0
        %v739 = vadd.f32 %v419, %v738
        %v740 = vpop.f32.mrf.mxu0
        %741 = vmatprep.mubr.bf16.mxu0 0
        %742 = vmatmul.mubr.bf16.gmra.mxu0 %v396
        %v743 = vpop.f32.mrf.mxu0
        %v744 = vadd.f32 %v419, %v743
        %v745 = vpop.f32.mrf.mxu0
        %v746 = vpop.f32.mrf.mxu0
        %v747 = vadd.f32 %v419, %v746
        %v748 = vpop.f32.mrf.mxu0
        %749 = vmatprep.mubr.bf16.mxu0 0
        %750 = vmatmul.mubr.bf16.gmra.mxu0 %v397
        %v751 = vpop.f32.mrf.mxu0
        %v752 = vadd.f32 %v419, %v751
        %v753 = vpop.f32.mrf.mxu0
        %v754 = vpop.f32.mrf.mxu0
        %v755 = vadd.f32 %v419, %v754
        %v756 = vpop.f32.mrf.mxu0
        %757 = vdwg.mxu0
        %v758 = vpack.c.bf16 %v507, %v504
        %v759 = vpack.c.bf16 %v515, %v512
        %v760 = vpack.c.bf16 %v523, %v520
        %v761 = vpack.c.bf16 %v531, %v528
        %v762 = vpack.c.bf16 %v539, %v536
        %v763 = vpack.c.bf16 %v547, %v544
        %v764 = vpack.c.bf16 %v555, %v552
        %v765 = vpack.c.bf16 %v563, %v560
        %v766 = vpack.c.bf16 %v571, %v568
        %v767 = vpack.c.bf16 %v579, %v576
        %v768 = vpack.c.bf16 %v587, %v584
        %v769 = vpack.c.bf16 %v595, %v592
        %v770 = vpack.c.bf16 %v603, %v600
        %v771 = vpack.c.bf16 %v611, %v608
        %v772 = vpack.c.bf16 %v619, %v616
        %v773 = vpack.c.bf16 %v627, %v624
        %v774 = vpack.c.bf16 %v635, %v632
        %v775 = vpack.c.bf16 %v643, %v640
        %v776 = vpack.c.bf16 %v651, %v648
        %v777 = vpack.c.bf16 %v659, %v656
        %v778 = vpack.c.bf16 %v667, %v664
        %v779 = vpack.c.bf16 %v675, %v672
        %v780 = vpack.c.bf16 %v683, %v680
        %v781 = vpack.c.bf16 %v691, %v688
        %v782 = vpack.c.bf16 %v699, %v696
        %v783 = vpack.c.bf16 %v707, %v704
        %v784 = vpack.c.bf16 %v715, %v712
        %v785 = vpack.c.bf16 %v723, %v720
        %v786 = vpack.c.bf16 %v731, %v728
        %v787 = vpack.c.bf16 %v739, %v736
        %v788 = vpack.c.bf16 %v747, %v744
        %v789 = vpack.c.bf16 %v755, %v752
        %v790 = vld [vmem:[%s4] sm:$0xf]
        %v791 = vld [vmem:[%s4 + $0x4] sm:$0xf]
        %v792 = vld [vmem:[%s4 + $0x8] sm:$0xf]
        %v793 = vld [vmem:[%s4 + $0xc] sm:$0xf]
        %v794 = vld [vmem:[%s4 + $0x10] sm:$0xf]
        %v795 = vld [vmem:[%s4 + $0x14] sm:$0xf]
        %v796 = vld [vmem:[%s4 + $0x18] sm:$0xf]
        %v797 = vld [vmem:[%s4 + $0x1c] sm:$0xf]
        %v798 = vld [vmem:[%s4 + $0x20] sm:$0xf]
        %v799 = vld [vmem:[%s4 + $0x24] sm:$0xf]
        %v800 = vld [vmem:[%s4 + $0x28] sm:$0xf]
        %v801 = vld [vmem:[%s4 + $0x2c] sm:$0xf]
        %v802 = vld [vmem:[%s4 + $0x30] sm:$0xf]
        %v803 = vld [vmem:[%s4 + $0x34] sm:$0xf]
        %v804 = vld [vmem:[%s4 + $0x38] sm:$0xf]
        %v805 = vld [vmem:[%s4 + $0x3c] sm:$0xf]
        %v822 = vunpack.c.l.b16 %v790
        %v823 = vunpack.c.l.b16 %v791
        %v824 = vunpack.c.l.b16 %v792
        %v825 = vunpack.c.l.b16 %v793
        %v826 = vunpack.c.l.b16 %v794
        %v827 = vunpack.c.l.b16 %v795
        %v828 = vunpack.c.l.b16 %v796
        %v829 = vunpack.c.l.b16 %v797
        %v830 = vunpack.c.l.b16 %v798
        %v831 = vunpack.c.l.b16 %v799
        %v832 = vunpack.c.l.b16 %v800
        %v833 = vunpack.c.l.b16 %v801
        %v834 = vunpack.c.l.b16 %v802
        %v835 = vunpack.c.l.b16 %v803
        %v836 = vunpack.c.l.b16 %v804
        %v837 = vunpack.c.l.b16 %v805
        %v838 = vpack.c.b16 %v823, %v822
        %v839 = vpack.c.b16 %v825, %v824
        %v840 = vpack.c.b16 %v827, %v826
        %v841 = vpack.c.b16 %v829, %v828
        %v842 = vpack.c.b16 %v831, %v830
        %v843 = vpack.c.b16 %v833, %v832
        %v844 = vpack.c.b16 %v835, %v834
        %v845 = vpack.c.b16 %v837, %v836
        %854 = vmatprep.subr.bf16.mxu0 0
        %855 = vmatpush1.bf16.msra.mxu0 %v845
        %856 = vmatprep.subr.bf16.mxu0 0
        %857 = vmatpush1.bf16.msra.mxu0 %v844
        %858 = vmatprep.subr.bf16.mxu0 0
        %859 = vmatpush1.bf16.msra.mxu0 %v843
        %860 = vmatprep.subr.bf16.mxu0 0
        %861 = vmatpush1.bf16.msra.mxu0 %v842
        %862 = vmatprep.subr.bf16.mxu0 0
        %863 = vmatpush1.bf16.msra.mxu0 %v841
        %864 = vmatprep.subr.bf16.mxu0 0
        %865 = vmatpush1.bf16.msra.mxu0 %v840
        %866 = vmatprep.subr.bf16.mxu0 0
        %867 = vmatpush1.bf16.msra.mxu0 %v839
        %868 = vmatprep.subr.bf16.mxu0 0
        %869 = vmatpush1.bf16.msra.mxu0 %v838
        %870 = vmatprep.subr.bf16.mxu0 0
        %871 = vmatpush2.bf16.msra.mxu0 0
        %872 = vmatprep.subr.bf16.mxu0 0
        %873 = vmatpush2.bf16.msra.mxu0 0
        %874 = vmatprep.subr.bf16.mxu0 0
        %875 = vmatpush2.bf16.msra.mxu0 0
        %876 = vmatprep.subr.bf16.mxu0 0
        %877 = vmatpush2.bf16.msra.mxu0 0
        %878 = vmatprep.subr.bf16.mxu0 0
        %879 = vmatpush2.bf16.msra.mxu0 0
        %880 = vmatprep.subr.bf16.mxu0 0
        %881 = vmatpush2.bf16.msra.mxu0 0
        %882 = vmatprep.subr.bf16.mxu0 0
        %883 = vmatpush2.bf16.msra.mxu0 0
        %884 = vmatprep.subr.bf16.mxu0 0
        %885 = vmatpush2.bf16.msra.mxu0 0
        %886 = vmatprep.mubr.bf16.mxu0 0
        %887 = vmatmul.mubr.bf16.gmra.mxu0 %v758
        %v888 = vpop.f32.mrf.mxu0
        %v889 = vadd.f32 0.0, %v888
        %v890 = vpop.f32.mrf.mxu0
        %v891 = vpop.f32.mrf.mxu0
        %v892 = vadd.f32 0.0, %v891
        %v893 = vpop.f32.mrf.mxu0
        %894 = vmatprep.mubr.bf16.mxu0 0
        %895 = vmatmul.mubr.bf16.gmra.mxu0 %v759
        %v896 = vpop.f32.mrf.mxu0
        %v897 = vadd.f32 0.0, %v896
        %v898 = vpop.f32.mrf.mxu0
        %v899 = vpop.f32.mrf.mxu0
        %v900 = vadd.f32 0.0, %v899
        %v901 = vpop.f32.mrf.mxu0
        %902 = vmatprep.mubr.bf16.mxu0 0
        %903 = vmatmul.mubr.bf16.gmra.mxu0 %v760
        %v904 = vpop.f32.mrf.mxu0
        %v905 = vadd.f32 0.0, %v904
        %v906 = vpop.f32.mrf.mxu0
        %v907 = vpop.f32.mrf.mxu0
        %v908 = vadd.f32 0.0, %v907
        %v909 = vpop.f32.mrf.mxu0
        %910 = vmatprep.mubr.bf16.mxu0 0
        %911 = vmatmul.mubr.bf16.gmra.mxu0 %v761
        %v912 = vpop.f32.mrf.mxu0
        %v913 = vadd.f32 0.0, %v912
        %v914 = vpop.f32.mrf.mxu0
        %v915 = vpop.f32.mrf.mxu0
        %v916 = vadd.f32 0.0, %v915
        %v917 = vpop.f32.mrf.mxu0
        %918 = vmatprep.mubr.bf16.mxu0 0
        %919 = vmatmul.mubr.bf16.gmra.mxu0 %v762
        %v920 = vpop.f32.mrf.mxu0
        %v921 = vadd.f32 0.0, %v920
        %v922 = vpop.f32.mrf.mxu0
        %v923 = vpop.f32.mrf.mxu0
        %v924 = vadd.f32 0.0, %v923
        %v925 = vpop.f32.mrf.mxu0
        %926 = vmatprep.mubr.bf16.mxu0 0
        %927 = vmatmul.mubr.bf16.gmra.mxu0 %v763
        %v928 = vpop.f32.mrf.mxu0
        %v929 = vadd.f32 0.0, %v928
        %v930 = vpop.f32.mrf.mxu0
        %v931 = vpop.f32.mrf.mxu0
        %v932 = vadd.f32 0.0, %v931
        %v933 = vpop.f32.mrf.mxu0
        %934 = vmatprep.mubr.bf16.mxu0 0
        %935 = vmatmul.mubr.bf16.gmra.mxu0 %v764
        %v936 = vpop.f32.mrf.mxu0
        %v937 = vadd.f32 0.0, %v936
        %v938 = vpop.f32.mrf.mxu0
        %v939 = vpop.f32.mrf.mxu0
        %v940 = vadd.f32 0.0, %v939
        %v941 = vpop.f32.mrf.mxu0
        %942 = vmatprep.mubr.bf16.mxu0 0
        %943 = vmatmul.mubr.bf16.gmra.mxu0 %v765
        %v944 = vpop.f32.mrf.mxu0
        %v945 = vadd.f32 0.0, %v944
        %v946 = vpop.f32.mrf.mxu0
        %v947 = vpop.f32.mrf.mxu0
        %v948 = vadd.f32 0.0, %v947
        %v949 = vpop.f32.mrf.mxu0
        %950 = vmatprep.mubr.bf16.mxu0 0
        %951 = vmatmul.mubr.bf16.gmra.mxu0 %v766
        %v952 = vpop.f32.mrf.mxu0
        %v953 = vadd.f32 0.0, %v952
        %v954 = vpop.f32.mrf.mxu0
        %v955 = vpop.f32.mrf.mxu0
        %v956 = vadd.f32 0.0, %v955
        %v957 = vpop.f32.mrf.mxu0
        %958 = vmatprep.mubr.bf16.mxu0 0
        %959 = vmatmul.mubr.bf16.gmra.mxu0 %v767
        %v960 = vpop.f32.mrf.mxu0
        %v961 = vadd.f32 0.0, %v960
        %v962 = vpop.f32.mrf.mxu0
        %v963 = vpop.f32.mrf.mxu0
        %v964 = vadd.f32 0.0, %v963
        %v965 = vpop.f32.mrf.mxu0
        %966 = vmatprep.mubr.bf16.mxu0 0
        %967 = vmatmul.mubr.bf16.gmra.mxu0 %v768
        %v968 = vpop.f32.mrf.mxu0
        %v969 = vadd.f32 0.0, %v968
        %v970 = vpop.f32.mrf.mxu0
        %v971 = vpop.f32.mrf.mxu0
        %v972 = vadd.f32 0.0, %v971
        %v973 = vpop.f32.mrf.mxu0
        %974 = vmatprep.mubr.bf16.mxu0 0
        %975 = vmatmul.mubr.bf16.gmra.mxu0 %v769
        %v976 = vpop.f32.mrf.mxu0
        %v977 = vadd.f32 0.0, %v976
        %v978 = vpop.f32.mrf.mxu0
        %v979 = vpop.f32.mrf.mxu0
        %v980 = vadd.f32 0.0, %v979
        %v981 = vpop.f32.mrf.mxu0
        %982 = vmatprep.mubr.bf16.mxu0 0
        %983 = vmatmul.mubr.bf16.gmra.mxu0 %v770
        %v984 = vpop.f32.mrf.mxu0
        %v985 = vadd.f32 0.0, %v984
        %v986 = vpop.f32.mrf.mxu0
        %v987 = vpop.f32.mrf.mxu0
        %v988 = vadd.f32 0.0, %v987
        %v989 = vpop.f32.mrf.mxu0
        %990 = vmatprep.mubr.bf16.mxu0 0
        %991 = vmatmul.mubr.bf16.gmra.mxu0 %v771
        %v992 = vpop.f32.mrf.mxu0
        %v993 = vadd.f32 0.0, %v992
        %v994 = vpop.f32.mrf.mxu0
        %v995 = vpop.f32.mrf.mxu0
        %v996 = vadd.f32 0.0, %v995
        %v997 = vpop.f32.mrf.mxu0
        %998 = vmatprep.mubr.bf16.mxu0 0
        %999 = vmatmul.mubr.bf16.gmra.mxu0 %v772
        %v1000 = vpop.f32.mrf.mxu0
        %v1001 = vadd.f32 0.0, %v1000
        %v1002 = vpop.f32.mrf.mxu0
        %v1003 = vpop.f32.mrf.mxu0
        %v1004 = vadd.f32 0.0, %v1003
        %v1005 = vpop.f32.mrf.mxu0
        %1006 = vmatprep.mubr.bf16.mxu0 0
        %1007 = vmatmul.mubr.bf16.gmra.mxu0 %v773
        %v1008 = vpop.f32.mrf.mxu0
        %v1009 = vadd.f32 0.0, %v1008
        %v1010 = vpop.f32.mrf.mxu0
        %v1011 = vpop.f32.mrf.mxu0
        %v1012 = vadd.f32 0.0, %v1011
        %v1013 = vpop.f32.mrf.mxu0
        %1014 = vmatprep.mubr.bf16.mxu0 0
        %1015 = vmatmul.mubr.bf16.gmra.mxu0 %v774
        %v1016 = vpop.f32.mrf.mxu0
        %v1017 = vadd.f32 0.0, %v1016
        %v1018 = vpop.f32.mrf.mxu0
        %v1019 = vpop.f32.mrf.mxu0
        %v1020 = vadd.f32 0.0, %v1019
        %v1021 = vpop.f32.mrf.mxu0
        %1022 = vmatprep.mubr.bf16.mxu0 0
        %1023 = vmatmul.mubr.bf16.gmra.mxu0 %v775
        %v1024 = vpop.f32.mrf.mxu0
        %v1025 = vadd.f32 0.0, %v1024
        %v1026 = vpop.f32.mrf.mxu0
        %v1027 = vpop.f32.mrf.mxu0
        %v1028 = vadd.f32 0.0, %v1027
        %v1029 = vpop.f32.mrf.mxu0
        %1030 = vmatprep.mubr.bf16.mxu0 0
        %1031 = vmatmul.mubr.bf16.gmra.mxu0 %v776
        %v1032 = vpop.f32.mrf.mxu0
        %v1033 = vadd.f32 0.0, %v1032
        %v1034 = vpop.f32.mrf.mxu0
        %v1035 = vpop.f32.mrf.mxu0
        %v1036 = vadd.f32 0.0, %v1035
        %v1037 = vpop.f32.mrf.mxu0
        %1038 = vmatprep.mubr.bf16.mxu0 0
        %1039 = vmatmul.mubr.bf16.gmra.mxu0 %v777
        %v1040 = vpop.f32.mrf.mxu0
        %v1041 = vadd.f32 0.0, %v1040
        %v1042 = vpop.f32.mrf.mxu0
        %v1043 = vpop.f32.mrf.mxu0
        %v1044 = vadd.f32 0.0, %v1043
        %v1045 = vpop.f32.mrf.mxu0
        %1046 = vmatprep.mubr.bf16.mxu0 0
        %1047 = vmatmul.mubr.bf16.gmra.mxu0 %v778
        %v1048 = vpop.f32.mrf.mxu0
        %v1049 = vadd.f32 0.0, %v1048
        %v1050 = vpop.f32.mrf.mxu0
        %v1051 = vpop.f32.mrf.mxu0
        %v1052 = vadd.f32 0.0, %v1051
        %v1053 = vpop.f32.mrf.mxu0
        %1054 = vmatprep.mubr.bf16.mxu0 0
        %1055 = vmatmul.mubr.bf16.gmra.mxu0 %v779
        %v1056 = vpop.f32.mrf.mxu0
        %v1057 = vadd.f32 0.0, %v1056
        %v1058 = vpop.f32.mrf.mxu0
        %v1059 = vpop.f32.mrf.mxu0
        %v1060 = vadd.f32 0.0, %v1059
        %v1061 = vpop.f32.mrf.mxu0
        %1062 = vmatprep.mubr.bf16.mxu0 0
        %1063 = vmatmul.mubr.bf16.gmra.mxu0 %v780
        %v1064 = vpop.f32.mrf.mxu0
        %v1065 = vadd.f32 0.0, %v1064
        %v1066 = vpop.f32.mrf.mxu0
        %v1067 = vpop.f32.mrf.mxu0
        %v1068 = vadd.f32 0.0, %v1067
        %v1069 = vpop.f32.mrf.mxu0
        %1070 = vmatprep.mubr.bf16.mxu0 0
        %1071 = vmatmul.mubr.bf16.gmra.mxu0 %v781
        %v1072 = vpop.f32.mrf.mxu0
        %v1073 = vadd.f32 0.0, %v1072
        %v1074 = vpop.f32.mrf.mxu0
        %v1075 = vpop.f32.mrf.mxu0
        %v1076 = vadd.f32 0.0, %v1075
        %v1077 = vpop.f32.mrf.mxu0
        %1078 = vmatprep.mubr.bf16.mxu0 0
        %1079 = vmatmul.mubr.bf16.gmra.mxu0 %v782
        %v1080 = vpop.f32.mrf.mxu0
        %v1081 = vadd.f32 0.0, %v1080
        %v1082 = vpop.f32.mrf.mxu0
        %v1083 = vpop.f32.mrf.mxu0
        %v1084 = vadd.f32 0.0, %v1083
        %v1085 = vpop.f32.mrf.mxu0
        %1086 = vmatprep.mubr.bf16.mxu0 0
        %1087 = vmatmul.mubr.bf16.gmra.mxu0 %v783
        %v1088 = vpop.f32.mrf.mxu0
        %v1089 = vadd.f32 0.0, %v1088
        %v1090 = vpop.f32.mrf.mxu0
        %v1091 = vpop.f32.mrf.mxu0
        %v1092 = vadd.f32 0.0, %v1091
        %v1093 = vpop.f32.mrf.mxu0
        %1094 = vmatprep.mubr.bf16.mxu0 0
        %1095 = vmatmul.mubr.bf16.gmra.mxu0 %v784
        %v1096 = vpop.f32.mrf.mxu0
        %v1097 = vadd.f32 0.0, %v1096
        %v1098 = vpop.f32.mrf.mxu0
        %v1099 = vpop.f32.mrf.mxu0
        %v1100 = vadd.f32 0.0, %v1099
        %v1101 = vpop.f32.mrf.mxu0
        %1102 = vmatprep.mubr.bf16.mxu0 0
        %1103 = vmatmul.mubr.bf16.gmra.mxu0 %v785
        %v1104 = vpop.f32.mrf.mxu0
        %v1105 = vadd.f32 0.0, %v1104
        %v1106 = vpop.f32.mrf.mxu0
        %v1107 = vpop.f32.mrf.mxu0
        %v1108 = vadd.f32 0.0, %v1107
        %v1109 = vpop.f32.mrf.mxu0
        %1110 = vmatprep.mubr.bf16.mxu0 0
        %1111 = vmatmul.mubr.bf16.gmra.mxu0 %v786
        %v1112 = vpop.f32.mrf.mxu0
        %v1113 = vadd.f32 0.0, %v1112
        %v1114 = vpop.f32.mrf.mxu0
        %v1115 = vpop.f32.mrf.mxu0
        %v1116 = vadd.f32 0.0, %v1115
        %v1117 = vpop.f32.mrf.mxu0
        %1118 = vmatprep.mubr.bf16.mxu0 0
        %1119 = vmatmul.mubr.bf16.gmra.mxu0 %v787
        %v1120 = vpop.f32.mrf.mxu0
        %v1121 = vadd.f32 0.0, %v1120
        %v1122 = vpop.f32.mrf.mxu0
        %v1123 = vpop.f32.mrf.mxu0
        %v1124 = vadd.f32 0.0, %v1123
        %v1125 = vpop.f32.mrf.mxu0
        %1126 = vmatprep.mubr.bf16.mxu0 0
        %1127 = vmatmul.mubr.bf16.gmra.mxu0 %v788
        %v1128 = vpop.f32.mrf.mxu0
        %v1129 = vadd.f32 0.0, %v1128
        %v1130 = vpop.f32.mrf.mxu0
        %v1131 = vpop.f32.mrf.mxu0
        %v1132 = vadd.f32 0.0, %v1131
        %v1133 = vpop.f32.mrf.mxu0
        %1134 = vmatprep.mubr.bf16.mxu0 0
        %1135 = vmatmul.mubr.bf16.gmra.mxu0 %v789
        %v1136 = vpop.f32.mrf.mxu0
        %v1137 = vadd.f32 0.0, %v1136
        %v1138 = vpop.f32.mrf.mxu0
        %v1139 = vpop.f32.mrf.mxu0
        %v1140 = vadd.f32 0.0, %v1139
        %v1141 = vpop.f32.mrf.mxu0
        %1142 = vdwg.mxu0
        %v1143 = vpack.c.bf16 %v892, %v889
        %v1144 = vpack.c.bf16 %v900, %v897
        %v1145 = vpack.c.bf16 %v908, %v905
        %v1146 = vpack.c.bf16 %v916, %v913
        %v1147 = vpack.c.bf16 %v924, %v921
        %v1148 = vpack.c.bf16 %v932, %v929
        %v1149 = vpack.c.bf16 %v940, %v937
        %v1150 = vpack.c.bf16 %v948, %v945
        %v1151 = vpack.c.bf16 %v956, %v953
        %v1152 = vpack.c.bf16 %v964, %v961
        %v1153 = vpack.c.bf16 %v972, %v969
        %v1154 = vpack.c.bf16 %v980, %v977
        %v1155 = vpack.c.bf16 %v988, %v985
        %v1156 = vpack.c.bf16 %v996, %v993
        %v1157 = vpack.c.bf16 %v1004, %v1001
        %v1158 = vpack.c.bf16 %v1012, %v1009
        %v1159 = vpack.c.bf16 %v1020, %v1017
        %v1160 = vpack.c.bf16 %v1028, %v1025
        %v1161 = vpack.c.bf16 %v1036, %v1033
        %v1162 = vpack.c.bf16 %v1044, %v1041
        %v1163 = vpack.c.bf16 %v1052, %v1049
        %v1164 = vpack.c.bf16 %v1060, %v1057
        %v1165 = vpack.c.bf16 %v1068, %v1065
        %v1166 = vpack.c.bf16 %v1076, %v1073
        %v1167 = vpack.c.bf16 %v1084, %v1081
        %v1168 = vpack.c.bf16 %v1092, %v1089
        %v1169 = vpack.c.bf16 %v1100, %v1097
        %v1170 = vpack.c.bf16 %v1108, %v1105
        %v1171 = vpack.c.bf16 %v1116, %v1113
        %v1172 = vpack.c.bf16 %v1124, %v1121
        %v1173 = vpack.c.bf16 %v1132, %v1129
        %v1174 = vpack.c.bf16 %v1140, %v1137
        %v1207 = vunpack.c.l.b16 %v1143
        %v1208 = vunpack.c.h.b16 %v1143
        %v1209 = vunpack.c.l.b16 %v1144
        %v1210 = vunpack.c.h.b16 %v1144
        %v1211 = vunpack.c.l.b16 %v1145
        %v1212 = vunpack.c.h.b16 %v1145
        %v1213 = vunpack.c.l.b16 %v1146
        %v1214 = vunpack.c.h.b16 %v1146
        %v1215 = vunpack.c.l.b16 %v1147
        %v1216 = vunpack.c.h.b16 %v1147
        %v1217 = vunpack.c.l.b16 %v1148
        %v1218 = vunpack.c.h.b16 %v1148
        %v1219 = vunpack.c.l.b16 %v1149
        %v1220 = vunpack.c.h.b16 %v1149
        %v1221 = vunpack.c.l.b16 %v1150
        %v1222 = vunpack.c.h.b16 %v1150
        %v1223 = vunpack.c.l.b16 %v1151
        %v1224 = vunpack.c.h.b16 %v1151
        %v1225 = vunpack.c.l.b16 %v1152
        %v1226 = vunpack.c.h.b16 %v1152
        %v1227 = vunpack.c.l.b16 %v1153
        %v1228 = vunpack.c.h.b16 %v1153
        %v1229 = vunpack.c.l.b16 %v1154
        %v1230 = vunpack.c.h.b16 %v1154
        %v1231 = vunpack.c.l.b16 %v1155
        %v1232 = vunpack.c.h.b16 %v1155
        %v1233 = vunpack.c.l.b16 %v1156
        %v1234 = vunpack.c.h.b16 %v1156
        %v1235 = vunpack.c.l.b16 %v1157
        %v1236 = vunpack.c.h.b16 %v1157
        %v1237 = vunpack.c.l.b16 %v1158
        %v1238 = vunpack.c.h.b16 %v1158
        %v1239 = vunpack.c.l.b16 %v1159
        %v1240 = vunpack.c.h.b16 %v1159
        %v1241 = vunpack.c.l.b16 %v1160
        %v1242 = vunpack.c.h.b16 %v1160
        %v1243 = vunpack.c.l.b16 %v1161
        %v1244 = vunpack.c.h.b16 %v1161
        %v1245 = vunpack.c.l.b16 %v1162
        %v1246 = vunpack.c.h.b16 %v1162
        %v1247 = vunpack.c.l.b16 %v1163
        %v1248 = vunpack.c.h.b16 %v1163
        %v1249 = vunpack.c.l.b16 %v1164
        %v1250 = vunpack.c.h.b16 %v1164
        %v1251 = vunpack.c.l.b16 %v1165
        %v1252 = vunpack.c.h.b16 %v1165
        %v1253 = vunpack.c.l.b16 %v1166
        %v1254 = vunpack.c.h.b16 %v1166
        %v1255 = vunpack.c.l.b16 %v1167
        %v1256 = vunpack.c.h.b16 %v1167
        %v1257 = vunpack.c.l.b16 %v1168
        %v1258 = vunpack.c.h.b16 %v1168
        %v1259 = vunpack.c.l.b16 %v1169
        %v1260 = vunpack.c.h.b16 %v1169
        %v1261 = vunpack.c.l.b16 %v1170
        %v1262 = vunpack.c.h.b16 %v1170
        %v1263 = vunpack.c.l.b16 %v1171
        %v1264 = vunpack.c.h.b16 %v1171
        %v1265 = vunpack.c.l.b16 %v1172
        %v1266 = vunpack.c.h.b16 %v1172
        %v1267 = vunpack.c.l.b16 %v1173
        %v1268 = vunpack.c.h.b16 %v1173
        %v1269 = vunpack.c.l.b16 %v1174
        %v1270 = vunpack.c.h.b16 %v1174
        %v1271 = vpack.c.b16 %v1207, %v1207
        %v1272 = vpack.c.b16 %v1208, %v1208
        %v1273 = vpack.c.b16 %v1209, %v1209
        %v1274 = vpack.c.b16 %v1210, %v1210
        %v1275 = vpack.c.b16 %v1211, %v1211
        %v1276 = vpack.c.b16 %v1212, %v1212
        %v1277 = vpack.c.b16 %v1213, %v1213
        %v1278 = vpack.c.b16 %v1214, %v1214
        %v1279 = vpack.c.b16 %v1215, %v1215
        %v1280 = vpack.c.b16 %v1216, %v1216
        %v1281 = vpack.c.b16 %v1217, %v1217
        %v1282 = vpack.c.b16 %v1218, %v1218
        %v1283 = vpack.c.b16 %v1219, %v1219
        %v1284 = vpack.c.b16 %v1220, %v1220
        %v1285 = vpack.c.b16 %v1221, %v1221
        %v1286 = vpack.c.b16 %v1222, %v1222
        %v1287 = vpack.c.b16 %v1223, %v1223
        %v1288 = vpack.c.b16 %v1224, %v1224
        %v1289 = vpack.c.b16 %v1225, %v1225
        %v1290 = vpack.c.b16 %v1226, %v1226
        %v1291 = vpack.c.b16 %v1227, %v1227
        %v1292 = vpack.c.b16 %v1228, %v1228
        %v1293 = vpack.c.b16 %v1229, %v1229
        %v1294 = vpack.c.b16 %v1230, %v1230
        %v1295 = vpack.c.b16 %v1231, %v1231
        %v1296 = vpack.c.b16 %v1232, %v1232
        %v1297 = vpack.c.b16 %v1233, %v1233
        %v1298 = vpack.c.b16 %v1234, %v1234
        %v1299 = vpack.c.b16 %v1235, %v1235
        %v1300 = vpack.c.b16 %v1236, %v1236
        %v1301 = vpack.c.b16 %v1237, %v1237
        %v1302 = vpack.c.b16 %v1238, %v1238
        %v1303 = vpack.c.b16 %v1239, %v1239
        %v1304 = vpack.c.b16 %v1240, %v1240
        %v1305 = vpack.c.b16 %v1241, %v1241
        %v1306 = vpack.c.b16 %v1242, %v1242
        %v1307 = vpack.c.b16 %v1243, %v1243
        %v1308 = vpack.c.b16 %v1244, %v1244
        %v1309 = vpack.c.b16 %v1245, %v1245
        %v1310 = vpack.c.b16 %v1246, %v1246
        %v1311 = vpack.c.b16 %v1247, %v1247
        %v1312 = vpack.c.b16 %v1248, %v1248
        %v1313 = vpack.c.b16 %v1249, %v1249
        %v1314 = vpack.c.b16 %v1250, %v1250
        %v1315 = vpack.c.b16 %v1251, %v1251
        %v1316 = vpack.c.b16 %v1252, %v1252
        %v1317 = vpack.c.b16 %v1253, %v1253
        %v1318 = vpack.c.b16 %v1254, %v1254
        %v1319 = vpack.c.b16 %v1255, %v1255
        %v1320 = vpack.c.b16 %v1256, %v1256
        %v1321 = vpack.c.b16 %v1257, %v1257
        %v1322 = vpack.c.b16 %v1258, %v1258
        %v1323 = vpack.c.b16 %v1259, %v1259
        %v1324 = vpack.c.b16 %v1260, %v1260
        %v1325 = vpack.c.b16 %v1261, %v1261
        %v1326 = vpack.c.b16 %v1262, %v1262
        %v1327 = vpack.c.b16 %v1263, %v1263
        %v1328 = vpack.c.b16 %v1264, %v1264
        %v1329 = vpack.c.b16 %v1265, %v1265
        %v1330 = vpack.c.b16 %v1266, %v1266
        %v1331 = vpack.c.b16 %v1267, %v1267
        %v1332 = vpack.c.b16 %v1268, %v1268
        %v1333 = vpack.c.b16 %v1269, %v1269
        %v1334 = vpack.c.b16 %v1270, %v1270
        %1399 = vst [vmem:[%s293] sm:$0xf] %v1271
        %1400 = vst [vmem:[%s293 + $0x4] sm:$0xf] %v1272
        %1401 = vst [vmem:[%s293 + $0x8] sm:$0xf] %v1273
        %1402 = vst [vmem:[%s293 + $0xc] sm:$0xf] %v1274
        %1403 = vst [vmem:[%s293 + $0x10] sm:$0xf] %v1275
        %1404 = vst [vmem:[%s293 + $0x14] sm:$0xf] %v1276
        %1405 = vst [vmem:[%s293 + $0x18] sm:$0xf] %v1277
        %1406 = vst [vmem:[%s293 + $0x1c] sm:$0xf] %v1278
        %1407 = vst [vmem:[%s293 + $0x20] sm:$0xf] %v1279
        %1408 = vst [vmem:[%s293 + $0x24] sm:$0xf] %v1280
        %1409 = vst [vmem:[%s293 + $0x28] sm:$0xf] %v1281
        %1410 = vst [vmem:[%s293 + $0x2c] sm:$0xf] %v1282
        %1411 = vst [vmem:[%s293 + $0x30] sm:$0xf] %v1283
        %1412 = vst [vmem:[%s293 + $0x34] sm:$0xf] %v1284
        %1413 = vst [vmem:[%s293 + $0x38] sm:$0xf] %v1285
        %1414 = vst [vmem:[%s293 + $0x3c] sm:$0xf] %v1286
        %1415 = vst [vmem:[%s293 + $0x40] sm:$0xf] %v1287
        %1416 = vst [vmem:[%s293 + $0x44] sm:$0xf] %v1288
        %1417 = vst [vmem:[%s293 + $0x48] sm:$0xf] %v1289
        %1418 = vst [vmem:[%s293 + $0x4c] sm:$0xf] %v1290
        %1419 = vst [vmem:[%s293 + $0x50] sm:$0xf] %v1291
        %1420 = vst [vmem:[%s293 + $0x54] sm:$0xf] %v1292
        %1421 = vst [vmem:[%s293 + $0x58] sm:$0xf] %v1293
        %1422 = vst [vmem:[%s293 + $0x5c] sm:$0xf] %v1294
        %1423 = vst [vmem:[%s293 + $0x60] sm:$0xf] %v1295
        %1424 = vst [vmem:[%s293 + $0x64] sm:$0xf] %v1296
        %1425 = vst [vmem:[%s293 + $0x68] sm:$0xf] %v1297
        %1426 = vst [vmem:[%s293 + $0x6c] sm:$0xf] %v1298
        %1427 = vst [vmem:[%s293 + $0x70] sm:$0xf] %v1299
        %1428 = vst [vmem:[%s293 + $0x74] sm:$0xf] %v1300
        %1429 = vst [vmem:[%s293 + $0x78] sm:$0xf] %v1301
        %1430 = vst [vmem:[%s293 + $0x7c] sm:$0xf] %v1302
        %1431 = vst [vmem:[%s293 + $0x80] sm:$0xf] %v1303
        %1432 = vst [vmem:[%s293 + $0x84] sm:$0xf] %v1304
        %1433 = vst [vmem:[%s293 + $0x88] sm:$0xf] %v1305
        %1434 = vst [vmem:[%s293 + $0x8c] sm:$0xf] %v1306
        %1435 = vst [vmem:[%s293 + $0x90] sm:$0xf] %v1307
        %1436 = vst [vmem:[%s293 + $0x94] sm:$0xf] %v1308
        %1437 = vst [vmem:[%s293 + $0x98] sm:$0xf] %v1309
        %1438 = vst [vmem:[%s293 + $0x9c] sm:$0xf] %v1310
        %1439 = vst [vmem:[%s293 + $0xa0] sm:$0xf] %v1311
        %1440 = vst [vmem:[%s293 + $0xa4] sm:$0xf] %v1312
        %1441 = vst [vmem:[%s293 + $0xa8] sm:$0xf] %v1313
        %1442 = vst [vmem:[%s293 + $0xac] sm:$0xf] %v1314
        %1443 = vst [vmem:[%s293 + $0xb0] sm:$0xf] %v1315
        %1444 = vst [vmem:[%s293 + $0xb4] sm:$0xf] %v1316
        %1445 = vst [vmem:[%s293 + $0xb8] sm:$0xf] %v1317
        %1446 = vst [vmem:[%s293 + $0xbc] sm:$0xf] %v1318
        %1447 = vst [vmem:[%s293 + $0xc0] sm:$0xf] %v1319
        %1448 = vst [vmem:[%s293 + $0xc4] sm:$0xf] %v1320
        %1449 = vst [vmem:[%s293 + $0xc8] sm:$0xf] %v1321
        %1450 = vst [vmem:[%s293 + $0xcc] sm:$0xf] %v1322
        %1451 = vst [vmem:[%s293 + $0xd0] sm:$0xf] %v1323
        %1452 = vst [vmem:[%s293 + $0xd4] sm:$0xf] %v1324
        %1453 = vst [vmem:[%s293 + $0xd8] sm:$0xf] %v1325
        %1454 = vst [vmem:[%s293 + $0xdc] sm:$0xf] %v1326
        %1455 = vst [vmem:[%s293 + $0xe0] sm:$0xf] %v1327
        %1456 = vst [vmem:[%s293 + $0xe4] sm:$0xf] %v1328
        %1457 = vst [vmem:[%s293 + $0xe8] sm:$0xf] %v1329
        %1458 = vst [vmem:[%s293 + $0xec] sm:$0xf] %v1330
        %1459 = vst [vmem:[%s293 + $0xf0] sm:$0xf] %v1331
        %1460 = vst [vmem:[%s293 + $0xf4] sm:$0xf] %v1332
        %1461 = vst [vmem:[%s293 + $0xf8] sm:$0xf] %v1333
        %1462 = vst [vmem:[%s293 + $0xfc] sm:$0xf] %v1334
        %v1463 = vld [vmem:[%s3] sm:$0xf]
        %v1464 = vld [vmem:[%s3 + $0x4] sm:$0xf]
        %v1465 = vld [vmem:[%s3 + $0x8] sm:$0xf]
        %v1466 = vld [vmem:[%s3 + $0xc] sm:$0xf]
        %v1467 = vld [vmem:[%s3 + $0x10] sm:$0xf]
        %v1468 = vld [vmem:[%s3 + $0x14] sm:$0xf]
        %v1469 = vld [vmem:[%s3 + $0x18] sm:$0xf]
        %v1470 = vld [vmem:[%s3 + $0x1c] sm:$0xf]
        %v1471 = vld [vmem:[%s3 + $0x20] sm:$0xf]
        %v1472 = vld [vmem:[%s3 + $0x24] sm:$0xf]
        %v1473 = vld [vmem:[%s3 + $0x28] sm:$0xf]
        %v1474 = vld [vmem:[%s3 + $0x2c] sm:$0xf]
        %v1475 = vld [vmem:[%s3 + $0x30] sm:$0xf]
        %v1476 = vld [vmem:[%s3 + $0x34] sm:$0xf]
        %v1477 = vld [vmem:[%s3 + $0x38] sm:$0xf]
        %v1478 = vld [vmem:[%s3 + $0x3c] sm:$0xf]
        %v1495 = vunpack.c.l.b16 %v1463
        %v1496 = vunpack.c.l.b16 %v1464
        %v1497 = vunpack.c.l.b16 %v1465
        %v1498 = vunpack.c.l.b16 %v1466
        %v1499 = vunpack.c.l.b16 %v1467
        %v1500 = vunpack.c.l.b16 %v1468
        %v1501 = vunpack.c.l.b16 %v1469
        %v1502 = vunpack.c.l.b16 %v1470
        %v1503 = vunpack.c.l.b16 %v1471
        %v1504 = vunpack.c.l.b16 %v1472
        %v1505 = vunpack.c.l.b16 %v1473
        %v1506 = vunpack.c.l.b16 %v1474
        %v1507 = vunpack.c.l.b16 %v1475
        %v1508 = vunpack.c.l.b16 %v1476
        %v1509 = vunpack.c.l.b16 %v1477
        %v1510 = vunpack.c.l.b16 %v1478
        %v1511 = vpack.c.b16 %v1496, %v1495
        %v1512 = vpack.c.b16 %v1498, %v1497
        %v1513 = vpack.c.b16 %v1500, %v1499
        %v1514 = vpack.c.b16 %v1502, %v1501
        %v1515 = vpack.c.b16 %v1504, %v1503
        %v1516 = vpack.c.b16 %v1506, %v1505
        %v1517 = vpack.c.b16 %v1508, %v1507
        %v1518 = vpack.c.b16 %v1510, %v1509
        %1527 = vmatprep.subr.bf16.mxu0 0
        %1528 = vmatpush1.bf16.msra.mxu0 %v1518
        %1529 = vmatprep.subr.bf16.mxu0 0
        %1530 = vmatpush1.bf16.msra.mxu0 %v1517
        %1531 = vmatprep.subr.bf16.mxu0 0
        %1532 = vmatpush1.bf16.msra.mxu0 %v1516
        %1533 = vmatprep.subr.bf16.mxu0 0
        %1534 = vmatpush1.bf16.msra.mxu0 %v1515
        %1535 = vmatprep.subr.bf16.mxu0 0
        %1536 = vmatpush1.bf16.msra.mxu0 %v1514
        %1537 = vmatprep.subr.bf16.mxu0 0
        %1538 = vmatpush1.bf16.msra.mxu0 %v1513
        %1539 = vmatprep.subr.bf16.mxu0 0
        %1540 = vmatpush1.bf16.msra.mxu0 %v1512
        %1541 = vmatprep.subr.bf16.mxu0 0
        %1542 = vmatpush1.bf16.msra.mxu0 %v1511
        %1543 = vmatprep.subr.bf16.mxu0 0
        %1544 = vmatpush2.bf16.msra.mxu0 0
        %1545 = vmatprep.subr.bf16.mxu0 0
        %1546 = vmatpush2.bf16.msra.mxu0 0
        %1547 = vmatprep.subr.bf16.mxu0 0
        %1548 = vmatpush2.bf16.msra.mxu0 0
        %1549 = vmatprep.subr.bf16.mxu0 0
        %1550 = vmatpush2.bf16.msra.mxu0 0
        %1551 = vmatprep.subr.bf16.mxu0 0
        %1552 = vmatpush2.bf16.msra.mxu0 0
        %1553 = vmatprep.subr.bf16.mxu0 0
        %1554 = vmatpush2.bf16.msra.mxu0 0
        %1555 = vmatprep.subr.bf16.mxu0 0
        %1556 = vmatpush2.bf16.msra.mxu0 0
        %1557 = vmatprep.subr.bf16.mxu0 0
        %1558 = vmatpush2.bf16.msra.mxu0 0
        %1559 = vmatprep.mubr.bf16.mxu0 0
        %1560 = vmatmul.mubr.bf16.gmra.mxu0 %v758
        %v1561 = vpop.f32.mrf.mxu0
        %v1562 = vadd.f32 0.0, %v1561
        %v1563 = vpop.f32.mrf.mxu0
        %v1564 = vpop.f32.mrf.mxu0
        %v1565 = vadd.f32 0.0, %v1564
        %v1566 = vpop.f32.mrf.mxu0
        %1567 = vmatprep.mubr.bf16.mxu0 0
        %1568 = vmatmul.mubr.bf16.gmra.mxu0 %v759
        %v1569 = vpop.f32.mrf.mxu0
        %v1570 = vadd.f32 0.0, %v1569
        %v1571 = vpop.f32.mrf.mxu0
        %v1572 = vpop.f32.mrf.mxu0
        %v1573 = vadd.f32 0.0, %v1572
        %v1574 = vpop.f32.mrf.mxu0
        %1575 = vmatprep.mubr.bf16.mxu0 0
        %1576 = vmatmul.mubr.bf16.gmra.mxu0 %v760
        %v1577 = vpop.f32.mrf.mxu0
        %v1578 = vadd.f32 0.0, %v1577
        %v1579 = vpop.f32.mrf.mxu0
        %v1580 = vpop.f32.mrf.mxu0
        %v1581 = vadd.f32 0.0, %v1580
        %v1582 = vpop.f32.mrf.mxu0
        %1583 = vmatprep.mubr.bf16.mxu0 0
        %1584 = vmatmul.mubr.bf16.gmra.mxu0 %v761
        %v1585 = vpop.f32.mrf.mxu0
        %v1586 = vadd.f32 0.0, %v1585
        %v1587 = vpop.f32.mrf.mxu0
        %v1588 = vpop.f32.mrf.mxu0
        %v1589 = vadd.f32 0.0, %v1588
        %v1590 = vpop.f32.mrf.mxu0
        %1591 = vmatprep.mubr.bf16.mxu0 0
        %1592 = vmatmul.mubr.bf16.gmra.mxu0 %v762
        %v1593 = vpop.f32.mrf.mxu0
        %v1594 = vadd.f32 0.0, %v1593
        %v1595 = vpop.f32.mrf.mxu0
        %v1596 = vpop.f32.mrf.mxu0
        %v1597 = vadd.f32 0.0, %v1596
        %v1598 = vpop.f32.mrf.mxu0
        %1599 = vmatprep.mubr.bf16.mxu0 0
        %1600 = vmatmul.mubr.bf16.gmra.mxu0 %v763
        %v1601 = vpop.f32.mrf.mxu0
        %v1602 = vadd.f32 0.0, %v1601
        %v1603 = vpop.f32.mrf.mxu0
        %v1604 = vpop.f32.mrf.mxu0
        %v1605 = vadd.f32 0.0, %v1604
        %v1606 = vpop.f32.mrf.mxu0
        %1607 = vmatprep.mubr.bf16.mxu0 0
        %1608 = vmatmul.mubr.bf16.gmra.mxu0 %v764
        %v1609 = vpop.f32.mrf.mxu0
        %v1610 = vadd.f32 0.0, %v1609
        %v1611 = vpop.f32.mrf.mxu0
        %v1612 = vpop.f32.mrf.mxu0
        %v1613 = vadd.f32 0.0, %v1612
        %v1614 = vpop.f32.mrf.mxu0
        %1615 = vmatprep.mubr.bf16.mxu0 0
        %1616 = vmatmul.mubr.bf16.gmra.mxu0 %v765
        %v1617 = vpop.f32.mrf.mxu0
        %v1618 = vadd.f32 0.0, %v1617
        %v1619 = vpop.f32.mrf.mxu0
        %v1620 = vpop.f32.mrf.mxu0
        %v1621 = vadd.f32 0.0, %v1620
        %v1622 = vpop.f32.mrf.mxu0
        %1623 = vmatprep.mubr.bf16.mxu0 0
        %1624 = vmatmul.mubr.bf16.gmra.mxu0 %v766
        %v1625 = vpop.f32.mrf.mxu0
        %v1626 = vadd.f32 0.0, %v1625
        %v1627 = vpop.f32.mrf.mxu0
        %v1628 = vpop.f32.mrf.mxu0
        %v1629 = vadd.f32 0.0, %v1628
        %v1630 = vpop.f32.mrf.mxu0
        %1631 = vmatprep.mubr.bf16.mxu0 0
        %1632 = vmatmul.mubr.bf16.gmra.mxu0 %v767
        %v1633 = vpop.f32.mrf.mxu0
        %v1634 = vadd.f32 0.0, %v1633
        %v1635 = vpop.f32.mrf.mxu0
        %v1636 = vpop.f32.mrf.mxu0
        %v1637 = vadd.f32 0.0, %v1636
        %v1638 = vpop.f32.mrf.mxu0
        %1639 = vmatprep.mubr.bf16.mxu0 0
        %1640 = vmatmul.mubr.bf16.gmra.mxu0 %v768
        %v1641 = vpop.f32.mrf.mxu0
        %v1642 = vadd.f32 0.0, %v1641
        %v1643 = vpop.f32.mrf.mxu0
        %v1644 = vpop.f32.mrf.mxu0
        %v1645 = vadd.f32 0.0, %v1644
        %v1646 = vpop.f32.mrf.mxu0
        %1647 = vmatprep.mubr.bf16.mxu0 0
        %1648 = vmatmul.mubr.bf16.gmra.mxu0 %v769
        %v1649 = vpop.f32.mrf.mxu0
        %v1650 = vadd.f32 0.0, %v1649
        %v1651 = vpop.f32.mrf.mxu0
        %v1652 = vpop.f32.mrf.mxu0
        %v1653 = vadd.f32 0.0, %v1652
        %v1654 = vpop.f32.mrf.mxu0
        %1655 = vmatprep.mubr.bf16.mxu0 0
        %1656 = vmatmul.mubr.bf16.gmra.mxu0 %v770
        %v1657 = vpop.f32.mrf.mxu0
        %v1658 = vadd.f32 0.0, %v1657
        %v1659 = vpop.f32.mrf.mxu0
        %v1660 = vpop.f32.mrf.mxu0
        %v1661 = vadd.f32 0.0, %v1660
        %v1662 = vpop.f32.mrf.mxu0
        %1663 = vmatprep.mubr.bf16.mxu0 0
        %1664 = vmatmul.mubr.bf16.gmra.mxu0 %v771
        %v1665 = vpop.f32.mrf.mxu0
        %v1666 = vadd.f32 0.0, %v1665
        %v1667 = vpop.f32.mrf.mxu0
        %v1668 = vpop.f32.mrf.mxu0
        %v1669 = vadd.f32 0.0, %v1668
        %v1670 = vpop.f32.mrf.mxu0
        %1671 = vmatprep.mubr.bf16.mxu0 0
        %1672 = vmatmul.mubr.bf16.gmra.mxu0 %v772
        %v1673 = vpop.f32.mrf.mxu0
        %v1674 = vadd.f32 0.0, %v1673
        %v1675 = vpop.f32.mrf.mxu0
        %v1676 = vpop.f32.mrf.mxu0
        %v1677 = vadd.f32 0.0, %v1676
        %v1678 = vpop.f32.mrf.mxu0
        %1679 = vmatprep.mubr.bf16.mxu0 0
        %1680 = vmatmul.mubr.bf16.gmra.mxu0 %v773
        %v1681 = vpop.f32.mrf.mxu0
        %v1682 = vadd.f32 0.0, %v1681
        %v1683 = vpop.f32.mrf.mxu0
        %v1684 = vpop.f32.mrf.mxu0
        %v1685 = vadd.f32 0.0, %v1684
        %v1686 = vpop.f32.mrf.mxu0
        %1687 = vmatprep.mubr.bf16.mxu0 0
        %1688 = vmatmul.mubr.bf16.gmra.mxu0 %v774
        %v1689 = vpop.f32.mrf.mxu0
        %v1690 = vadd.f32 0.0, %v1689
        %v1691 = vpop.f32.mrf.mxu0
        %v1692 = vpop.f32.mrf.mxu0
        %v1693 = vadd.f32 0.0, %v1692
        %v1694 = vpop.f32.mrf.mxu0
        %1695 = vmatprep.mubr.bf16.mxu0 0
        %1696 = vmatmul.mubr.bf16.gmra.mxu0 %v775
        %v1697 = vpop.f32.mrf.mxu0
        %v1698 = vadd.f32 0.0, %v1697
        %v1699 = vpop.f32.mrf.mxu0
        %v1700 = vpop.f32.mrf.mxu0
        %v1701 = vadd.f32 0.0, %v1700
        %v1702 = vpop.f32.mrf.mxu0
        %1703 = vmatprep.mubr.bf16.mxu0 0
        %1704 = vmatmul.mubr.bf16.gmra.mxu0 %v776
        %v1705 = vpop.f32.mrf.mxu0
        %v1706 = vadd.f32 0.0, %v1705
        %v1707 = vpop.f32.mrf.mxu0
        %v1708 = vpop.f32.mrf.mxu0
        %v1709 = vadd.f32 0.0, %v1708
        %v1710 = vpop.f32.mrf.mxu0
        %1711 = vmatprep.mubr.bf16.mxu0 0
        %1712 = vmatmul.mubr.bf16.gmra.mxu0 %v777
        %v1713 = vpop.f32.mrf.mxu0
        %v1714 = vadd.f32 0.0, %v1713
        %v1715 = vpop.f32.mrf.mxu0
        %v1716 = vpop.f32.mrf.mxu0
        %v1717 = vadd.f32 0.0, %v1716
        %v1718 = vpop.f32.mrf.mxu0
        %1719 = vmatprep.mubr.bf16.mxu0 0
        %1720 = vmatmul.mubr.bf16.gmra.mxu0 %v778
        %v1721 = vpop.f32.mrf.mxu0
        %v1722 = vadd.f32 0.0, %v1721
        %v1723 = vpop.f32.mrf.mxu0
        %v1724 = vpop.f32.mrf.mxu0
        %v1725 = vadd.f32 0.0, %v1724
        %v1726 = vpop.f32.mrf.mxu0
        %1727 = vmatprep.mubr.bf16.mxu0 0
        %1728 = vmatmul.mubr.bf16.gmra.mxu0 %v779
        %v1729 = vpop.f32.mrf.mxu0
        %v1730 = vadd.f32 0.0, %v1729
        %v1731 = vpop.f32.mrf.mxu0
        %v1732 = vpop.f32.mrf.mxu0
        %v1733 = vadd.f32 0.0, %v1732
        %v1734 = vpop.f32.mrf.mxu0
        %1735 = vmatprep.mubr.bf16.mxu0 0
        %1736 = vmatmul.mubr.bf16.gmra.mxu0 %v780
        %v1737 = vpop.f32.mrf.mxu0
        %v1738 = vadd.f32 0.0, %v1737
        %v1739 = vpop.f32.mrf.mxu0
        %v1740 = vpop.f32.mrf.mxu0
        %v1741 = vadd.f32 0.0, %v1740
        %v1742 = vpop.f32.mrf.mxu0
        %1743 = vmatprep.mubr.bf16.mxu0 0
        %1744 = vmatmul.mubr.bf16.gmra.mxu0 %v781
        %v1745 = vpop.f32.mrf.mxu0
        %v1746 = vadd.f32 0.0, %v1745
        %v1747 = vpop.f32.mrf.mxu0
        %v1748 = vpop.f32.mrf.mxu0
        %v1749 = vadd.f32 0.0, %v1748
        %v1750 = vpop.f32.mrf.mxu0
        %1751 = vmatprep.mubr.bf16.mxu0 0
        %1752 = vmatmul.mubr.bf16.gmra.mxu0 %v782
        %v1753 = vpop.f32.mrf.mxu0
        %v1754 = vadd.f32 0.0, %v1753
        %v1755 = vpop.f32.mrf.mxu0
        %v1756 = vpop.f32.mrf.mxu0
        %v1757 = vadd.f32 0.0, %v1756
        %v1758 = vpop.f32.mrf.mxu0
        %1759 = vmatprep.mubr.bf16.mxu0 0
        %1760 = vmatmul.mubr.bf16.gmra.mxu0 %v783
        %v1761 = vpop.f32.mrf.mxu0
        %v1762 = vadd.f32 0.0, %v1761
        %v1763 = vpop.f32.mrf.mxu0
        %v1764 = vpop.f32.mrf.mxu0
        %v1765 = vadd.f32 0.0, %v1764
        %v1766 = vpop.f32.mrf.mxu0
        %1767 = vmatprep.mubr.bf16.mxu0 0
        %1768 = vmatmul.mubr.bf16.gmra.mxu0 %v784
        %v1769 = vpop.f32.mrf.mxu0
        %v1770 = vadd.f32 0.0, %v1769
        %v1771 = vpop.f32.mrf.mxu0
        %v1772 = vpop.f32.mrf.mxu0
        %v1773 = vadd.f32 0.0, %v1772
        %v1774 = vpop.f32.mrf.mxu0
        %1775 = vmatprep.mubr.bf16.mxu0 0
        %1776 = vmatmul.mubr.bf16.gmra.mxu0 %v785
        %v1777 = vpop.f32.mrf.mxu0
        %v1778 = vadd.f32 0.0, %v1777
        %v1779 = vpop.f32.mrf.mxu0
        %v1780 = vpop.f32.mrf.mxu0
        %v1781 = vadd.f32 0.0, %v1780
        %v1782 = vpop.f32.mrf.mxu0
        %1783 = vmatprep.mubr.bf16.mxu0 0
        %1784 = vmatmul.mubr.bf16.gmra.mxu0 %v786
        %v1785 = vpop.f32.mrf.mxu0
        %v1786 = vadd.f32 0.0, %v1785
        %v1787 = vpop.f32.mrf.mxu0
        %v1788 = vpop.f32.mrf.mxu0
        %v1789 = vadd.f32 0.0, %v1788
        %v1790 = vpop.f32.mrf.mxu0
        %1791 = vmatprep.mubr.bf16.mxu0 0
        %1792 = vmatmul.mubr.bf16.gmra.mxu0 %v787
        %v1793 = vpop.f32.mrf.mxu0
        %v1794 = vadd.f32 0.0, %v1793
        %v1795 = vpop.f32.mrf.mxu0
        %v1796 = vpop.f32.mrf.mxu0
        %v1797 = vadd.f32 0.0, %v1796
        %v1798 = vpop.f32.mrf.mxu0
        %1799 = vmatprep.mubr.bf16.mxu0 0
        %1800 = vmatmul.mubr.bf16.gmra.mxu0 %v788
        %v1801 = vpop.f32.mrf.mxu0
        %v1802 = vadd.f32 0.0, %v1801
        %v1803 = vpop.f32.mrf.mxu0
        %v1804 = vpop.f32.mrf.mxu0
        %v1805 = vadd.f32 0.0, %v1804
        %v1806 = vpop.f32.mrf.mxu0
        %1807 = vmatprep.mubr.bf16.mxu0 0
        %1808 = vmatmul.mubr.bf16.gmra.mxu0 %v789
        %v1809 = vpop.f32.mrf.mxu0
        %v1810 = vadd.f32 0.0, %v1809
        %v1811 = vpop.f32.mrf.mxu0
        %v1812 = vpop.f32.mrf.mxu0
        %v1813 = vadd.f32 0.0, %v1812
        %v1814 = vpop.f32.mrf.mxu0
        %1815 = vdwg.mxu0
        %1816 = vst [vmem:[%s299] sm:$0xff] %v1562
        %1817 = vst [vmem:[%s299 + $0x8] sm:$0xff] %v1565
        %1818 = vst [vmem:[%s299 + $0x10] sm:$0xff] %v1570
        %1819 = vst [vmem:[%s299 + $0x18] sm:$0xff] %v1573
        %1820 = vst [vmem:[%s299 + $0x20] sm:$0xff] %v1578
        %1821 = vst [vmem:[%s299 + $0x28] sm:$0xff] %v1581
        %1822 = vst [vmem:[%s299 + $0x30] sm:$0xff] %v1586
        %1823 = vst [vmem:[%s299 + $0x38] sm:$0xff] %v1589
        %1824 = vst [vmem:[%s299 + $0x40] sm:$0xff] %v1594
        %1825 = vst [vmem:[%s299 + $0x48] sm:$0xff] %v1597
        %1826 = vst [vmem:[%s299 + $0x50] sm:$0xff] %v1602
        %1827 = vst [vmem:[%s299 + $0x58] sm:$0xff] %v1605
        %1828 = vst [vmem:[%s299 + $0x60] sm:$0xff] %v1610
        %1829 = vst [vmem:[%s299 + $0x68] sm:$0xff] %v1613
        %1830 = vst [vmem:[%s299 + $0x70] sm:$0xff] %v1618
        %1831 = vst [vmem:[%s299 + $0x78] sm:$0xff] %v1621
        %1832 = vst [vmem:[%s299 + $0x80] sm:$0xff] %v1626
        %1833 = vst [vmem:[%s299 + $0x88] sm:$0xff] %v1629
        %1834 = vst [vmem:[%s299 + $0x90] sm:$0xff] %v1634
        %1835 = vst [vmem:[%s299 + $0x98] sm:$0xff] %v1637
        %1836 = vst [vmem:[%s299 + $0xa0] sm:$0xff] %v1642
        %1837 = vst [vmem:[%s299 + $0xa8] sm:$0xff] %v1645
        %1838 = vst [vmem:[%s299 + $0xb0] sm:$0xff] %v1650
        %1839 = vst [vmem:[%s299 + $0xb8] sm:$0xff] %v1653
        %1840 = vst [vmem:[%s299 + $0xc0] sm:$0xff] %v1658
        %1841 = vst [vmem:[%s299 + $0xc8] sm:$0xff] %v1661
        %1842 = vst [vmem:[%s299 + $0xd0] sm:$0xff] %v1666
        %1843 = vst [vmem:[%s299 + $0xd8] sm:$0xff] %v1669
        %1844 = vst [vmem:[%s299 + $0xe0] sm:$0xff] %v1674
        %1845 = vst [vmem:[%s299 + $0xe8] sm:$0xff] %v1677
        %1846 = vst [vmem:[%s299 + $0xf0] sm:$0xff] %v1682
        %1847 = vst [vmem:[%s299 + $0xf8] sm:$0xff] %v1685
        %1848 = vst [vmem:[%s299 + $0x100] sm:$0xff] %v1690
        %1849 = vst [vmem:[%s299 + $0x108] sm:$0xff] %v1693
        %1850 = vst [vmem:[%s299 + $0x110] sm:$0xff] %v1698
        %1851 = vst [vmem:[%s299 + $0x118] sm:$0xff] %v1701
        %1852 = vst [vmem:[%s299 + $0x120] sm:$0xff] %v1706
        %1853 = vst [vmem:[%s299 + $0x128] sm:$0xff] %v1709
        %1854 = vst [vmem:[%s299 + $0x130] sm:$0xff] %v1714
        %1855 = vst [vmem:[%s299 + $0x138] sm:$0xff] %v1717
        %1856 = vst [vmem:[%s299 + $0x140] sm:$0xff] %v1722
        %1857 = vst [vmem:[%s299 + $0x148] sm:$0xff] %v1725
        %1858 = vst [vmem:[%s299 + $0x150] sm:$0xff] %v1730
        %1859 = vst [vmem:[%s299 + $0x158] sm:$0xff] %v1733
        %1860 = vst [vmem:[%s299 + $0x160] sm:$0xff] %v1738
        %1861 = vst [vmem:[%s299 + $0x168] sm:$0xff] %v1741
        %1862 = vst [vmem:[%s299 + $0x170] sm:$0xff] %v1746
        %1863 = vst [vmem:[%s299 + $0x178] sm:$0xff] %v1749
        %1864 = vst [vmem:[%s299 + $0x180] sm:$0xff] %v1754
        %1865 = vst [vmem:[%s299 + $0x188] sm:$0xff] %v1757
        %1866 = vst [vmem:[%s299 + $0x190] sm:$0xff] %v1762
        %1867 = vst [vmem:[%s299 + $0x198] sm:$0xff] %v1765
        %1868 = vst [vmem:[%s299 + $0x1a0] sm:$0xff] %v1770
        %1869 = vst [vmem:[%s299 + $0x1a8] sm:$0xff] %v1773
        %1870 = vst [vmem:[%s299 + $0x1b0] sm:$0xff] %v1778
        %1871 = vst [vmem:[%s299 + $0x1b8] sm:$0xff] %v1781
        %1872 = vst [vmem:[%s299 + $0x1c0] sm:$0xff] %v1786
        %1873 = vst [vmem:[%s299 + $0x1c8] sm:$0xff] %v1789
        %1874 = vst [vmem:[%s299 + $0x1d0] sm:$0xff] %v1794
        %1875 = vst [vmem:[%s299 + $0x1d8] sm:$0xff] %v1797
        %1876 = vst [vmem:[%s299 + $0x1e0] sm:$0xff] %v1802
        %1877 = vst [vmem:[%s299 + $0x1e8] sm:$0xff] %v1805
        %1878 = vst [vmem:[%s299 + $0x1f0] sm:$0xff] %v1810
        %1879 = vst [vmem:[%s299 + $0x1f8] sm:$0xff] %v1813
        %s1880 = smul.u32 64, %s22
        %p1881 = scmp.lt.s32.totalorder %s1880, 127
        %s1882 = scalar_select %p1881, %s1880, 127
        %s1883 = smul.addr %s1882, 4
        %s1884 = scalar_lea.vmem %s5, %s1883
        %s1885 = smul.u32 64, %s22
        %p1886 = scmp.lt.s32.totalorder %s1885, 127
        %s1887 = scalar_select %p1886, %s1885, 127
        %s1888 = smul.addr %s1887, 8
        %s1889 = scalar_lea.vmem %s6, %s1888
        // Predicated region
        $region49: #{model_forward.3} parent=39 // pred_check
          %p1890 = pneg %p150
        $region50: #{model_forward.3} parent=39 // pred_check_branch
          %1892 = sbr.rel (%p1890) target = $region52
        $region51: #{model_forward.3} parent=39 // pred_region
          %s1893 = smul.u32 64, %s22
        $region52: #{model_forward.3} parent=39 // pred_fallthru
          _
        // Predicated region
        $region53: #{model_forward.3} parent=39 // pred_check
          %p1894 = pneg %p176
        $region54: #{model_forward.3} parent=39 // pred_check_branch
          %1896 = sbr.rel (%p1894) target = $region56
        $region55: #{model_forward.3} parent=39 // pred_region
          %s1897 = smul.u32 64, %s22
        $region56: #{model_forward.3} parent=39 // pred_fallthru
          _
      $region40: #{model_forward.3} parent=5 // pred_fallthru
        _
      %p1898 = scmp.le.s32.totalorder 2, %s17
      // Predicated region
      $region57: #{model_forward.3} parent=5 // pred_check
        %p1899 = pneg %p1898
      $region58: #{model_forward.3} parent=5 // pred_check_branch
        %1901 = sbr.rel (%p1899) target = $region60
      $region59: #{model_forward.3} parent=5 // pred_region
        %s1902 = ssub.s32 %s17, 2
        // Predicated region
        $region61: #{model_forward.3} parent=59 // pred_check
          %p1903 = pneg %p156
        $region62: #{model_forward.3} parent=59 // pred_check_branch
          %1905 = sbr.rel (%p1903) target = $region64
        $region63: #{model_forward.3} parent=59 // pred_region
          %s1906 = smul.u32 64, %s23
          %p1907 = scmp.lt.s32.totalorder %s1906, 127
          %s1908 = scalar_select %p1907, %s1906, 127
          %s1909 = smul.addr %s1908, 4
          %s1910 = scalar_lea.vmem %s5, %s1909
        $region64: #{model_forward.3} parent=59 // pred_fallthru
          _
        // Predicated region
        $region65: #{model_forward.3} parent=59 // pred_check
          %p1911 = pneg %p182
        $region66: #{model_forward.3} parent=59 // pred_check_branch
          %1913 = sbr.rel (%p1911) target = $region68
        $region67: #{model_forward.3} parent=59 // pred_region
          %s1914 = smul.u32 64, %s23
          %p1915 = scmp.lt.s32.totalorder %s1914, 127
          %s1916 = scalar_select %p1915, %s1914, 127
          %s1917 = smul.addr %s1916, 8
          %s1918 = scalar_lea.vmem %s6, %s1917
        $region68: #{model_forward.3} parent=59 // pred_fallthru
          _
      $region60: #{model_forward.3} parent=5 // pred_fallthru
        _
    $region6: #{model_forward.3} parent=1 // loop_footer
      %s21 = sadd.s32 1, %s17
    $region7: #{model_forward.3} parent=1 // loop_footer_branch
      %16 = sbr.rel target = $region3
    $region8: #{model_forward.3} parent=1 // loop_exit
      _
    %1919 = vsyncpa [#allocation3], 1
    %s1920 = scalar_lea.sflag [#allocation3], 1
    %1921 = vsyncpa %s1920, 1
    %1922 = vsyncpa [#allocation5], 1

// kernel: model_forward.4
$region0: #{model_forward.4}
  #allocation0 [shape = 'u32[]', space=smem, size = 0x4, offset = 0x4, fixed_abs, tag = 'smem constant byte address 0x4 - core index']
  #allocation1 [shape = 'u32[144,128]{1,0:T(1,128)}', space=vmem, size = 0x12000, scoped, tag = 'internal scratch']
  #allocation2 [shape = 'f32[256,128]{1,0:T(8,128)}', space=vmem, size = 0x20000, scoped, tag = 'scratch operand']
  #allocation3 [shape = 's32[1]{0}', space=sflag, size = 0x4, scoped, tag = 'scoped memory for model_forward.4']
  #allocation4 [shape = 'u8[2048]{0}', space=smem, size = 0x800, scoped, tag = 'prefetched SMEM operand 0']
  #allocation5 [shape = 'u8[512]{0}', space=smem, size = 0x200, scoped, tag = 'prefetched SMEM operand 1']
  %s0 = inlined_call_operand.vmem [shape: s32[4,2], index: 0, kind: input, shape index: {}]
  %s1 = inlined_call_operand.vmem [shape: s32[4], index: 1, kind: input, shape index: {}]
  %s2 = inlined_call_operand.vmem [shape: bf16[1024,1024], index: 2, kind: input, shape index: {}]
  %s3 = inlined_call_operand.vmem [shape: bf16[1024,128], index: 3, kind: input, shape index: {}]
  %s4 = inlined_call_operand.vmem [shape: f32[1024,128], index: 4, kind: input, shape index: {}]
  %s5 = inlined_call_operand.vmem [shape: f32[1,128], index: 5, kind: input, shape index: {}]
  %s6 = inlined_call_operand.vmem [shape: f32[1024,128], index: 6, kind: output, shape index: {}]
  %s7 = sld [smem:[#allocation0]]
  $region84: #{model_forward.4} parent=0
    _
  %s9 = ssub.s32 1, %s7
  %s10 = scalar_select 0, %s9, %s7
  %s11 = sshll.u32 %s0, 4
  %s12 = int_to_ptr.vmem [resolvable:$true] %s11
  %14 = dma.vmem_to_smem %s12, 64, [#allocation4], [#allocation3]
  %s15 = sshll.u32 %s1, 4
  %s16 = int_to_ptr.vmem [resolvable:$true] %s15
  %18 = dma.vmem_to_smem %s16, 16, [#allocation5], [#allocation3]
  %19 = dma.done [#allocation3], 80
  %20 = sfence
  $region1: #{model_forward.4} parent=0
    #allocation6 [shape = 'u8[524288]{0}', space=vmem, size = 0x80000, scoped, tag = 'input window, operand 2']
    loop: start=0, step=1, limit=10
    $region2: #{model_forward.4} parent=1 // loop_pre_header
      _
    $region3: #{model_forward.4} parent=1 // loop_header
      %s22 = sphi 0, %s26
      %p23 = scmp.ge.s32.totalorder %s22, 10
      %s29 = sphi 0, %s41
      %s30 = sphi 0, %s37
      %s31 = sphi 0, %s29
      %s32 = sphi 0, %s30
      %s33 = sphi 0, %s31
      %s34 = sphi 0, %s32
      %s62 = sphi 0, %s64
      %s65 = sphi 0, %s62
      %s66 = sphi 0, %s65
      %s82 = sphi 0, %s66
      %s104 = sphi 0, %s106
      %s107 = sphi 0, %s104
      %s108 = sphi 0, %s107
      %s124 = sphi 0, %s108
      %s130 = sphi 0, %s132
      %s133 = sphi 0, %s130
      %s134 = sphi 0, %s133
      %s150 = sphi 0, %s134
      %s154 = sphi 0, %s154
      %s156 = sphi 0, %s154
      %s157 = sphi 0, %s156
      %s171 = sphi 0, %s157
      %s177 = sphi 0, %s179
      %s180 = sphi 0, %s177
      %s181 = sphi 0, %s180
      %s197 = sphi 0, %s181
    $region4: #{model_forward.4} parent=1 // loop_header_branch
      %25 = sbr.rel (%p23) target = $region8
    $region5: #{model_forward.4} parent=1 // loop_body
      %s27 = ssub.s32 %s22, 1
      %s28 = ssub.s32 %s22, 2
      %s35 = sadd.s32 1, %s30
      %p36 = scmp.ge.s32.totalorder %s35, 2
      %s37 = scalar_select %p36, 0, %s35
      %s38 = sadd.s32 1, %s29
      %s39 = scalar_select %p36, %s38, %s29
      %p40 = scmp.ge.s32.totalorder %s39, 4
      %s41 = scalar_select %p40, 0, %s39
      %s42 = sshra.s32 %s30, 7
      %s43 = sand.u32 %s30, 127
      %s44 = sadd.s32 %s42, %s29
      %s45 = smul.u32 %s44, 128
      %s46 = sshra.s32 %s30, 7
      %s47 = sand.u32 %s30, 127
      %s48 = sadd.s32 %s45, %s47
      %s49 = sld [smem:[#allocation4 + %s48]]
      %s50 = sshra.s32 %s37, 7
      %s51 = sand.u32 %s37, 127
      %s52 = sadd.s32 %s50, %s41
      %s53 = smul.u32 %s52, 128
      %s54 = sshra.s32 %s37, 7
      %s55 = sand.u32 %s37, 127
      %s56 = sadd.s32 %s53, %s55
      %s57 = sld [smem:[#allocation4 + %s56]]
      %s58 = ssub.s32 %s29, %s41
      %s59 = ssub.s32 %s49, %s57
      %s60 = sor.u32 %s58, %s59
      %p61 = scmp.eq.s32.totalorder %s60, 0
      %s63 = sadd.s32 %s62, 1
      %s64 = scalar_select %p61, %s62, %s63
      %p67 = pneg %p61
      %p68 = scmp.eq.s32.totalorder %s22, 7
      %p69 = por %p67, %p68
      %p70 = scmp.ne.s32.totalorder %s62, %s65
      %p71 = scmp.eq.s32.totalorder %s22, 0
      %p72 = por %p70, %p71
      %p73 = scmp.ne.s32.totalorder %s62, %s65
      %p74 = scmp.eq.s32.totalorder %s27, 7
      %p75 = por %p73, %p74
      %p76 = scmp.ne.s32.totalorder %s65, %s66
      %p77 = scmp.eq.s32.totalorder %s27, 0
      %p78 = por %p76, %p77
      %p79 = scmp.ne.s32.totalorder %s65, %s66
      %p80 = scmp.eq.s32.totalorder %s28, 7
      %p81 = por %p79, %p80
      %p83 = scmp.ne.s32.totalorder %s66, %s82
      %p84 = scmp.eq.s32.totalorder %s28, 0
      %p85 = por %p83, %p84
      %s86 = sshra.s32 %s30, 7
      %s87 = sand.u32 %s30, 127
      %s88 = sadd.s32 %s86, %s29
      %s89 = smul.u32 %s88, 128
      %s90 = sshra.s32 %s30, 7
      %s91 = sand.u32 %s30, 127
      %s92 = sadd.s32 %s89, %s91
      %s93 = sld [smem:[#allocation4 + %s92]]
      %s94 = sshra.s32 %s37, 7
      %s95 = sand.u32 %s37, 127
      %s96 = sadd.s32 %s94, %s41
      %s97 = smul.u32 %s96, 128
      %s98 = sshra.s32 %s37, 7
      %s99 = sand.u32 %s37, 127
      %s100 = sadd.s32 %s97, %s99
      %s101 = sld [smem:[#allocation4 + %s100]]
      %s102 = ssub.s32 %s93, %s101
      %p103 = scmp.eq.s32.totalorder %s102, 0
      %s105 = sadd.s32 %s104, 1
      %s106 = scalar_select %p103, %s104, %s105
      %p109 = pneg %p103
      %p110 = scmp.eq.s32.totalorder %s22, 7
      %p111 = por %p109, %p110
      %p112 = scmp.ne.s32.totalorder %s104, %s107
      %p113 = scmp.eq.s32.totalorder %s22, 0
      %p114 = por %p112, %p113
      %p115 = scmp.ne.s32.totalorder %s104, %s107
      %p116 = scmp.eq.s32.totalorder %s27, 7
      %p117 = por %p115, %p116
      %p118 = scmp.ne.s32.totalorder %s107, %s108
      %p119 = scmp.eq.s32.totalorder %s27, 0
      %p120 = por %p118, %p119
      %p121 = scmp.ne.s32.totalorder %s107, %s108
      %p122 = scmp.eq.s32.totalorder %s28, 7
      %p123 = por %p121, %p122
      %p125 = scmp.ne.s32.totalorder %s108, %s124
      %p126 = scmp.eq.s32.totalorder %s28, 0
      %p127 = por %p125, %p126
      %s128 = ssub.s32 %s29, %s41
      %p129 = scmp.eq.s32.totalorder %s128, 0
      %s131 = sadd.s32 %s130, 1
      %s132 = scalar_select %p129, %s130, %s131
      %p135 = pneg %p129
      %p136 = scmp.eq.s32.totalorder %s22, 7
      %p137 = por %p135, %p136
      %p138 = scmp.ne.s32.totalorder %s130, %s133
      %p139 = scmp.eq.s32.totalorder %s22, 0
      %p140 = por %p138, %p139
      %p141 = scmp.ne.s32.totalorder %s130, %s133
      %p142 = scmp.eq.s32.totalorder %s27, 7
      %p143 = por %p141, %p142
      %p144 = scmp.ne.s32.totalorder %s133, %s134
      %p145 = scmp.eq.s32.totalorder %s27, 0
      %p146 = por %p144, %p145
      %p147 = scmp.ne.s32.totalorder %s133, %s134
      %p148 = scmp.eq.s32.totalorder %s28, 7
      %p149 = por %p147, %p148
      %p151 = scmp.ne.s32.totalorder %s134, %s150
      %p152 = scmp.eq.s32.totalorder %s28, 0
      %p153 = por %p151, %p152
      %s155 = sadd.s32 %s154, 1
      %p158 = scmp.eq.s32.totalorder %s22, 7
      %p159 = scmp.ne.s32.totalorder %s154, %s156
      %p160 = scmp.eq.s32.totalorder %s22, 0
      %p161 = por %p159, %p160
      %p162 = scmp.ne.s32.totalorder %s154, %s156
      %p163 = scmp.eq.s32.totalorder %s27, 7
      %p164 = por %p162, %p163
      %p165 = scmp.ne.s32.totalorder %s156, %s157
      %p166 = scmp.eq.s32.totalorder %s27, 0
      %p167 = por %p165, %p166
      %p168 = scmp.ne.s32.totalorder %s156, %s157
      %p169 = scmp.eq.s32.totalorder %s28, 7
      %p170 = por %p168, %p169
      %p172 = scmp.ne.s32.totalorder %s157, %s171
      %p173 = scmp.eq.s32.totalorder %s28, 0
      %p174 = por %p172, %p173
      %s175 = ssub.s32 %s29, %s41
      %p176 = scmp.eq.s32.totalorder %s175, 0
      %s178 = sadd.s32 %s177, 1
      %s179 = scalar_select %p176, %s177, %s178
      %p182 = pneg %p176
      %p183 = scmp.eq.s32.totalorder %s22, 7
      %p184 = por %p182, %p183
      %p185 = scmp.ne.s32.totalorder %s177, %s180
      %p186 = scmp.eq.s32.totalorder %s22, 0
      %p187 = por %p185, %p186
      %p188 = scmp.ne.s32.totalorder %s177, %s180
      %p189 = scmp.eq.s32.totalorder %s27, 7
      %p190 = por %p188, %p189
      %p191 = scmp.ne.s32.totalorder %s180, %s181
      %p192 = scmp.eq.s32.totalorder %s27, 0
      %p193 = por %p191, %p192
      %p194 = scmp.ne.s32.totalorder %s180, %s181
      %p195 = scmp.eq.s32.totalorder %s28, 7
      %p196 = por %p194, %p195
      %p198 = scmp.ne.s32.totalorder %s181, %s197
      %p199 = scmp.eq.s32.totalorder %s28, 0
      %p200 = por %p198, %p199
      %p201 = scmp.le.s32.totalorder 1, %s22
      %p202 = scmp.lt.s32.totalorder %s22, 9
      %p203 = pnand %p201, %p202
      %p204 = pneg %p203
      // Predicated region
      $region9: #{model_forward.4} parent=5 // pred_check
        _
      $region10: #{model_forward.4} parent=5 // pred_check_branch
        %206 = sbr.rel (%p203) target = $region12
      $region11: #{model_forward.4} parent=5 // pred_region
        %s207 = ssub.s32 %s22, 1
        // Predicated region
        $region13: #{model_forward.4} parent=11 // pred_check
          %p208 = pneg %p167
        $region14: #{model_forward.4} parent=11 // pred_check_branch
          %210 = sbr.rel (%p208) target = $region16
        $region15: #{model_forward.4} parent=11 // pred_region
          _
        $region16: #{model_forward.4} parent=11 // pred_fallthru
          _
      $region12: #{model_forward.4} parent=5 // pred_fallthru
        _
      %p211 = scmp.lt.s32.totalorder %s22, 8
      // Predicated region
      $region17: #{model_forward.4} parent=5 // pred_check
        %p212 = pneg %p211
      $region18: #{model_forward.4} parent=5 // pred_check_branch
        %214 = sbr.rel (%p212) target = $region20
      $region19: #{model_forward.4} parent=5 // pred_region
        // Predicated region
        $region21: #{model_forward.4} parent=19 // pred_check
          %p215 = pneg %p72
        $region22: #{model_forward.4} parent=19 // pred_check_branch
          %217 = sbr.rel (%p215) target = $region24
        $region23: #{model_forward.4} parent=19 // pred_region
          %s218 = sand.u32 %s62, 1
          %s219 = sand.u32 %s62, 1
          %s220 = smul.addr %s219, 512
          %s221 = scalar_lea.vmem [#allocation6], %s220
          %s222 = sshra.s32 %s30, 7
          %s223 = sand.u32 %s30, 127
          %s224 = sadd.s32 %s222, %s29
          %s225 = smul.u32 %s224, 128
          %s226 = sshra.s32 %s30, 7
          %s227 = sand.u32 %s30, 127
          %s228 = sadd.s32 %s225, %s227
          %s229 = sld [smem:[#allocation4 + %s228]]
          %s230 = smul.u32 32, %s29
          %s231 = smul.u32 4, %s229
          %s232 = smul.addr %s230, 8
          %s233 = sadd.s32 %s231, %s232
          %s234 = smul.addr %s233, 4
          %s235 = scalar_lea.vmem %s2, %s234
          // Predicated region
          $region25: #{model_forward.4} parent=23 // pred_check
            _
          $region26: #{model_forward.4} parent=23 // pred_check_branch
            %237 = sbr.rel (0) target = $region28
          $region27: #{model_forward.4} parent=23 // pred_region
            // Predicated region
            $region29: #{model_forward.4} parent=27 // pred_check
              _
            $region30: #{model_forward.4} parent=27 // pred_check_branch
              %239 = sbr.rel (0) target = $region32
            $region31: #{model_forward.4} parent=27 // pred_region
              loop: start=0, step=1, limit=1
              $region33: #{model_forward.4} parent=31 // loop_pre_header
                _
              $region34: #{model_forward.4} parent=31 // loop_header
                %s241 = sphi 0, %s245
                %p242 = scmp.ge.s32.totalorder %s241, 1
                %s246 = sphi %s235, %s235
                %s247 = sphi %s221, %s221
              $region35: #{model_forward.4} parent=31 // loop_header_branch
                %244 = sbr.rel (%p242) target = $region39
              $region36: #{model_forward.4} parent=31 // loop_body
                %v248 = vld [vmem:[%s246] sm:$0xff]
                %249 = vst [vmem:[%s247] sm:$0xff] %v248
                %v250 = vld [vmem:[%s246 + $0x8] sm:$0xff]
                %251 = vst [vmem:[%s247 + $0x8] sm:$0xff] %v250
                %v252 = vld [vmem:[%s246 + $0x20] sm:$0xff]
                %253 = vst [vmem:[%s247 + $0x10] sm:$0xff] %v252
                %v254 = vld [vmem:[%s246 + $0x28] sm:$0xff]
                %255 = vst [vmem:[%s247 + $0x18] sm:$0xff] %v254
                %v256 = vld [vmem:[%s246 + $0x40] sm:$0xff]
                %257 = vst [vmem:[%s247 + $0x20] sm:$0xff] %v256
                %v258 = vld [vmem:[%s246 + $0x48] sm:$0xff]
                %259 = vst [vmem:[%s247 + $0x28] sm:$0xff] %v258
                %v260 = vld [vmem:[%s246 + $0x60] sm:$0xff]
                %261 = vst [vmem:[%s247 + $0x30] sm:$0xff] %v260
                %v262 = vld [vmem:[%s246 + $0x68] sm:$0xff]
                %263 = vst [vmem:[%s247 + $0x38] sm:$0xff] %v262
                %v264 = vld [vmem:[%s246 + $0x80] sm:$0xff]
                %265 = vst [vmem:[%s247 + $0x40] sm:$0xff] %v264
                %v266 = vld [vmem:[%s246 + $0x88] sm:$0xff]
                %267 = vst [vmem:[%s247 + $0x48] sm:$0xff] %v266
                %v268 = vld [vmem:[%s246 + $0xa0] sm:$0xff]
                %269 = vst [vmem:[%s247 + $0x50] sm:$0xff] %v268
                %v270 = vld [vmem:[%s246 + $0xa8] sm:$0xff]
                %271 = vst [vmem:[%s247 + $0x58] sm:$0xff] %v270
                %v272 = vld [vmem:[%s246 + $0xc0] sm:$0xff]
                %273 = vst [vmem:[%s247 + $0x60] sm:$0xff] %v272
                %v274 = vld [vmem:[%s246 + $0xc8] sm:$0xff]
                %275 = vst [vmem:[%s247 + $0x68] sm:$0xff] %v274
                %v276 = vld [vmem:[%s246 + $0xe0] sm:$0xff]
                %277 = vst [vmem:[%s247 + $0x70] sm:$0xff] %v276
                %v278 = vld [vmem:[%s246 + $0xe8] sm:$0xff]
                %279 = vst [vmem:[%s247 + $0x78] sm:$0xff] %v278
                %v280 = vld [vmem:[%s246 + $0x100] sm:$0xff]
                %281 = vst [vmem:[%s247 + $0x80] sm:$0xff] %v280
                %v282 = vld [vmem:[%s246 + $0x108] sm:$0xff]
                %283 = vst [vmem:[%s247 + $0x88] sm:$0xff] %v282
                %v284 = vld [vmem:[%s246 + $0x120] sm:$0xff]
                %285 = vst [vmem:[%s247 + $0x90] sm:$0xff] %v284
                %v286 = vld [vmem:[%s246 + $0x128] sm:$0xff]
                %287 = vst [vmem:[%s247 + $0x98] sm:$0xff] %v286
                %v288 = vld [vmem:[%s246 + $0x140] sm:$0xff]
                %289 = vst [vmem:[%s247 + $0xa0] sm:$0xff] %v288
                %v290 = vld [vmem:[%s246 + $0x148] sm:$0xff]
                %291 = vst [vmem:[%s247 + $0xa8] sm:$0xff] %v290
                %v292 = vld [vmem:[%s246 + $0x160] sm:$0xff]
                %293 = vst [vmem:[%s247 + $0xb0] sm:$0xff] %v292
                %v294 = vld [vmem:[%s246 + $0x168] sm:$0xff]
                %295 = vst [vmem:[%s247 + $0xb8] sm:$0xff] %v294
                %v296 = vld [vmem:[%s246 + $0x180] sm:$0xff]
                %297 = vst [vmem:[%s247 + $0xc0] sm:$0xff] %v296
                %v298 = vld [vmem:[%s246 + $0x188] sm:$0xff]
                %299 = vst [vmem:[%s247 + $0xc8] sm:$0xff] %v298
                %v300 = vld [vmem:[%s246 + $0x1a0] sm:$0xff]
                %301 = vst [vmem:[%s247 + $0xd0] sm:$0xff] %v300
                %v302 = vld [vmem:[%s246 + $0x1a8] sm:$0xff]
                %303 = vst [vmem:[%s247 + $0xd8] sm:$0xff] %v302
                %v304 = vld [vmem:[%s246 + $0x1c0] sm:$0xff]
                %305 = vst [vmem:[%s247 + $0xe0] sm:$0xff] %v304
                %v306 = vld [vmem:[%s246 + $0x1c8] sm:$0xff]
                %307 = vst [vmem:[%s247 + $0xe8] sm:$0xff] %v306
                %v308 = vld [vmem:[%s246 + $0x1e0] sm:$0xff]
                %309 = vst [vmem:[%s247 + $0xf0] sm:$0xff] %v308
                %v310 = vld [vmem:[%s246 + $0x1e8] sm:$0xff]
                %311 = vst [vmem:[%s247 + $0xf8] sm:$0xff] %v310
                %v312 = vld [vmem:[%s246 + $0x200] sm:$0xff]
                %313 = vst [vmem:[%s247 + $0x100] sm:$0xff] %v312
                %v314 = vld [vmem:[%s246 + $0x208] sm:$0xff]
                %315 = vst [vmem:[%s247 + $0x108] sm:$0xff] %v314
                %v316 = vld [vmem:[%s246 + $0x220] sm:$0xff]
                %317 = vst [vmem:[%s247 + $0x110] sm:$0xff] %v316
                %v318 = vld [vmem:[%s246 + $0x228] sm:$0xff]
                %319 = vst [vmem:[%s247 + $0x118] sm:$0xff] %v318
                %v320 = vld [vmem:[%s246 + $0x240] sm:$0xff]
                %321 = vst [vmem:[%s247 + $0x120] sm:$0xff] %v320
                %v322 = vld [vmem:[%s246 + $0x248] sm:$0xff]
                %323 = vst [vmem:[%s247 + $0x128] sm:$0xff] %v322
                %v324 = vld [vmem:[%s246 + $0x260] sm:$0xff]
                %325 = vst [vmem:[%s247 + $0x130] sm:$0xff] %v324
                %v326 = vld [vmem:[%s246 + $0x268] sm:$0xff]
                %327 = vst [vmem:[%s247 + $0x138] sm:$0xff] %v326
                %v328 = vld [vmem:[%s246 + $0x280] sm:$0xff]
                %329 = vst [vmem:[%s247 + $0x140] sm:$0xff] %v328
                %v330 = vld [vmem:[%s246 + $0x288] sm:$0xff]
                %331 = vst [vmem:[%s247 + $0x148] sm:$0xff] %v330
                %v332 = vld [vmem:[%s246 + $0x2a0] sm:$0xff]
                %333 = vst [vmem:[%s247 + $0x150] sm:$0xff] %v332
                %v334 = vld [vmem:[%s246 + $0x2a8] sm:$0xff]
                %335 = vst [vmem:[%s247 + $0x158] sm:$0xff] %v334
                %v336 = vld [vmem:[%s246 + $0x2c0] sm:$0xff]
                %337 = vst [vmem:[%s247 + $0x160] sm:$0xff] %v336
                %v338 = vld [vmem:[%s246 + $0x2c8] sm:$0xff]
                %339 = vst [vmem:[%s247 + $0x168] sm:$0xff] %v338
                %v340 = vld [vmem:[%s246 + $0x2e0] sm:$0xff]
                %341 = vst [vmem:[%s247 + $0x170] sm:$0xff] %v340
                %v342 = vld [vmem:[%s246 + $0x2e8] sm:$0xff]
                %343 = vst [vmem:[%s247 + $0x178] sm:$0xff] %v342
                %v344 = vld [vmem:[%s246 + $0x300] sm:$0xff]
                %345 = vst [vmem:[%s247 + $0x180] sm:$0xff] %v344
                %v346 = vld [vmem:[%s246 + $0x308] sm:$0xff]
                %347 = vst [vmem:[%s247 + $0x188] sm:$0xff] %v346
                %v348 = vld [vmem:[%s246 + $0x320] sm:$0xff]
                %349 = vst [vmem:[%s247 + $0x190] sm:$0xff] %v348
                %v350 = vld [vmem:[%s246 + $0x328] sm:$0xff]
                %351 = vst [vmem:[%s247 + $0x198] sm:$0xff] %v350
                %v352 = vld [vmem:[%s246 + $0x340] sm:$0xff]
                %353 = vst [vmem:[%s247 + $0x1a0] sm:$0xff] %v352
                %v354 = vld [vmem:[%s246 + $0x348] sm:$0xff]
                %355 = vst [vmem:[%s247 + $0x1a8] sm:$0xff] %v354
                %v356 = vld [vmem:[%s246 + $0x360] sm:$0xff]
                %357 = vst [vmem:[%s247 + $0x1b0] sm:$0xff] %v356
                %v358 = vld [vmem:[%s246 + $0x368] sm:$0xff]
                %359 = vst [vmem:[%s247 + $0x1b8] sm:$0xff] %v358
                %v360 = vld [vmem:[%s246 + $0x380] sm:$0xff]
                %361 = vst [vmem:[%s247 + $0x1c0] sm:$0xff] %v360
                %v362 = vld [vmem:[%s246 + $0x388] sm:$0xff]
                %363 = vst [vmem:[%s247 + $0x1c8] sm:$0xff] %v362
                %v364 = vld [vmem:[%s246 + $0x3a0] sm:$0xff]
                %365 = vst [vmem:[%s247 + $0x1d0] sm:$0xff] %v364
                %v366 = vld [vmem:[%s246 + $0x3a8] sm:$0xff]
                %367 = vst [vmem:[%s247 + $0x1d8] sm:$0xff] %v366
                %v368 = vld [vmem:[%s246 + $0x3c0] sm:$0xff]
                %369 = vst [vmem:[%s247 + $0x1e0] sm:$0xff] %v368
                %v370 = vld [vmem:[%s246 + $0x3c8] sm:$0xff]
                %371 = vst [vmem:[%s247 + $0x1e8] sm:$0xff] %v370
                %v372 = vld [vmem:[%s246 + $0x3e0] sm:$0xff]
                %373 = vst [vmem:[%s247 + $0x1f0] sm:$0xff] %v372
                %v374 = vld [vmem:[%s246 + $0x3e8] sm:$0xff]
                %375 = vst [vmem:[%s247 + $0x1f8] sm:$0xff] %v374
              $region37: #{model_forward.4} parent=31 // loop_footer
                %s245 = sadd.s32 1, %s241
              $region38: #{model_forward.4} parent=31 // loop_footer_branch
                %240 = sbr.rel target = $region34
              $region39: #{model_forward.4} parent=31 // loop_exit
                _
            $region32: #{model_forward.4} parent=27 // pred_fallthru
              _
            // Predicated region
            $region40: #{model_forward.4} parent=27 // pred_check
              _
            $region41: #{model_forward.4} parent=27 // pred_check_branch
              %377 = sbr.rel target = $region43
            $region42: #{model_forward.4} parent=27 // pred_region
              _
            $region43: #{model_forward.4} parent=27 // pred_fallthru
              _
          $region28: #{model_forward.4} parent=23 // pred_fallthru
            _
          %378 = vnop
        $region24: #{model_forward.4} parent=19 // pred_fallthru
          _
        // Predicated region
        $region44: #{model_forward.4} parent=19 // pred_check
          %p379 = pneg %p114
        $region45: #{model_forward.4} parent=19 // pred_check_branch
          %381 = sbr.rel (%p379) target = $region47
        $region46: #{model_forward.4} parent=19 // pred_region
          %s382 = sshra.s32 %s30, 7
          %s383 = sand.u32 %s30, 127
          %s384 = sadd.s32 %s382, %s29
          %s385 = smul.u32 %s384, 128
          %s386 = sshra.s32 %s30, 7
          %s387 = sand.u32 %s30, 127
          %s388 = sadd.s32 %s385, %s387
          %s389 = sld [smem:[#allocation4 + %s388]]
          %s390 = smul.u32 64, %s389
          %p391 = scmp.lt.s32.totalorder %s390, 127
          %s392 = scalar_select %p391, %s390, 127
          %s393 = smul.addr %s392, 4
          %s394 = scalar_lea.vmem %s3, %s393
          %s395 = sshra.s32 %s30, 7
          %s396 = sand.u32 %s30, 127
          %s397 = sadd.s32 %s395, %s29
          %s398 = smul.u32 %s397, 128
          %s399 = sshra.s32 %s30, 7
          %s400 = sand.u32 %s30, 127
          %s401 = sadd.s32 %s398, %s400
          %s402 = sld [smem:[#allocation4 + %s401]]
          %s403 = smul.u32 64, %s402
        $region47: #{model_forward.4} parent=19 // pred_fallthru
          _
        // Predicated region
        $region48: #{model_forward.4} parent=19 // pred_check
          %p404 = pneg %p140
        $region49: #{model_forward.4} parent=19 // pred_check_branch
          %406 = sbr.rel (%p404) target = $region51
        $region50: #{model_forward.4} parent=19 // pred_region
          %s407 = smul.u32 32, %s29
          %p408 = scmp.lt.s32.totalorder %s407, 127
          %s409 = scalar_select %p408, %s407, 127
          %s410 = smul.addr %s409, 8
          %s411 = scalar_lea.vmem %s4, %s410
          %s412 = smul.u32 32, %s29
        $region51: #{model_forward.4} parent=19 // pred_fallthru
          _
      $region20: #{model_forward.4} parent=5 // pred_fallthru
        _
      %p413 = scmp.le.s32.totalorder 1, %s22
      %p414 = scmp.lt.s32.totalorder %s22, 9
      %p415 = pnand %p413, %p414
      %p416 = pneg %p415
      // Predicated region
      $region52: #{model_forward.4} parent=5 // pred_check
        _
      $region53: #{model_forward.4} parent=5 // pred_check_branch
        %418 = sbr.rel (%p415) target = $region55
      $region54: #{model_forward.4} parent=5 // pred_region
        %s419 = ssub.s32 %s22, 1
        %s420 = sand.u32 %s65, 1
        %s421 = sand.u32 %s65, 1
        %s422 = smul.addr %s421, 512
        %s423 = scalar_lea.vmem [#allocation6], %s422
        // Predicated region
        $region56: #{model_forward.4} parent=54 // pred_check
          %p424 = pneg %p78
        $region57: #{model_forward.4} parent=54 // pred_check_branch
          %426 = sbr.rel (%p424) target = $region59
        $region58: #{model_forward.4} parent=54 // pred_region
          _
        $region59: #{model_forward.4} parent=54 // pred_fallthru
          _
        %s427 = sand.u32 %s65, 1
        %s428 = sand.u32 %s65, 1
        %s429 = smul.addr %s428, 512
        %s430 = scalar_lea.vmem [#allocation6], %s429
        %p431 = pneg %p78
        %p432 = pneg %p75
        %s433 = sshra.s32 %s32, 7
        %s434 = sand.u32 %s32, 127
        %s435 = sadd.s32 %s433, %s31
        %s436 = smul.u32 %s435, 128
        %s437 = sshra.s32 %s32, 7
        %s438 = sand.u32 %s32, 127
        %s439 = sadd.s32 %s436, %s438
        %s440 = sld [smem:[#allocation4 + %s439]]
        %s441 = smul.u32 64, %s440
        %p442 = scmp.lt.s32.totalorder %s441, 127
        %s443 = scalar_select %p442, %s441, 127
        %s444 = smul.addr %s443, 4
        %s445 = scalar_lea.vmem %s3, %s444
        %p446 = pneg %p120
        %p447 = pneg %p117
        %s448 = smul.u32 32, %s31
        %p449 = scmp.lt.s32.totalorder %s448, 127
        %s450 = scalar_select %p449, %s448, 127
        %s451 = smul.addr %s450, 8
        %s452 = scalar_lea.vmem %s4, %s451
        %p453 = pneg %p146
        %p454 = pneg %p143
        %p455 = pneg %p167
        %p456 = pneg %p164
        %p457 = pneg %p193
        %p458 = pneg %p190
        %s459 = smul.u32 32, %s31
        %p460 = scmp.lt.s32.totalorder %s459, 127
        %s461 = scalar_select %p460, %s459, 127
        %s462 = smul.addr %s461, 8
        %s463 = scalar_lea.vmem %s6, %s462
        %s464 = sshra.s32 %s32, 7
        %s465 = sand.u32 %s32, 127
        %s466 = sadd.s32 %s464, %s31
        %s467 = smul.u32 %s466, 128
        %s468 = sshra.s32 %s32, 7
        %s469 = sand.u32 %s32, 127
        %s470 = sadd.s32 %s467, %s469
        %s471 = sld [smem:[#allocation4 + %s470]]
        %s472 = smul.u32 32, %s31
        %s473 = smul.u32 4, %s471
        %s474 = sshra.s32 %s32, 7
        %s475 = sand.u32 %s32, 127
        %s476 = sadd.s32 %s474, %s31
        %s477 = smul.u32 %s476, 128
        %s478 = sshra.s32 %s32, 7
        %s479 = sand.u32 %s32, 127
        %s480 = sadd.s32 %s477, %s479
        %s481 = sld [smem:[#allocation4 + %s480]]
        %s482 = smul.u32 64, %s481
        %p483 = scmp.lt.s32.totalorder %s482, 127
        %s484 = scalar_select %p483, %s482, 127
        %s485 = smul.addr %s484, 4
        %s486 = scalar_lea.vmem %s3, %s485
        %s487 = sshra.s32 %s32, 7
        %s488 = sand.u32 %s32, 127
        %s489 = sadd.s32 %s487, %s31
        %s490 = smul.u32 %s489, 128
        %s491 = sshra.s32 %s32, 7
        %s492 = sand.u32 %s32, 127
        %s493 = sadd.s32 %s490, %s492
        %s494 = sld [smem:[#allocation4 + %s493]]
        %s495 = smul.u32 64, %s494
        %s496 = smul.u32 32, %s31
        %p497 = scmp.lt.s32.totalorder %s496, 127
        %s498 = scalar_select %p497, %s496, 127
        %s499 = smul.addr %s498, 8
        %s500 = scalar_lea.vmem %s4, %s499
        %s501 = smul.u32 32, %s31
        %s502 = smul.u32 32, %s31
        %p503 = scmp.lt.s32.totalorder %s502, 127
        %s504 = scalar_select %p503, %s502, 127
        %s505 = smul.addr %s504, 8
        %s506 = scalar_lea.vmem %s6, %s505
        %s507 = smul.u32 32, %s31
        %p509 = scmp.eq.s32.totalorder %s32, 0
        // Predicated region
        $region60: #{model_forward.4} parent=54 // pred_check
          %p510 = pneg %p509
        $region61: #{model_forward.4} parent=54 // pred_check_branch
          %512 = sbr.rel (%p510) target = $region63
        $region62: #{model_forward.4} parent=54 // pred_region
          %513 = vst [vmem:[#allocation2] sm:$0xff] 0.0
          %514 = vst [vmem:[#allocation2 + $0x8] sm:$0xff] 0.0
          %515 = vst [vmem:[#allocation2 + $0x10] sm:$0xff] 0.0
          %516 = vst [vmem:[#allocation2 + $0x18] sm:$0xff] 0.0
          %517 = vst [vmem:[#allocation2 + $0x20] sm:$0xff] 0.0
          %518 = vst [vmem:[#allocation2 + $0x28] sm:$0xff] 0.0
          %519 = vst [vmem:[#allocation2 + $0x30] sm:$0xff] 0.0
          %520 = vst [vmem:[#allocation2 + $0x38] sm:$0xff] 0.0
          %521 = vst [vmem:[#allocation2 + $0x40] sm:$0xff] 0.0
          %522 = vst [vmem:[#allocation2 + $0x48] sm:$0xff] 0.0
          %523 = vst [vmem:[#allocation2 + $0x50] sm:$0xff] 0.0
          %524 = vst [vmem:[#allocation2 + $0x58] sm:$0xff] 0.0
          %525 = vst [vmem:[#allocation2 + $0x60] sm:$0xff] 0.0
          %526 = vst [vmem:[#allocation2 + $0x68] sm:$0xff] 0.0
          %527 = vst [vmem:[#allocation2 + $0x70] sm:$0xff] 0.0
          %528 = vst [vmem:[#allocation2 + $0x78] sm:$0xff] 0.0
          %529 = vst [vmem:[#allocation2 + $0x80] sm:$0xff] 0.0
          %530 = vst [vmem:[#allocation2 + $0x88] sm:$0xff] 0.0
          %531 = vst [vmem:[#allocation2 + $0x90] sm:$0xff] 0.0
          %532 = vst [vmem:[#allocation2 + $0x98] sm:$0xff] 0.0
          %533 = vst [vmem:[#allocation2 + $0xa0] sm:$0xff] 0.0
          %534 = vst [vmem:[#allocation2 + $0xa8] sm:$0xff] 0.0
          %535 = vst [vmem:[#allocation2 + $0xb0] sm:$0xff] 0.0
          %536 = vst [vmem:[#allocation2 + $0xb8] sm:$0xff] 0.0
          %537 = vst [vmem:[#allocation2 + $0xc0] sm:$0xff] 0.0
          %538 = vst [vmem:[#allocation2 + $0xc8] sm:$0xff] 0.0
          %539 = vst [vmem:[#allocation2 + $0xd0] sm:$0xff] 0.0
          %540 = vst [vmem:[#allocation2 + $0xd8] sm:$0xff] 0.0
          %541 = vst [vmem:[#allocation2 + $0xe0] sm:$0xff] 0.0
          %542 = vst [vmem:[#allocation2 + $0xe8] sm:$0xff] 0.0
          %543 = vst [vmem:[#allocation2 + $0xf0] sm:$0xff] 0.0
          %544 = vst [vmem:[#allocation2 + $0xf8] sm:$0xff] 0.0
        $region63: #{model_forward.4} parent=54 // pred_fallthru
          _
        %s545 = sld [smem:[#allocation5 + %s31]]
        %p546 = scmp.lt.s32.totalorder %s32, %s545
        // Predicated region
        $region64: #{model_forward.4} parent=54 // pred_check
          %p547 = pneg %p546
        $region65: #{model_forward.4} parent=54 // pred_check_branch
          %549 = sbr.rel (%p547) target = $region67
        $region66: #{model_forward.4} parent=54 // pred_region
          %v550 = vld [vmem:[#allocation2] sm:$0xff]
          %v551 = vld [vmem:[#allocation2 + $0x8] sm:$0xff]
          %v552 = vld [vmem:[#allocation2 + $0x10] sm:$0xff]
          %v553 = vld [vmem:[#allocation2 + $0x18] sm:$0xff]
          %v554 = vld [vmem:[#allocation2 + $0x20] sm:$0xff]
          %v555 = vld [vmem:[#allocation2 + $0x28] sm:$0xff]
          %v556 = vld [vmem:[#allocation2 + $0x30] sm:$0xff]
          %v557 = vld [vmem:[#allocation2 + $0x38] sm:$0xff]
          %v558 = vld [vmem:[#allocation2 + $0x40] sm:$0xff]
          %v559 = vld [vmem:[#allocation2 + $0x48] sm:$0xff]
          %v560 = vld [vmem:[#allocation2 + $0x50] sm:$0xff]
          %v561 = vld [vmem:[#allocation2 + $0x58] sm:$0xff]
          %v562 = vld [vmem:[#allocation2 + $0x60] sm:$0xff]
          %v563 = vld [vmem:[#allocation2 + $0x68] sm:$0xff]
          %v564 = vld [vmem:[#allocation2 + $0x70] sm:$0xff]
          %v565 = vld [vmem:[#allocation2 + $0x78] sm:$0xff]
          %v566 = vld [vmem:[#allocation2 + $0x80] sm:$0xff]
          %v567 = vld [vmem:[#allocation2 + $0x88] sm:$0xff]
          %v568 = vld [vmem:[#allocation2 + $0x90] sm:$0xff]
          %v569 = vld [vmem:[#allocation2 + $0x98] sm:$0xff]
          %v570 = vld [vmem:[#allocation2 + $0xa0] sm:$0xff]
          %v571 = vld [vmem:[#allocation2 + $0xa8] sm:$0xff]
          %v572 = vld [vmem:[#allocation2 + $0xb0] sm:$0xff]
          %v573 = vld [vmem:[#allocation2 + $0xb8] sm:$0xff]
          %v574 = vld [vmem:[#allocation2 + $0xc0] sm:$0xff]
          %v575 = vld [vmem:[#allocation2 + $0xc8] sm:$0xff]
          %v576 = vld [vmem:[#allocation2 + $0xd0] sm:$0xff]
          %v577 = vld [vmem:[#allocation2 + $0xd8] sm:$0xff]
          %v578 = vld [vmem:[#allocation2 + $0xe0] sm:$0xff]
          %v579 = vld [vmem:[#allocation2 + $0xe8] sm:$0xff]
          %v580 = vld [vmem:[#allocation2 + $0xf0] sm:$0xff]
          %v581 = vld [vmem:[#allocation2 + $0xf8] sm:$0xff]
          %v582 = vld [vmem:[%s423] sm:$0xff]
          %v583 = vld [vmem:[%s423 + $0x8] sm:$0xff]
          %v584 = vld [vmem:[%s423 + $0x10] sm:$0xff]
          %v585 = vld [vmem:[%s423 + $0x18] sm:$0xff]
          %v586 = vld [vmem:[%s423 + $0x20] sm:$0xff]
          %v587 = vld [vmem:[%s423 + $0x28] sm:$0xff]
          %v588 = vld [vmem:[%s423 + $0x30] sm:$0xff]
          %v589 = vld [vmem:[%s423 + $0x38] sm:$0xff]
          %v590 = vld [vmem:[%s423 + $0x40] sm:$0xff]
          %v591 = vld [vmem:[%s423 + $0x48] sm:$0xff]
          %v592 = vld [vmem:[%s423 + $0x50] sm:$0xff]
          %v593 = vld [vmem:[%s423 + $0x58] sm:$0xff]
          %v594 = vld [vmem:[%s423 + $0x60] sm:$0xff]
          %v595 = vld [vmem:[%s423 + $0x68] sm:$0xff]
          %v596 = vld [vmem:[%s423 + $0x70] sm:$0xff]
          %v597 = vld [vmem:[%s423 + $0x78] sm:$0xff]
          %v598 = vld [vmem:[%s423 + $0x80] sm:$0xff]
          %v599 = vld [vmem:[%s423 + $0x88] sm:$0xff]
          %v600 = vld [vmem:[%s423 + $0x90] sm:$0xff]
          %v601 = vld [vmem:[%s423 + $0x98] sm:$0xff]
          %v602 = vld [vmem:[%s423 + $0xa0] sm:$0xff]
          %v603 = vld [vmem:[%s423 + $0xa8] sm:$0xff]
          %v604 = vld [vmem:[%s423 + $0xb0] sm:$0xff]
          %v605 = vld [vmem:[%s423 + $0xb8] sm:$0xff]
          %v606 = vld [vmem:[%s423 + $0xc0] sm:$0xff]
          %v607 = vld [vmem:[%s423 + $0xc8] sm:$0xff]
          %v608 = vld [vmem:[%s423 + $0xd0] sm:$0xff]
          %v609 = vld [vmem:[%s423 + $0xd8] sm:$0xff]
          %v610 = vld [vmem:[%s423 + $0xe0] sm:$0xff]
          %v611 = vld [vmem:[%s423 + $0xe8] sm:$0xff]
          %v612 = vld [vmem:[%s423 + $0xf0] sm:$0xff]
          %v613 = vld [vmem:[%s423 + $0xf8] sm:$0xff]
          %v614 = vld [vmem:[%s423 + $0x100] sm:$0xff]
          %v615 = vld [vmem:[%s423 + $0x108] sm:$0xff]
          %v616 = vld [vmem:[%s423 + $0x110] sm:$0xff]
          %v617 = vld [vmem:[%s423 + $0x118] sm:$0xff]
          %v618 = vld [vmem:[%s423 + $0x120] sm:$0xff]
          %v619 = vld [vmem:[%s423 + $0x128] sm:$0xff]
          %v620 = vld [vmem:[%s423 + $0x130] sm:$0xff]
          %v621 = vld [vmem:[%s423 + $0x138] sm:$0xff]
          %v622 = vld [vmem:[%s423 + $0x140] sm:$0xff]
          %v623 = vld [vmem:[%s423 + $0x148] sm:$0xff]
          %v624 = vld [vmem:[%s423 + $0x150] sm:$0xff]
          %v625 = vld [vmem:[%s423 + $0x158] sm:$0xff]
          %v626 = vld [vmem:[%s423 + $0x160] sm:$0xff]
          %v627 = vld [vmem:[%s423 + $0x168] sm:$0xff]
          %v628 = vld [vmem:[%s423 + $0x170] sm:$0xff]
          %v629 = vld [vmem:[%s423 + $0x178] sm:$0xff]
          %v630 = vld [vmem:[%s423 + $0x180] sm:$0xff]
          %v631 = vld [vmem:[%s423 + $0x188] sm:$0xff]
          %v632 = vld [vmem:[%s423 + $0x190] sm:$0xff]
          %v633 = vld [vmem:[%s423 + $0x198] sm:$0xff]
          %v634 = vld [vmem:[%s423 + $0x1a0] sm:$0xff]
          %v635 = vld [vmem:[%s423 + $0x1a8] sm:$0xff]
          %v636 = vld [vmem:[%s423 + $0x1b0] sm:$0xff]
          %v637 = vld [vmem:[%s423 + $0x1b8] sm:$0xff]
          %v638 = vld [vmem:[%s423 + $0x1c0] sm:$0xff]
          %v639 = vld [vmem:[%s423 + $0x1c8] sm:$0xff]
          %v640 = vld [vmem:[%s423 + $0x1d0] sm:$0xff]
          %v641 = vld [vmem:[%s423 + $0x1d8] sm:$0xff]
          %v642 = vld [vmem:[%s423 + $0x1e0] sm:$0xff]
          %v643 = vld [vmem:[%s423 + $0x1e8] sm:$0xff]
          %v644 = vld [vmem:[%s423 + $0x1f0] sm:$0xff]
          %v645 = vld [vmem:[%s423 + $0x1f8] sm:$0xff]
          %v646 = vld [vmem:[%s486] sm:$0xf]
          %v647 = vld [vmem:[%s486 + $0x4] sm:$0xf]
          %v648 = vld [vmem:[%s486 + $0x8] sm:$0xf]
          %v649 = vld [vmem:[%s486 + $0xc] sm:$0xf]
          %v650 = vld [vmem:[%s486 + $0x10] sm:$0xf]
          %v651 = vld [vmem:[%s486 + $0x14] sm:$0xf]
          %v652 = vld [vmem:[%s486 + $0x18] sm:$0xf]
          %v653 = vld [vmem:[%s486 + $0x1c] sm:$0xf]
          %v654 = vld [vmem:[%s486 + $0x20] sm:$0xf]
          %v655 = vld [vmem:[%s486 + $0x24] sm:$0xf]
          %v656 = vld [vmem:[%s486 + $0x28] sm:$0xf]
          %v657 = vld [vmem:[%s486 + $0x2c] sm:$0xf]
          %v658 = vld [vmem:[%s486 + $0x30] sm:$0xf]
          %v659 = vld [vmem:[%s486 + $0x34] sm:$0xf]
          %v660 = vld [vmem:[%s486 + $0x38] sm:$0xf]
          %v661 = vld [vmem:[%s486 + $0x3c] sm:$0xf]
          %v662 = vld [vmem:[%s486 + $0x40] sm:$0xf]
          %v663 = vld [vmem:[%s486 + $0x44] sm:$0xf]
          %v664 = vld [vmem:[%s486 + $0x48] sm:$0xf]
          %v665 = vld [vmem:[%s486 + $0x4c] sm:$0xf]
          %v666 = vld [vmem:[%s486 + $0x50] sm:$0xf]
          %v667 = vld [vmem:[%s486 + $0x54] sm:$0xf]
          %v668 = vld [vmem:[%s486 + $0x58] sm:$0xf]
          %v669 = vld [vmem:[%s486 + $0x5c] sm:$0xf]
          %v670 = vld [vmem:[%s486 + $0x60] sm:$0xf]
          %v671 = vld [vmem:[%s486 + $0x64] sm:$0xf]
          %v672 = vld [vmem:[%s486 + $0x68] sm:$0xf]
          %v673 = vld [vmem:[%s486 + $0x6c] sm:$0xf]
          %v674 = vld [vmem:[%s486 + $0x70] sm:$0xf]
          %v675 = vld [vmem:[%s486 + $0x74] sm:$0xf]
          %v676 = vld [vmem:[%s486 + $0x78] sm:$0xf]
          %v677 = vld [vmem:[%s486 + $0x7c] sm:$0xf]
          %v678 = vld [vmem:[%s486 + $0x80] sm:$0xf]
          %v679 = vld [vmem:[%s486 + $0x84] sm:$0xf]
          %v680 = vld [vmem:[%s486 + $0x88] sm:$0xf]
          %v681 = vld [vmem:[%s486 + $0x8c] sm:$0xf]
          %v682 = vld [vmem:[%s486 + $0x90] sm:$0xf]
          %v683 = vld [vmem:[%s486 + $0x94] sm:$0xf]
          %v684 = vld [vmem:[%s486 + $0x98] sm:$0xf]
          %v685 = vld [vmem:[%s486 + $0x9c] sm:$0xf]
          %v686 = vld [vmem:[%s486 + $0xa0] sm:$0xf]
          %v687 = vld [vmem:[%s486 + $0xa4] sm:$0xf]
          %v688 = vld [vmem:[%s486 + $0xa8] sm:$0xf]
          %v689 = vld [vmem:[%s486 + $0xac] sm:$0xf]
          %v690 = vld [vmem:[%s486 + $0xb0] sm:$0xf]
          %v691 = vld [vmem:[%s486 + $0xb4] sm:$0xf]
          %v692 = vld [vmem:[%s486 + $0xb8] sm:$0xf]
          %v693 = vld [vmem:[%s486 + $0xbc] sm:$0xf]
          %v694 = vld [vmem:[%s486 + $0xc0] sm:$0xf]
          %v695 = vld [vmem:[%s486 + $0xc4] sm:$0xf]
          %v696 = vld [vmem:[%s486 + $0xc8] sm:$0xf]
          %v697 = vld [vmem:[%s486 + $0xcc] sm:$0xf]
          %v698 = vld [vmem:[%s486 + $0xd0] sm:$0xf]
          %v699 = vld [vmem:[%s486 + $0xd4] sm:$0xf]
          %v700 = vld [vmem:[%s486 + $0xd8] sm:$0xf]
          %v701 = vld [vmem:[%s486 + $0xdc] sm:$0xf]
          %v702 = vld [vmem:[%s486 + $0xe0] sm:$0xf]
          %v703 = vld [vmem:[%s486 + $0xe4] sm:$0xf]
          %v704 = vld [vmem:[%s486 + $0xe8] sm:$0xf]
          %v705 = vld [vmem:[%s486 + $0xec] sm:$0xf]
          %v706 = vld [vmem:[%s486 + $0xf0] sm:$0xf]
          %v707 = vld [vmem:[%s486 + $0xf4] sm:$0xf]
          %v708 = vld [vmem:[%s486 + $0xf8] sm:$0xf]
          %v709 = vld [vmem:[%s486 + $0xfc] sm:$0xf]
          %v774 = vunpack.c.l.b16 %v582
          %v775 = vunpack.c.h.b16 %v582
          %v776 = vunpack.c.l.b16 %v583
          %v777 = vunpack.c.h.b16 %v583
          %v778 = vunpack.c.l.b16 %v584
          %v779 = vunpack.c.h.b16 %v584
          %v780 = vunpack.c.l.b16 %v585
          %v781 = vunpack.c.h.b16 %v585
          %v782 = vunpack.c.l.b16 %v586
          %v783 = vunpack.c.h.b16 %v586
          %v784 = vunpack.c.l.b16 %v587
          %v785 = vunpack.c.h.b16 %v587
          %v786 = vunpack.c.l.b16 %v588
          %v787 = vunpack.c.h.b16 %v588
          %v788 = vunpack.c.l.b16 %v589
          %v789 = vunpack.c.h.b16 %v589
          %v790 = vunpack.c.l.b16 %v590
          %v791 = vunpack.c.h.b16 %v590
          %v792 = vunpack.c.l.b16 %v591
          %v793 = vunpack.c.h.b16 %v591
          %v794 = vunpack.c.l.b16 %v592
          %v795 = vunpack.c.h.b16 %v592
          %v796 = vunpack.c.l.b16 %v593
          %v797 = vunpack.c.h.b16 %v593
          %v798 = vunpack.c.l.b16 %v594
          %v799 = vunpack.c.h.b16 %v594
          %v800 = vunpack.c.l.b16 %v595
          %v801 = vunpack.c.h.b16 %v595
          %v802 = vunpack.c.l.b16 %v596
          %v803 = vunpack.c.h.b16 %v596
          %v804 = vunpack.c.l.b16 %v597
          %v805 = vunpack.c.h.b16 %v597
          %v806 = vunpack.c.l.b16 %v598
          %v807 = vunpack.c.h.b16 %v598
          %v808 = vunpack.c.l.b16 %v599
          %v809 = vunpack.c.h.b16 %v599
          %v810 = vunpack.c.l.b16 %v600
          %v811 = vunpack.c.h.b16 %v600
          %v812 = vunpack.c.l.b16 %v601
          %v813 = vunpack.c.h.b16 %v601
          %v814 = vunpack.c.l.b16 %v602
          %v815 = vunpack.c.h.b16 %v602
          %v816 = vunpack.c.l.b16 %v603
          %v817 = vunpack.c.h.b16 %v603
          %v818 = vunpack.c.l.b16 %v604
          %v819 = vunpack.c.h.b16 %v604
          %v820 = vunpack.c.l.b16 %v605
          %v821 = vunpack.c.h.b16 %v605
          %v822 = vunpack.c.l.b16 %v606
          %v823 = vunpack.c.h.b16 %v606
          %v824 = vunpack.c.l.b16 %v607
          %v825 = vunpack.c.h.b16 %v607
          %v826 = vunpack.c.l.b16 %v608
          %v827 = vunpack.c.h.b16 %v608
          %v828 = vunpack.c.l.b16 %v609
          %v829 = vunpack.c.h.b16 %v609
          %v830 = vunpack.c.l.b16 %v610
          %v831 = vunpack.c.h.b16 %v610
          %v832 = vunpack.c.l.b16 %v611
          %v833 = vunpack.c.h.b16 %v611
          %v834 = vunpack.c.l.b16 %v612
          %v835 = vunpack.c.h.b16 %v612
          %v836 = vunpack.c.l.b16 %v613
          %v837 = vunpack.c.h.b16 %v613
          %v838 = vunpack.c.l.b16 %v614
          %v839 = vunpack.c.h.b16 %v614
          %v840 = vunpack.c.l.b16 %v615
          %v841 = vunpack.c.h.b16 %v615
          %v842 = vunpack.c.l.b16 %v616
          %v843 = vunpack.c.h.b16 %v616
          %v844 = vunpack.c.l.b16 %v617
          %v845 = vunpack.c.h.b16 %v617
          %v846 = vunpack.c.l.b16 %v618
          %v847 = vunpack.c.h.b16 %v618
          %v848 = vunpack.c.l.b16 %v619
          %v849 = vunpack.c.h.b16 %v619
          %v850 = vunpack.c.l.b16 %v620
          %v851 = vunpack.c.h.b16 %v620
          %v852 = vunpack.c.l.b16 %v621
          %v853 = vunpack.c.h.b16 %v621
          %v854 = vunpack.c.l.b16 %v622
          %v855 = vunpack.c.h.b16 %v622
          %v856 = vunpack.c.l.b16 %v623
          %v857 = vunpack.c.h.b16 %v623
          %v858 = vunpack.c.l.b16 %v624
          %v859 = vunpack.c.h.b16 %v624
          %v860 = vunpack.c.l.b16 %v625
          %v861 = vunpack.c.h.b16 %v625
          %v862 = vunpack.c.l.b16 %v626
          %v863 = vunpack.c.h.b16 %v626
          %v864 = vunpack.c.l.b16 %v627
          %v865 = vunpack.c.h.b16 %v627
          %v866 = vunpack.c.l.b16 %v628
          %v867 = vunpack.c.h.b16 %v628
          %v868 = vunpack.c.l.b16 %v629
          %v869 = vunpack.c.h.b16 %v629
          %v870 = vunpack.c.l.b16 %v630
          %v871 = vunpack.c.h.b16 %v630
          %v872 = vunpack.c.l.b16 %v631
          %v873 = vunpack.c.h.b16 %v631
          %v874 = vunpack.c.l.b16 %v632
          %v875 = vunpack.c.h.b16 %v632
          %v876 = vunpack.c.l.b16 %v633
          %v877 = vunpack.c.h.b16 %v633
          %v878 = vunpack.c.l.b16 %v634
          %v879 = vunpack.c.h.b16 %v634
          %v880 = vunpack.c.l.b16 %v635
          %v881 = vunpack.c.h.b16 %v635
          %v882 = vunpack.c.l.b16 %v636
          %v883 = vunpack.c.h.b16 %v636
          %v884 = vunpack.c.l.b16 %v637
          %v885 = vunpack.c.h.b16 %v637
          %v886 = vunpack.c.l.b16 %v638
          %v887 = vunpack.c.h.b16 %v638
          %v888 = vunpack.c.l.b16 %v639
          %v889 = vunpack.c.h.b16 %v639
          %v890 = vunpack.c.l.b16 %v640
          %v891 = vunpack.c.h.b16 %v640
          %v892 = vunpack.c.l.b16 %v641
          %v893 = vunpack.c.h.b16 %v641
          %v894 = vunpack.c.l.b16 %v642
          %v895 = vunpack.c.h.b16 %v642
          %v896 = vunpack.c.l.b16 %v643
          %v897 = vunpack.c.h.b16 %v643
          %v898 = vunpack.c.l.b16 %v644
          %v899 = vunpack.c.h.b16 %v644
          %v900 = vunpack.c.l.b16 %v645
          %v901 = vunpack.c.h.b16 %v645
          %v902 = vpack.c.b16 %v778, %v774
          %v903 = vpack.c.b16 %v779, %v775
          %v904 = vpack.c.b16 %v780, %v776
          %v905 = vpack.c.b16 %v781, %v777
          %v906 = vpack.c.b16 %v786, %v782
          %v907 = vpack.c.b16 %v787, %v783
          %v908 = vpack.c.b16 %v788, %v784
          %v909 = vpack.c.b16 %v789, %v785
          %v910 = vpack.c.b16 %v794, %v790
          %v911 = vpack.c.b16 %v795, %v791
          %v912 = vpack.c.b16 %v796, %v792
          %v913 = vpack.c.b16 %v797, %v793
          %v914 = vpack.c.b16 %v802, %v798
          %v915 = vpack.c.b16 %v803, %v799
          %v916 = vpack.c.b16 %v804, %v800
          %v917 = vpack.c.b16 %v805, %v801
          %v918 = vpack.c.b16 %v810, %v806
          %v919 = vpack.c.b16 %v811, %v807
          %v920 = vpack.c.b16 %v812, %v808
          %v921 = vpack.c.b16 %v813, %v809
          %v922 = vpack.c.b16 %v818, %v814
          %v923 = vpack.c.b16 %v819, %v815
          %v924 = vpack.c.b16 %v820, %v816
          %v925 = vpack.c.b16 %v821, %v817
          %v926 = vpack.c.b16 %v826, %v822
          %v927 = vpack.c.b16 %v827, %v823
          %v928 = vpack.c.b16 %v828, %v824
          %v929 = vpack.c.b16 %v829, %v825
          %v930 = vpack.c.b16 %v834, %v830
          %v931 = vpack.c.b16 %v835, %v831
          %v932 = vpack.c.b16 %v836, %v832
          %v933 = vpack.c.b16 %v837, %v833
          %v934 = vpack.c.b16 %v842, %v838
          %v935 = vpack.c.b16 %v843, %v839
          %v936 = vpack.c.b16 %v844, %v840
          %v937 = vpack.c.b16 %v845, %v841
          %v938 = vpack.c.b16 %v850, %v846
          %v939 = vpack.c.b16 %v851, %v847
          %v940 = vpack.c.b16 %v852, %v848
          %v941 = vpack.c.b16 %v853, %v849
          %v942 = vpack.c.b16 %v858, %v854
          %v943 = vpack.c.b16 %v859, %v855
          %v944 = vpack.c.b16 %v860, %v856
          %v945 = vpack.c.b16 %v861, %v857
          %v946 = vpack.c.b16 %v866, %v862
          %v947 = vpack.c.b16 %v867, %v863
          %v948 = vpack.c.b16 %v868, %v864
          %v949 = vpack.c.b16 %v869, %v865
          %v950 = vpack.c.b16 %v874, %v870
          %v951 = vpack.c.b16 %v875, %v871
          %v952 = vpack.c.b16 %v876, %v872
          %v953 = vpack.c.b16 %v877, %v873
          %v954 = vpack.c.b16 %v882, %v878
          %v955 = vpack.c.b16 %v883, %v879
          %v956 = vpack.c.b16 %v884, %v880
          %v957 = vpack.c.b16 %v885, %v881
          %v958 = vpack.c.b16 %v890, %v886
          %v959 = vpack.c.b16 %v891, %v887
          %v960 = vpack.c.b16 %v892, %v888
          %v961 = vpack.c.b16 %v893, %v889
          %v962 = vpack.c.b16 %v898, %v894
          %v963 = vpack.c.b16 %v899, %v895
          %v964 = vpack.c.b16 %v900, %v896
          %v965 = vpack.c.b16 %v901, %v897
          %v1094 = vunpack.c.l.b16 %v646
          %v1095 = vunpack.c.l.b16 %v647
          %v1096 = vunpack.c.l.b16 %v648
          %v1097 = vunpack.c.l.b16 %v649
          %v1098 = vunpack.c.l.b16 %v650
          %v1099 = vunpack.c.l.b16 %v651
          %v1100 = vunpack.c.l.b16 %v652
          %v1101 = vunpack.c.l.b16 %v653
          %v1102 = vunpack.c.l.b16 %v654
          %v1103 = vunpack.c.l.b16 %v655
          %v1104 = vunpack.c.l.b16 %v656
          %v1105 = vunpack.c.l.b16 %v657
          %v1106 = vunpack.c.l.b16 %v658
          %v1107 = vunpack.c.l.b16 %v659
          %v1108 = vunpack.c.l.b16 %v660
          %v1109 = vunpack.c.l.b16 %v661
          %v1110 = vunpack.c.l.b16 %v662
          %v1111 = vunpack.c.l.b16 %v663
          %v1112 = vunpack.c.l.b16 %v664
          %v1113 = vunpack.c.l.b16 %v665
          %v1114 = vunpack.c.l.b16 %v666
          %v1115 = vunpack.c.l.b16 %v667
          %v1116 = vunpack.c.l.b16 %v668
          %v1117 = vunpack.c.l.b16 %v669
          %v1118 = vunpack.c.l.b16 %v670
          %v1119 = vunpack.c.l.b16 %v671
          %v1120 = vunpack.c.l.b16 %v672
          %v1121 = vunpack.c.l.b16 %v673
          %v1122 = vunpack.c.l.b16 %v674
          %v1123 = vunpack.c.l.b16 %v675
          %v1124 = vunpack.c.l.b16 %v676
          %v1125 = vunpack.c.l.b16 %v677
          %v1126 = vunpack.c.l.b16 %v678
          %v1127 = vunpack.c.l.b16 %v679
          %v1128 = vunpack.c.l.b16 %v680
          %v1129 = vunpack.c.l.b16 %v681
          %v1130 = vunpack.c.l.b16 %v682
          %v1131 = vunpack.c.l.b16 %v683
          %v1132 = vunpack.c.l.b16 %v684
          %v1133 = vunpack.c.l.b16 %v685
          %v1134 = vunpack.c.l.b16 %v686
          %v1135 = vunpack.c.l.b16 %v687
          %v1136 = vunpack.c.l.b16 %v688
          %v1137 = vunpack.c.l.b16 %v689
          %v1138 = vunpack.c.l.b16 %v690
          %v1139 = vunpack.c.l.b16 %v691
          %v1140 = vunpack.c.l.b16 %v692
          %v1141 = vunpack.c.l.b16 %v693
          %v1142 = vunpack.c.l.b16 %v694
          %v1143 = vunpack.c.l.b16 %v695
          %v1144 = vunpack.c.l.b16 %v696
          %v1145 = vunpack.c.l.b16 %v697
          %v1146 = vunpack.c.l.b16 %v698
          %v1147 = vunpack.c.l.b16 %v699
          %v1148 = vunpack.c.l.b16 %v700
          %v1149 = vunpack.c.l.b16 %v701
          %v1150 = vunpack.c.l.b16 %v702
          %v1151 = vunpack.c.l.b16 %v703
          %v1152 = vunpack.c.l.b16 %v704
          %v1153 = vunpack.c.l.b16 %v705
          %v1154 = vunpack.c.l.b16 %v706
          %v1155 = vunpack.c.l.b16 %v707
          %v1156 = vunpack.c.l.b16 %v708
          %v1157 = vunpack.c.l.b16 %v709
          %v1158 = vpack.c.b16 %v1095, %v1094
          %v1159 = vpack.c.b16 %v1097, %v1096
          %v1160 = vpack.c.b16 %v1099, %v1098
          %v1161 = vpack.c.b16 %v1101, %v1100
          %v1162 = vpack.c.b16 %v1103, %v1102
          %v1163 = vpack.c.b16 %v1105, %v1104
          %v1164 = vpack.c.b16 %v1107, %v1106
          %v1165 = vpack.c.b16 %v1109, %v1108
          %v1166 = vpack.c.b16 %v1111, %v1110
          %v1167 = vpack.c.b16 %v1113, %v1112
          %v1168 = vpack.c.b16 %v1115, %v1114
          %v1169 = vpack.c.b16 %v1117, %v1116
          %v1170 = vpack.c.b16 %v1119, %v1118
          %v1171 = vpack.c.b16 %v1121, %v1120
          %v1172 = vpack.c.b16 %v1123, %v1122
          %v1173 = vpack.c.b16 %v1125, %v1124
          %v1174 = vpack.c.b16 %v1127, %v1126
          %v1175 = vpack.c.b16 %v1129, %v1128
          %v1176 = vpack.c.b16 %v1131, %v1130
          %v1177 = vpack.c.b16 %v1133, %v1132
          %v1178 = vpack.c.b16 %v1135, %v1134
          %v1179 = vpack.c.b16 %v1137, %v1136
          %v1180 = vpack.c.b16 %v1139, %v1138
          %v1181 = vpack.c.b16 %v1141, %v1140
          %v1182 = vpack.c.b16 %v1143, %v1142
          %v1183 = vpack.c.b16 %v1145, %v1144
          %v1184 = vpack.c.b16 %v1147, %v1146
          %v1185 = vpack.c.b16 %v1149, %v1148
          %v1186 = vpack.c.b16 %v1151, %v1150
          %v1187 = vpack.c.b16 %v1153, %v1152
          %v1188 = vpack.c.b16 %v1155, %v1154
          %v1189 = vpack.c.b16 %v1157, %v1156
          %1222 = vmatprep.subr.bf16.mxu0 0
          %1223 = vmatpush1.bf16.msra.mxu0 %v1165
          %1224 = vmatprep.subr.bf16.mxu0 0
          %1225 = vmatpush1.bf16.msra.mxu0 %v1164
          %1226 = vmatprep.subr.bf16.mxu0 0
          %1227 = vmatpush1.bf16.msra.mxu0 %v1163
          %1228 = vmatprep.subr.bf16.mxu0 0
          %1229 = vmatpush1.bf16.msra.mxu0 %v1162
          %1230 = vmatprep.subr.bf16.mxu0 0
          %1231 = vmatpush1.bf16.msra.mxu0 %v1161
          %1232 = vmatprep.subr.bf16.mxu0 0
          %1233 = vmatpush1.bf16.msra.mxu0 %v1160
          %1234 = vmatprep.subr.bf16.mxu0 0
          %1235 = vmatpush1.bf16.msra.mxu0 %v1159
          %1236 = vmatprep.subr.bf16.mxu0 0
          %1237 = vmatpush1.bf16.msra.mxu0 %v1158
          %1238 = vmatprep.subr.bf16.mxu0 0
          %1239 = vmatpush2.bf16.msra.mxu0 %v1173
          %1240 = vmatprep.subr.bf16.mxu0 0
          %1241 = vmatpush2.bf16.msra.mxu0 %v1172
          %1242 = vmatprep.subr.bf16.mxu0 0
          %1243 = vmatpush2.bf16.msra.mxu0 %v1171
          %1244 = vmatprep.subr.bf16.mxu0 0
          %1245 = vmatpush2.bf16.msra.mxu0 %v1170
          %1246 = vmatprep.subr.bf16.mxu0 0
          %1247 = vmatpush2.bf16.msra.mxu0 %v1169
          %1248 = vmatprep.subr.bf16.mxu0 0
          %1249 = vmatpush2.bf16.msra.mxu0 %v1168
          %1250 = vmatprep.subr.bf16.mxu0 0
          %1251 = vmatpush2.bf16.msra.mxu0 %v1167
          %1252 = vmatprep.subr.bf16.mxu0 0
          %1253 = vmatpush2.bf16.msra.mxu0 %v1166
          %1254 = vmatprep.mubr.bf16.mxu0 %v903
          %1255 = vmatmul.mubr.bf16.gmra.mxu0 %v902
          %v1256 = vpop.f32.mrf.mxu0
          %v1257 = vadd.f32 0.0, %v1256
          %v1258 = vpop.f32.mrf.mxu0
          %v1259 = vpop.f32.mrf.mxu0
          %v1260 = vadd.f32 0.0, %v1259
          %v1261 = vpop.f32.mrf.mxu0
          %1262 = vmatprep.mubr.bf16.mxu0 %v907
          %1263 = vmatmul.mubr.bf16.gmra.mxu0 %v906
          %v1264 = vpop.f32.mrf.mxu0
          %v1265 = vadd.f32 0.0, %v1264
          %v1266 = vpop.f32.mrf.mxu0
          %v1267 = vpop.f32.mrf.mxu0
          %v1268 = vadd.f32 0.0, %v1267
          %v1269 = vpop.f32.mrf.mxu0
          %1270 = vmatprep.mubr.bf16.mxu0 %v911
          %1271 = vmatmul.mubr.bf16.gmra.mxu0 %v910
          %v1272 = vpop.f32.mrf.mxu0
          %v1273 = vadd.f32 0.0, %v1272
          %v1274 = vpop.f32.mrf.mxu0
          %v1275 = vpop.f32.mrf.mxu0
          %v1276 = vadd.f32 0.0, %v1275
          %v1277 = vpop.f32.mrf.mxu0
          %1278 = vmatprep.mubr.bf16.mxu0 %v915
          %1279 = vmatmul.mubr.bf16.gmra.mxu0 %v914
          %v1280 = vpop.f32.mrf.mxu0
          %v1281 = vadd.f32 0.0, %v1280
          %v1282 = vpop.f32.mrf.mxu0
          %v1283 = vpop.f32.mrf.mxu0
          %v1284 = vadd.f32 0.0, %v1283
          %v1285 = vpop.f32.mrf.mxu0
          %1286 = vmatprep.mubr.bf16.mxu0 %v919
          %1287 = vmatmul.mubr.bf16.gmra.mxu0 %v918
          %v1288 = vpop.f32.mrf.mxu0
          %v1289 = vadd.f32 0.0, %v1288
          %v1290 = vpop.f32.mrf.mxu0
          %v1291 = vpop.f32.mrf.mxu0
          %v1292 = vadd.f32 0.0, %v1291
          %v1293 = vpop.f32.mrf.mxu0
          %1294 = vmatprep.mubr.bf16.mxu0 %v923
          %1295 = vmatmul.mubr.bf16.gmra.mxu0 %v922
          %v1296 = vpop.f32.mrf.mxu0
          %v1297 = vadd.f32 0.0, %v1296
          %v1298 = vpop.f32.mrf.mxu0
          %v1299 = vpop.f32.mrf.mxu0
          %v1300 = vadd.f32 0.0, %v1299
          %v1301 = vpop.f32.mrf.mxu0
          %1302 = vmatprep.mubr.bf16.mxu0 %v927
          %1303 = vmatmul.mubr.bf16.gmra.mxu0 %v926
          %v1304 = vpop.f32.mrf.mxu0
          %v1305 = vadd.f32 0.0, %v1304
          %v1306 = vpop.f32.mrf.mxu0
          %v1307 = vpop.f32.mrf.mxu0
          %v1308 = vadd.f32 0.0, %v1307
          %v1309 = vpop.f32.mrf.mxu0
          %1310 = vmatprep.mubr.bf16.mxu0 %v931
          %1311 = vmatmul.mubr.bf16.gmra.mxu0 %v930
          %v1312 = vpop.f32.mrf.mxu0
          %v1313 = vadd.f32 0.0, %v1312
          %v1314 = vpop.f32.mrf.mxu0
          %v1315 = vpop.f32.mrf.mxu0
          %v1316 = vadd.f32 0.0, %v1315
          %v1317 = vpop.f32.mrf.mxu0
          %1318 = vmatprep.mubr.bf16.mxu0 %v935
          %1319 = vmatmul.mubr.bf16.gmra.mxu0 %v934
          %v1320 = vpop.f32.mrf.mxu0
          %v1321 = vadd.f32 0.0, %v1320
          %v1322 = vpop.f32.mrf.mxu0
          %v1323 = vpop.f32.mrf.mxu0
          %v1324 = vadd.f32 0.0, %v1323
          %v1325 = vpop.f32.mrf.mxu0
          %1326 = vmatprep.mubr.bf16.mxu0 %v939
          %1327 = vmatmul.mubr.bf16.gmra.mxu0 %v938
          %v1328 = vpop.f32.mrf.mxu0
          %v1329 = vadd.f32 0.0, %v1328
          %v1330 = vpop.f32.mrf.mxu0
          %v1331 = vpop.f32.mrf.mxu0
          %v1332 = vadd.f32 0.0, %v1331
          %v1333 = vpop.f32.mrf.mxu0
          %1334 = vmatprep.mubr.bf16.mxu0 %v943
          %1335 = vmatmul.mubr.bf16.gmra.mxu0 %v942
          %v1336 = vpop.f32.mrf.mxu0
          %v1337 = vadd.f32 0.0, %v1336
          %v1338 = vpop.f32.mrf.mxu0
          %v1339 = vpop.f32.mrf.mxu0
          %v1340 = vadd.f32 0.0, %v1339
          %v1341 = vpop.f32.mrf.mxu0
          %1342 = vmatprep.mubr.bf16.mxu0 %v947
          %1343 = vmatmul.mubr.bf16.gmra.mxu0 %v946
          %v1344 = vpop.f32.mrf.mxu0
          %v1345 = vadd.f32 0.0, %v1344
          %v1346 = vpop.f32.mrf.mxu0
          %v1347 = vpop.f32.mrf.mxu0
          %v1348 = vadd.f32 0.0, %v1347
          %v1349 = vpop.f32.mrf.mxu0
          %1350 = vmatprep.mubr.bf16.mxu0 %v951
          %1351 = vmatmul.mubr.bf16.gmra.mxu0 %v950
          %v1352 = vpop.f32.mrf.mxu0
          %v1353 = vadd.f32 0.0, %v1352
          %v1354 = vpop.f32.mrf.mxu0
          %v1355 = vpop.f32.mrf.mxu0
          %v1356 = vadd.f32 0.0, %v1355
          %v1357 = vpop.f32.mrf.mxu0
          %1358 = vmatprep.mubr.bf16.mxu0 %v955
          %1359 = vmatmul.mubr.bf16.gmra.mxu0 %v954
          %v1360 = vpop.f32.mrf.mxu0
          %v1361 = vadd.f32 0.0, %v1360
          %v1362 = vpop.f32.mrf.mxu0
          %v1363 = vpop.f32.mrf.mxu0
          %v1364 = vadd.f32 0.0, %v1363
          %v1365 = vpop.f32.mrf.mxu0
          %1366 = vmatprep.mubr.bf16.mxu0 %v959
          %1367 = vmatmul.mubr.bf16.gmra.mxu0 %v958
          %v1368 = vpop.f32.mrf.mxu0
          %v1369 = vadd.f32 0.0, %v1368
          %v1370 = vpop.f32.mrf.mxu0
          %v1371 = vpop.f32.mrf.mxu0
          %v1372 = vadd.f32 0.0, %v1371
          %v1373 = vpop.f32.mrf.mxu0
          %1374 = vmatprep.mubr.bf16.mxu0 %v963
          %1375 = vmatmul.mubr.bf16.gmra.mxu0 %v962
          %v1376 = vpop.f32.mrf.mxu0
          %v1377 = vadd.f32 0.0, %v1376
          %v1378 = vpop.f32.mrf.mxu0
          %v1379 = vpop.f32.mrf.mxu0
          %v1380 = vadd.f32 0.0, %v1379
          %v1381 = vpop.f32.mrf.mxu0
          %1382 = vdwg.mxu0
          %1383 = vmatprep.subr.bf16.mxu0 0
          %1384 = vmatpush1.bf16.msra.mxu0 %v1181
          %1385 = vmatprep.subr.bf16.mxu0 0
          %1386 = vmatpush1.bf16.msra.mxu0 %v1180
          %1387 = vmatprep.subr.bf16.mxu0 0
          %1388 = vmatpush1.bf16.msra.mxu0 %v1179
          %1389 = vmatprep.subr.bf16.mxu0 0
          %1390 = vmatpush1.bf16.msra.mxu0 %v1178
          %1391 = vmatprep.subr.bf16.mxu0 0
          %1392 = vmatpush1.bf16.msra.mxu0 %v1177
          %1393 = vmatprep.subr.bf16.mxu0 0
          %1394 = vmatpush1.bf16.msra.mxu0 %v1176
          %1395 = vmatprep.subr.bf16.mxu0 0
          %1396 = vmatpush1.bf16.msra.mxu0 %v1175
          %1397 = vmatprep.subr.bf16.mxu0 0
          %1398 = vmatpush1.bf16.msra.mxu0 %v1174
          %1399 = vmatprep.subr.bf16.mxu0 0
          %1400 = vmatpush2.bf16.msra.mxu0 %v1189
          %1401 = vmatprep.subr.bf16.mxu0 0
          %1402 = vmatpush2.bf16.msra.mxu0 %v1188
          %1403 = vmatprep.subr.bf16.mxu0 0
          %1404 = vmatpush2.bf16.msra.mxu0 %v1187
          %1405 = vmatprep.subr.bf16.mxu0 0
          %1406 = vmatpush2.bf16.msra.mxu0 %v1186
          %1407 = vmatprep.subr.bf16.mxu0 0
          %1408 = vmatpush2.bf16.msra.mxu0 %v1185
          %1409 = vmatprep.subr.bf16.mxu0 0
          %1410 = vmatpush2.bf16.msra.mxu0 %v1184
          %1411 = vmatprep.subr.bf16.mxu0 0
          %1412 = vmatpush2.bf16.msra.mxu0 %v1183
          %1413 = vmatprep.subr.bf16.mxu0 0
          %1414 = vmatpush2.bf16.msra.mxu0 %v1182
          %1415 = vmatprep.mubr.bf16.mxu0 %v905
          %1416 = vmatmul.mubr.bf16.gmra.mxu0 %v904
          %v1417 = vpop.f32.mrf.mxu0
          %v1418 = vadd.f32 %v1257, %v1417
          %v1419 = vpop.f32.mrf.mxu0
          %v1420 = vpop.f32.mrf.mxu0
          %v1421 = vadd.f32 %v1260, %v1420
          %v1422 = vpop.f32.mrf.mxu0
          %1423 = vmatprep.mubr.bf16.mxu0 %v909
          %1424 = vmatmul.mubr.bf16.gmra.mxu0 %v908
          %v1425 = vpop.f32.mrf.mxu0
          %v1426 = vadd.f32 %v1265, %v1425
          %v1427 = vpop.f32.mrf.mxu0
          %v1428 = vpop.f32.mrf.mxu0
          %v1429 = vadd.f32 %v1268, %v1428
          %v1430 = vpop.f32.mrf.mxu0
          %1431 = vmatprep.mubr.bf16.mxu0 %v913
          %1432 = vmatmul.mubr.bf16.gmra.mxu0 %v912
          %v1433 = vpop.f32.mrf.mxu0
          %v1434 = vadd.f32 %v1273, %v1433
          %v1435 = vpop.f32.mrf.mxu0
          %v1436 = vpop.f32.mrf.mxu0
          %v1437 = vadd.f32 %v1276, %v1436
          %v1438 = vpop.f32.mrf.mxu0
          %1439 = vmatprep.mubr.bf16.mxu0 %v917
          %1440 = vmatmul.mubr.bf16.gmra.mxu0 %v916
          %v1441 = vpop.f32.mrf.mxu0
          %v1442 = vadd.f32 %v1281, %v1441
          %v1443 = vpop.f32.mrf.mxu0
          %v1444 = vpop.f32.mrf.mxu0
          %v1445 = vadd.f32 %v1284, %v1444
          %v1446 = vpop.f32.mrf.mxu0
          %1447 = vmatprep.mubr.bf16.mxu0 %v921
          %1448 = vmatmul.mubr.bf16.gmra.mxu0 %v920
          %v1449 = vpop.f32.mrf.mxu0
          %v1450 = vadd.f32 %v1289, %v1449
          %v1451 = vpop.f32.mrf.mxu0
          %v1452 = vpop.f32.mrf.mxu0
          %v1453 = vadd.f32 %v1292, %v1452
          %v1454 = vpop.f32.mrf.mxu0
          %1455 = vmatprep.mubr.bf16.mxu0 %v925
          %1456 = vmatmul.mubr.bf16.gmra.mxu0 %v924
          %v1457 = vpop.f32.mrf.mxu0
          %v1458 = vadd.f32 %v1297, %v1457
          %v1459 = vpop.f32.mrf.mxu0
          %v1460 = vpop.f32.mrf.mxu0
          %v1461 = vadd.f32 %v1300, %v1460
          %v1462 = vpop.f32.mrf.mxu0
          %1463 = vmatprep.mubr.bf16.mxu0 %v929
          %1464 = vmatmul.mubr.bf16.gmra.mxu0 %v928
          %v1465 = vpop.f32.mrf.mxu0
          %v1466 = vadd.f32 %v1305, %v1465
          %v1467 = vpop.f32.mrf.mxu0
          %v1468 = vpop.f32.mrf.mxu0
          %v1469 = vadd.f32 %v1308, %v1468
          %v1470 = vpop.f32.mrf.mxu0
          %1471 = vmatprep.mubr.bf16.mxu0 %v933
          %1472 = vmatmul.mubr.bf16.gmra.mxu0 %v932
          %v1473 = vpop.f32.mrf.mxu0
          %v1474 = vadd.f32 %v1313, %v1473
          %v1475 = vpop.f32.mrf.mxu0
          %v1476 = vpop.f32.mrf.mxu0
          %v1477 = vadd.f32 %v1316, %v1476
          %v1478 = vpop.f32.mrf.mxu0
          %1479 = vmatprep.mubr.bf16.mxu0 %v937
          %1480 = vmatmul.mubr.bf16.gmra.mxu0 %v936
          %v1481 = vpop.f32.mrf.mxu0
          %v1482 = vadd.f32 %v1321, %v1481
          %v1483 = vpop.f32.mrf.mxu0
          %v1484 = vpop.f32.mrf.mxu0
          %v1485 = vadd.f32 %v1324, %v1484
          %v1486 = vpop.f32.mrf.mxu0
          %1487 = vmatprep.mubr.bf16.mxu0 %v941
          %1488 = vmatmul.mubr.bf16.gmra.mxu0 %v940
          %v1489 = vpop.f32.mrf.mxu0
          %v1490 = vadd.f32 %v1329, %v1489
          %v1491 = vpop.f32.mrf.mxu0
          %v1492 = vpop.f32.mrf.mxu0
          %v1493 = vadd.f32 %v1332, %v1492
          %v1494 = vpop.f32.mrf.mxu0
          %1495 = vmatprep.mubr.bf16.mxu0 %v945
          %1496 = vmatmul.mubr.bf16.gmra.mxu0 %v944
          %v1497 = vpop.f32.mrf.mxu0
          %v1498 = vadd.f32 %v1337, %v1497
          %v1499 = vpop.f32.mrf.mxu0
          %v1500 = vpop.f32.mrf.mxu0
          %v1501 = vadd.f32 %v1340, %v1500
          %v1502 = vpop.f32.mrf.mxu0
          %1503 = vmatprep.mubr.bf16.mxu0 %v949
          %1504 = vmatmul.mubr.bf16.gmra.mxu0 %v948
          %v1505 = vpop.f32.mrf.mxu0
          %v1506 = vadd.f32 %v1345, %v1505
          %v1507 = vpop.f32.mrf.mxu0
          %v1508 = vpop.f32.mrf.mxu0
          %v1509 = vadd.f32 %v1348, %v1508
          %v1510 = vpop.f32.mrf.mxu0
          %1511 = vmatprep.mubr.bf16.mxu0 %v953
          %1512 = vmatmul.mubr.bf16.gmra.mxu0 %v952
          %v1513 = vpop.f32.mrf.mxu0
          %v1514 = vadd.f32 %v1353, %v1513
          %v1515 = vpop.f32.mrf.mxu0
          %v1516 = vpop.f32.mrf.mxu0
          %v1517 = vadd.f32 %v1356, %v1516
          %v1518 = vpop.f32.mrf.mxu0
          %1519 = vmatprep.mubr.bf16.mxu0 %v957
          %1520 = vmatmul.mubr.bf16.gmra.mxu0 %v956
          %v1521 = vpop.f32.mrf.mxu0
          %v1522 = vadd.f32 %v1361, %v1521
          %v1523 = vpop.f32.mrf.mxu0
          %v1524 = vpop.f32.mrf.mxu0
          %v1525 = vadd.f32 %v1364, %v1524
          %v1526 = vpop.f32.mrf.mxu0
          %1527 = vmatprep.mubr.bf16.mxu0 %v961
          %1528 = vmatmul.mubr.bf16.gmra.mxu0 %v960
          %v1529 = vpop.f32.mrf.mxu0
          %v1530 = vadd.f32 %v1369, %v1529
          %v1531 = vpop.f32.mrf.mxu0
          %v1532 = vpop.f32.mrf.mxu0
          %v1533 = vadd.f32 %v1372, %v1532
          %v1534 = vpop.f32.mrf.mxu0
          %1535 = vmatprep.mubr.bf16.mxu0 %v965
          %1536 = vmatmul.mubr.bf16.gmra.mxu0 %v964
          %v1537 = vpop.f32.mrf.mxu0
          %v1538 = vadd.f32 %v1377, %v1537
          %v1539 = vpop.f32.mrf.mxu0
          %v1540 = vpop.f32.mrf.mxu0
          %v1541 = vadd.f32 %v1380, %v1540
          %v1542 = vpop.f32.mrf.mxu0
          %1543 = vdwg.mxu0
          %v1544 = vadd.f32 %v550, %v1418
          %v1545 = vadd.f32 %v551, %v1421
          %v1546 = vadd.f32 %v552, %v1426
          %v1547 = vadd.f32 %v553, %v1429
          %v1548 = vadd.f32 %v554, %v1434
          %v1549 = vadd.f32 %v555, %v1437
          %v1550 = vadd.f32 %v556, %v1442
          %v1551 = vadd.f32 %v557, %v1445
          %v1552 = vadd.f32 %v558, %v1450
          %v1553 = vadd.f32 %v559, %v1453
          %v1554 = vadd.f32 %v560, %v1458
          %v1555 = vadd.f32 %v561, %v1461
          %v1556 = vadd.f32 %v562, %v1466
          %v1557 = vadd.f32 %v563, %v1469
          %v1558 = vadd.f32 %v564, %v1474
          %v1559 = vadd.f32 %v565, %v1477
          %v1560 = vadd.f32 %v566, %v1482
          %v1561 = vadd.f32 %v567, %v1485
          %v1562 = vadd.f32 %v568, %v1490
          %v1563 = vadd.f32 %v569, %v1493
          %v1564 = vadd.f32 %v570, %v1498
          %v1565 = vadd.f32 %v571, %v1501
          %v1566 = vadd.f32 %v572, %v1506
          %v1567 = vadd.f32 %v573, %v1509
          %v1568 = vadd.f32 %v574, %v1514
          %v1569 = vadd.f32 %v575, %v1517
          %v1570 = vadd.f32 %v576, %v1522
          %v1571 = vadd.f32 %v577, %v1525
          %v1572 = vadd.f32 %v578, %v1530
          %v1573 = vadd.f32 %v579, %v1533
          %v1574 = vadd.f32 %v580, %v1538
          %v1575 = vadd.f32 %v581, %v1541
          %1576 = vst [vmem:[#allocation2] sm:$0xff] %v1544
          %1577 = vst [vmem:[#allocation2 + $0x8] sm:$0xff] %v1545
          %1578 = vst [vmem:[#allocation2 + $0x10] sm:$0xff] %v1546
          %1579 = vst [vmem:[#allocation2 + $0x18] sm:$0xff] %v1547
          %1580 = vst [vmem:[#allocation2 + $0x20] sm:$0xff] %v1548
          %1581 = vst [vmem:[#allocation2 + $0x28] sm:$0xff] %v1549
          %1582 = vst [vmem:[#allocation2 + $0x30] sm:$0xff] %v1550
          %1583 = vst [vmem:[#allocation2 + $0x38] sm:$0xff] %v1551
          %1584 = vst [vmem:[#allocation2 + $0x40] sm:$0xff] %v1552
          %1585 = vst [vmem:[#allocation2 + $0x48] sm:$0xff] %v1553
          %1586 = vst [vmem:[#allocation2 + $0x50] sm:$0xff] %v1554
          %1587 = vst [vmem:[#allocation2 + $0x58] sm:$0xff] %v1555
          %1588 = vst [vmem:[#allocation2 + $0x60] sm:$0xff] %v1556
          %1589 = vst [vmem:[#allocation2 + $0x68] sm:$0xff] %v1557
          %1590 = vst [vmem:[#allocation2 + $0x70] sm:$0xff] %v1558
          %1591 = vst [vmem:[#allocation2 + $0x78] sm:$0xff] %v1559
          %1592 = vst [vmem:[#allocation2 + $0x80] sm:$0xff] %v1560
          %1593 = vst [vmem:[#allocation2 + $0x88] sm:$0xff] %v1561
          %1594 = vst [vmem:[#allocation2 + $0x90] sm:$0xff] %v1562
          %1595 = vst [vmem:[#allocation2 + $0x98] sm:$0xff] %v1563
          %1596 = vst [vmem:[#allocation2 + $0xa0] sm:$0xff] %v1564
          %1597 = vst [vmem:[#allocation2 + $0xa8] sm:$0xff] %v1565
          %1598 = vst [vmem:[#allocation2 + $0xb0] sm:$0xff] %v1566
          %1599 = vst [vmem:[#allocation2 + $0xb8] sm:$0xff] %v1567
          %1600 = vst [vmem:[#allocation2 + $0xc0] sm:$0xff] %v1568
          %1601 = vst [vmem:[#allocation2 + $0xc8] sm:$0xff] %v1569
          %1602 = vst [vmem:[#allocation2 + $0xd0] sm:$0xff] %v1570
          %1603 = vst [vmem:[#allocation2 + $0xd8] sm:$0xff] %v1571
          %1604 = vst [vmem:[#allocation2 + $0xe0] sm:$0xff] %v1572
          %1605 = vst [vmem:[#allocation2 + $0xe8] sm:$0xff] %v1573
          %1606 = vst [vmem:[#allocation2 + $0xf0] sm:$0xff] %v1574
          %1607 = vst [vmem:[#allocation2 + $0xf8] sm:$0xff] %v1575
        $region67: #{model_forward.4} parent=54 // pred_fallthru
          _
        %p1608 = scmp.eq.s32.totalorder %s32, 1
        // Predicated region
        $region68: #{model_forward.4} parent=54 // pred_check
          %p1609 = pneg %p1608
        $region69: #{model_forward.4} parent=54 // pred_check_branch
          %1611 = sbr.rel (%p1609) target = $region71
        $region70: #{model_forward.4} parent=54 // pred_region
          %v1612 = vld [vmem:[%s500] sm:$0xff]
          %v1613 = vld [vmem:[%s500 + $0x8] sm:$0xff]
          %v1614 = vld [vmem:[%s500 + $0x10] sm:$0xff]
          %v1615 = vld [vmem:[%s500 + $0x18] sm:$0xff]
          %v1616 = vld [vmem:[%s500 + $0x20] sm:$0xff]
          %v1617 = vld [vmem:[%s500 + $0x28] sm:$0xff]
          %v1618 = vld [vmem:[%s500 + $0x30] sm:$0xff]
          %v1619 = vld [vmem:[%s500 + $0x38] sm:$0xff]
          %v1620 = vld [vmem:[%s500 + $0x40] sm:$0xff]
          %v1621 = vld [vmem:[%s500 + $0x48] sm:$0xff]
          %v1622 = vld [vmem:[%s500 + $0x50] sm:$0xff]
          %v1623 = vld [vmem:[%s500 + $0x58] sm:$0xff]
          %v1624 = vld [vmem:[%s500 + $0x60] sm:$0xff]
          %v1625 = vld [vmem:[%s500 + $0x68] sm:$0xff]
          %v1626 = vld [vmem:[%s500 + $0x70] sm:$0xff]
          %v1627 = vld [vmem:[%s500 + $0x78] sm:$0xff]
          %v1628 = vld [vmem:[%s500 + $0x80] sm:$0xff]
          %v1629 = vld [vmem:[%s500 + $0x88] sm:$0xff]
          %v1630 = vld [vmem:[%s500 + $0x90] sm:$0xff]
          %v1631 = vld [vmem:[%s500 + $0x98] sm:$0xff]
          %v1632 = vld [vmem:[%s500 + $0xa0] sm:$0xff]
          %v1633 = vld [vmem:[%s500 + $0xa8] sm:$0xff]
          %v1634 = vld [vmem:[%s500 + $0xb0] sm:$0xff]
          %v1635 = vld [vmem:[%s500 + $0xb8] sm:$0xff]
          %v1636 = vld [vmem:[%s500 + $0xc0] sm:$0xff]
          %v1637 = vld [vmem:[%s500 + $0xc8] sm:$0xff]
          %v1638 = vld [vmem:[%s500 + $0xd0] sm:$0xff]
          %v1639 = vld [vmem:[%s500 + $0xd8] sm:$0xff]
          %v1640 = vld [vmem:[%s500 + $0xe0] sm:$0xff]
          %v1641 = vld [vmem:[%s500 + $0xe8] sm:$0xff]
          %v1642 = vld [vmem:[%s500 + $0xf0] sm:$0xff]
          %v1643 = vld [vmem:[%s500 + $0xf8] sm:$0xff]
          %v1644 = vld [vmem:[#allocation2] sm:$0xff]
          %v1645 = vld [vmem:[#allocation2 + $0x8] sm:$0xff]
          %v1646 = vld [vmem:[#allocation2 + $0x10] sm:$0xff]
          %v1647 = vld [vmem:[#allocation2 + $0x18] sm:$0xff]
          %v1648 = vld [vmem:[#allocation2 + $0x20] sm:$0xff]
          %v1649 = vld [vmem:[#allocation2 + $0x28] sm:$0xff]
          %v1650 = vld [vmem:[#allocation2 + $0x30] sm:$0xff]
          %v1651 = vld [vmem:[#allocation2 + $0x38] sm:$0xff]
          %v1652 = vld [vmem:[#allocation2 + $0x40] sm:$0xff]
          %v1653 = vld [vmem:[#allocation2 + $0x48] sm:$0xff]
          %v1654 = vld [vmem:[#allocation2 + $0x50] sm:$0xff]
          %v1655 = vld [vmem:[#allocation2 + $0x58] sm:$0xff]
          %v1656 = vld [vmem:[#allocation2 + $0x60] sm:$0xff]
          %v1657 = vld [vmem:[#allocation2 + $0x68] sm:$0xff]
          %v1658 = vld [vmem:[#allocation2 + $0x70] sm:$0xff]
          %v1659 = vld [vmem:[#allocation2 + $0x78] sm:$0xff]
          %v1660 = vld [vmem:[#allocation2 + $0x80] sm:$0xff]
          %v1661 = vld [vmem:[#allocation2 + $0x88] sm:$0xff]
          %v1662 = vld [vmem:[#allocation2 + $0x90] sm:$0xff]
          %v1663 = vld [vmem:[#allocation2 + $0x98] sm:$0xff]
          %v1664 = vld [vmem:[#allocation2 + $0xa0] sm:$0xff]
          %v1665 = vld [vmem:[#allocation2 + $0xa8] sm:$0xff]
          %v1666 = vld [vmem:[#allocation2 + $0xb0] sm:$0xff]
          %v1667 = vld [vmem:[#allocation2 + $0xb8] sm:$0xff]
          %v1668 = vld [vmem:[#allocation2 + $0xc0] sm:$0xff]
          %v1669 = vld [vmem:[#allocation2 + $0xc8] sm:$0xff]
          %v1670 = vld [vmem:[#allocation2 + $0xd0] sm:$0xff]
          %v1671 = vld [vmem:[#allocation2 + $0xd8] sm:$0xff]
          %v1672 = vld [vmem:[#allocation2 + $0xe0] sm:$0xff]
          %v1673 = vld [vmem:[#allocation2 + $0xe8] sm:$0xff]
          %v1674 = vld [vmem:[#allocation2 + $0xf0] sm:$0xff]
          %v1675 = vld [vmem:[#allocation2 + $0xf8] sm:$0xff]
          %v1676 = vadd.f32 %v1612, %v1644
          %v1677 = vadd.f32 %v1613, %v1645
          %v1678 = vadd.f32 %v1614, %v1646
          %v1679 = vadd.f32 %v1615, %v1647
          %v1680 = vadd.f32 %v1616, %v1648
          %v1681 = vadd.f32 %v1617, %v1649
          %v1682 = vadd.f32 %v1618, %v1650
          %v1683 = vadd.f32 %v1619, %v1651
          %v1684 = vadd.f32 %v1620, %v1652
          %v1685 = vadd.f32 %v1621, %v1653
          %v1686 = vadd.f32 %v1622, %v1654
          %v1687 = vadd.f32 %v1623, %v1655
          %v1688 = vadd.f32 %v1624, %v1656
          %v1689 = vadd.f32 %v1625, %v1657
          %v1690 = vadd.f32 %v1626, %v1658
          %v1691 = vadd.f32 %v1627, %v1659
          %v1692 = vadd.f32 %v1628, %v1660
          %v1693 = vadd.f32 %v1629, %v1661
          %v1694 = vadd.f32 %v1630, %v1662
          %v1695 = vadd.f32 %v1631, %v1663
          %v1696 = vadd.f32 %v1632, %v1664
          %v1697 = vadd.f32 %v1633, %v1665
          %v1698 = vadd.f32 %v1634, %v1666
          %v1699 = vadd.f32 %v1635, %v1667
          %v1700 = vadd.f32 %v1636, %v1668
          %v1701 = vadd.f32 %v1637, %v1669
          %v1702 = vadd.f32 %v1638, %v1670
          %v1703 = vadd.f32 %v1639, %v1671
          %v1704 = vadd.f32 %v1640, %v1672
          %v1705 = vadd.f32 %v1641, %v1673
          %v1706 = vadd.f32 %v1642, %v1674
          %v1707 = vadd.f32 %v1643, %v1675
          %v1708 = vld [vmem:[%s5] sm:$0x1]
          %v1710 = vlaneseq
          %v1711 = vshrl.u32 %v1710, 7
          %v1712 = vsub.s32 0, %v1711
          %v1713 = vrot.slane %v1708, %v1712
          %v1715 = vadd.f32 %v1676, %v1713
          %v1716 = vadd.f32 %v1677, %v1713
          %v1717 = vadd.f32 %v1678, %v1713
          %v1718 = vadd.f32 %v1679, %v1713
          %v1719 = vadd.f32 %v1680, %v1713
          %v1720 = vadd.f32 %v1681, %v1713
          %v1721 = vadd.f32 %v1682, %v1713
          %v1722 = vadd.f32 %v1683, %v1713
          %v1723 = vadd.f32 %v1684, %v1713
          %v1724 = vadd.f32 %v1685, %v1713
          %v1725 = vadd.f32 %v1686, %v1713
          %v1726 = vadd.f32 %v1687, %v1713
          %v1727 = vadd.f32 %v1688, %v1713
          %v1728 = vadd.f32 %v1689, %v1713
          %v1729 = vadd.f32 %v1690, %v1713
          %v1730 = vadd.f32 %v1691, %v1713
          %v1731 = vadd.f32 %v1692, %v1713
          %v1732 = vadd.f32 %v1693, %v1713
          %v1733 = vadd.f32 %v1694, %v1713
          %v1734 = vadd.f32 %v1695, %v1713
          %v1735 = vadd.f32 %v1696, %v1713
          %v1736 = vadd.f32 %v1697, %v1713
          %v1737 = vadd.f32 %v1698, %v1713
          %v1738 = vadd.f32 %v1699, %v1713
          %v1739 = vadd.f32 %v1700, %v1713
          %v1740 = vadd.f32 %v1701, %v1713
          %v1741 = vadd.f32 %v1702, %v1713
          %v1742 = vadd.f32 %v1703, %v1713
          %v1743 = vadd.f32 %v1704, %v1713
          %v1744 = vadd.f32 %v1705, %v1713
          %v1745 = vadd.f32 %v1706, %v1713
          %v1746 = vadd.f32 %v1707, %v1713
          %v1747 = vmax.f32 %v1715, 0.0
          %v1748 = vmax.f32 %v1716, 0.0
          %v1749 = vmax.f32 %v1717, 0.0
          %v1750 = vmax.f32 %v1718, 0.0
          %v1751 = vmax.f32 %v1719, 0.0
          %v1752 = vmax.f32 %v1720, 0.0
          %v1753 = vmax.f32 %v1721, 0.0
          %v1754 = vmax.f32 %v1722, 0.0
          %v1755 = vmax.f32 %v1723, 0.0
          %v1756 = vmax.f32 %v1724, 0.0
          %v1757 = vmax.f32 %v1725, 0.0
          %v1758 = vmax.f32 %v1726, 0.0
          %v1759 = vmax.f32 %v1727, 0.0
          %v1760 = vmax.f32 %v1728, 0.0
          %v1761 = vmax.f32 %v1729, 0.0
          %v1762 = vmax.f32 %v1730, 0.0
          %v1763 = vmax.f32 %v1731, 0.0
          %v1764 = vmax.f32 %v1732, 0.0
          %v1765 = vmax.f32 %v1733, 0.0
          %v1766 = vmax.f32 %v1734, 0.0
          %v1767 = vmax.f32 %v1735, 0.0
          %v1768 = vmax.f32 %v1736, 0.0
          %v1769 = vmax.f32 %v1737, 0.0
          %v1770 = vmax.f32 %v1738, 0.0
          %v1771 = vmax.f32 %v1739, 0.0
          %v1772 = vmax.f32 %v1740, 0.0
          %v1773 = vmax.f32 %v1741, 0.0
          %v1774 = vmax.f32 %v1742, 0.0
          %v1775 = vmax.f32 %v1743, 0.0
          %v1776 = vmax.f32 %v1744, 0.0
          %v1777 = vmax.f32 %v1745, 0.0
          %v1778 = vmax.f32 %v1746, 0.0
          %1779 = vst [vmem:[%s506] sm:$0xff] %v1747
          %1780 = vst [vmem:[%s506 + $0x8] sm:$0xff] %v1748
          %1781 = vst [vmem:[%s506 + $0x10] sm:$0xff] %v1749
          %1782 = vst [vmem:[%s506 + $0x18] sm:$0xff] %v1750
          %1783 = vst [vmem:[%s506 + $0x20] sm:$0xff] %v1751
          %1784 = vst [vmem:[%s506 + $0x28] sm:$0xff] %v1752
          %1785 = vst [vmem:[%s506 + $0x30] sm:$0xff] %v1753
          %1786 = vst [vmem:[%s506 + $0x38] sm:$0xff] %v1754
          %1787 = vst [vmem:[%s506 + $0x40] sm:$0xff] %v1755
          %1788 = vst [vmem:[%s506 + $0x48] sm:$0xff] %v1756
          %1789 = vst [vmem:[%s506 + $0x50] sm:$0xff] %v1757
          %1790 = vst [vmem:[%s506 + $0x58] sm:$0xff] %v1758
          %1791 = vst [vmem:[%s506 + $0x60] sm:$0xff] %v1759
          %1792 = vst [vmem:[%s506 + $0x68] sm:$0xff] %v1760
          %1793 = vst [vmem:[%s506 + $0x70] sm:$0xff] %v1761
          %1794 = vst [vmem:[%s506 + $0x78] sm:$0xff] %v1762
          %1795 = vst [vmem:[%s506 + $0x80] sm:$0xff] %v1763
          %1796 = vst [vmem:[%s506 + $0x88] sm:$0xff] %v1764
          %1797 = vst [vmem:[%s506 + $0x90] sm:$0xff] %v1765
          %1798 = vst [vmem:[%s506 + $0x98] sm:$0xff] %v1766
          %1799 = vst [vmem:[%s506 + $0xa0] sm:$0xff] %v1767
          %1800 = vst [vmem:[%s506 + $0xa8] sm:$0xff] %v1768
          %1801 = vst [vmem:[%s506 + $0xb0] sm:$0xff] %v1769
          %1802 = vst [vmem:[%s506 + $0xb8] sm:$0xff] %v1770
          %1803 = vst [vmem:[%s506 + $0xc0] sm:$0xff] %v1771
          %1804 = vst [vmem:[%s506 + $0xc8] sm:$0xff] %v1772
          %1805 = vst [vmem:[%s506 + $0xd0] sm:$0xff] %v1773
          %1806 = vst [vmem:[%s506 + $0xd8] sm:$0xff] %v1774
          %1807 = vst [vmem:[%s506 + $0xe0] sm:$0xff] %v1775
          %1808 = vst [vmem:[%s506 + $0xe8] sm:$0xff] %v1776
          %1809 = vst [vmem:[%s506 + $0xf0] sm:$0xff] %v1777
          %1810 = vst [vmem:[%s506 + $0xf8] sm:$0xff] %v1778
        $region71: #{model_forward.4} parent=54 // pred_fallthru
          _
        %s1811 = smul.u32 32, %s31
        %p1812 = scmp.lt.s32.totalorder %s1811, 127
        %s1813 = scalar_select %p1812, %s1811, 127
        %s1814 = smul.addr %s1813, 8
        %s1815 = scalar_lea.vmem %s6, %s1814
        // Predicated region
        $region72: #{model_forward.4} parent=54 // pred_check
          %p1816 = pneg %p190
        $region73: #{model_forward.4} parent=54 // pred_check_branch
          %1818 = sbr.rel (%p1816) target = $region75
        $region74: #{model_forward.4} parent=54 // pred_region
          %s1819 = smul.u32 32, %s31
        $region75: #{model_forward.4} parent=54 // pred_fallthru
          _
      $region55: #{model_forward.4} parent=5 // pred_fallthru
        _
      %p1820 = scmp.le.s32.totalorder 2, %s22
      // Predicated region
      $region76: #{model_forward.4} parent=5 // pred_check
        %p1821 = pneg %p1820
      $region77: #{model_forward.4} parent=5 // pred_check_branch
        %1823 = sbr.rel (%p1821) target = $region79
      $region78: #{model_forward.4} parent=5 // pred_region
        %s1824 = ssub.s32 %s22, 2
        // Predicated region
        $region80: #{model_forward.4} parent=78 // pred_check
          %p1825 = pneg %p196
        $region81: #{model_forward.4} parent=78 // pred_check_branch
          %1827 = sbr.rel (%p1825) target = $region83
        $region82: #{model_forward.4} parent=78 // pred_region
          %s1828 = smul.u32 32, %s33
          %p1829 = scmp.lt.s32.totalorder %s1828, 127
          %s1830 = scalar_select %p1829, %s1828, 127
          %s1831 = smul.addr %s1830, 8
          %s1832 = scalar_lea.vmem %s6, %s1831
        $region83: #{model_forward.4} parent=78 // pred_fallthru
          _
      $region79: #{model_forward.4} parent=5 // pred_fallthru
        _
    $region6: #{model_forward.4} parent=1 // loop_footer
      %s26 = sadd.s32 1, %s22
    $region7: #{model_forward.4} parent=1 // loop_footer_branch
      %21 = sbr.rel target = $region3
    $region8: #{model_forward.4} parent=1 // loop_exit
      _

// kernel: model_forward.5
$region0: #{model_forward.5}
  #allocation0 [shape = 'u32[]', space=smem, size = 0x4, offset = 0x4, fixed_abs, tag = 'smem constant byte address 0x4 - core index']
  #allocation1 [shape = 'u32[144,128]{1,0:T(1,128)}', space=vmem, size = 0x12000, scoped, tag = 'internal scratch']
  %s0 = inlined_call_operand.vmem [shape: f32[128,128], index: 0, kind: input, shape index: {}]
  %s1 = inlined_call_operand.vmem [shape: f32[128,128], index: 1, kind: input, shape index: {}]
  %s2 = inlined_call_operand.vmem [shape: f32[1,128], index: 2, kind: output, shape index: {}]
  %s3 = sld [smem:[#allocation0]]
  $region18: #{model_forward.5} parent=0
    _
  %s5 = ssub.s32 1, %s3
  %s6 = scalar_select 0, %s5, %s3
  // Predicated region
  $region2: #{model_forward.5} parent=0 // pred_check
    _
  $region3: #{model_forward.5} parent=0 // pred_check_branch
    %8 = sbr.rel (0) target = $region5
  $region4: #{model_forward.5} parent=0 // pred_region
    _
  $region5: #{model_forward.5} parent=0 // pred_fallthru
    _
  // Predicated region
  $region6: #{model_forward.5} parent=0 // pred_check
    _
  $region7: #{model_forward.5} parent=0 // pred_check_branch
    %10 = sbr.rel (0) target = $region9
  $region8: #{model_forward.5} parent=0 // pred_region
    _
  $region9: #{model_forward.5} parent=0 // pred_fallthru
    _
  %v11 = vld [vmem:[%s0] sm:$0xff]
  %v12 = vld [vmem:[%s0 + $0x8] sm:$0xff]
  %v13 = vld [vmem:[%s0 + $0x10] sm:$0xff]
  %v14 = vld [vmem:[%s0 + $0x18] sm:$0xff]
  %v15 = vld [vmem:[%s0 + $0x20] sm:$0xff]
  %v16 = vld [vmem:[%s0 + $0x28] sm:$0xff]
  %v17 = vld [vmem:[%s0 + $0x30] sm:$0xff]
  %v18 = vld [vmem:[%s0 + $0x38] sm:$0xff]
  %v19 = vld [vmem:[%s0 + $0x40] sm:$0xff]
  %v20 = vld [vmem:[%s0 + $0x48] sm:$0xff]
  %v21 = vld [vmem:[%s0 + $0x50] sm:$0xff]
  %v22 = vld [vmem:[%s0 + $0x58] sm:$0xff]
  %v23 = vld [vmem:[%s0 + $0x60] sm:$0xff]
  %v24 = vld [vmem:[%s0 + $0x68] sm:$0xff]
  %v25 = vld [vmem:[%s0 + $0x70] sm:$0xff]
  %v26 = vld [vmem:[%s0 + $0x78] sm:$0xff]
  %v27 = vld [vmem:[%s1] sm:$0xff]
  %v28 = vld [vmem:[%s1 + $0x8] sm:$0xff]
  %v29 = vld [vmem:[%s1 + $0x10] sm:$0xff]
  %v30 = vld [vmem:[%s1 + $0x18] sm:$0xff]
  %v31 = vld [vmem:[%s1 + $0x20] sm:$0xff]
  %v32 = vld [vmem:[%s1 + $0x28] sm:$0xff]
  %v33 = vld [vmem:[%s1 + $0x30] sm:$0xff]
  %v34 = vld [vmem:[%s1 + $0x38] sm:$0xff]
  %v35 = vld [vmem:[%s1 + $0x40] sm:$0xff]
  %v36 = vld [vmem:[%s1 + $0x48] sm:$0xff]
  %v37 = vld [vmem:[%s1 + $0x50] sm:$0xff]
  %v38 = vld [vmem:[%s1 + $0x58] sm:$0xff]
  %v39 = vld [vmem:[%s1 + $0x60] sm:$0xff]
  %v40 = vld [vmem:[%s1 + $0x68] sm:$0xff]
  %v41 = vld [vmem:[%s1 + $0x70] sm:$0xff]
  %v42 = vld [vmem:[%s1 + $0x78] sm:$0xff]
  %v43 = vmul.f32 %v11, %v27
  %v44 = vmul.f32 %v12, %v28
  %v45 = vmul.f32 %v13, %v29
  %v46 = vmul.f32 %v14, %v30
  %v47 = vmul.f32 %v15, %v31
  %v48 = vmul.f32 %v16, %v32
  %v49 = vmul.f32 %v17, %v33
  %v50 = vmul.f32 %v18, %v34
  %v51 = vmul.f32 %v19, %v35
  %v52 = vmul.f32 %v20, %v36
  %v53 = vmul.f32 %v21, %v37
  %v54 = vmul.f32 %v22, %v38
  %v55 = vmul.f32 %v23, %v39
  %v56 = vmul.f32 %v24, %v40
  %v57 = vmul.f32 %v25, %v41
  %v58 = vmul.f32 %v26, %v42
  %v59 = vadd.f32 %v43, %v44
  %v60 = vadd.f32 %v59, %v45
  %v61 = vadd.f32 %v60, %v46
  %v62 = vadd.f32 %v61, %v47
  %v63 = vadd.f32 %v62, %v48
  %v64 = vadd.f32 %v63, %v49
  %v65 = vadd.f32 %v64, %v50
  %v66 = vadd.f32 %v65, %v51
  %v67 = vadd.f32 %v66, %v52
  %v68 = vadd.f32 %v67, %v53
  %v69 = vadd.f32 %v68, %v54
  %v70 = vadd.f32 %v69, %v55
  %v71 = vadd.f32 %v70, %v56
  %v72 = vadd.f32 %v71, %v57
  %v73 = vadd.f32 %v72, %v58
  %v74 = vrot.slane %v73, 4
  %v75 = vadd.f32 %v73, %v74
  %v76 = vrot.slane %v75, 2
  %v77 = vadd.f32 %v75, %v76
  %v78 = vrot.slane %v77, 1
  %v79 = vadd.f32 %v77, %v78
  %80 = vst [vmem:[%s2] sm:$0x1] %v79
  // Predicated region
  $region10: #{model_forward.5} parent=0 // pred_check
    _
  $region11: #{model_forward.5} parent=0 // pred_check_branch
    %82 = sbr.rel (0) target = $region13
  $region12: #{model_forward.5} parent=0 // pred_region
    _
  $region13: #{model_forward.5} parent=0 // pred_fallthru
    _
  // Predicated region
  $region14: #{model_forward.5} parent=0 // pred_check
    _
  $region15: #{model_forward.5} parent=0 // pred_check_branch
    %84 = sbr.rel (0) target = $region17
  $region16: #{model_forward.5} parent=0 // pred_region
    _
  $region17: #{model_forward.5} parent=0 // pred_fallthru
    _

</llo_original>
